<compile_context>
chip_gen: v5e
topology: v5e:2x2
jax: 0.10.0
libtpu: 0.0.40
codegen_flags: <defaults>
</compile_context>

<pallas_src>
import functools

import jax
import jax.numpy as jnp
from jax import lax
from jax.experimental import pallas as pl
from jax.experimental.pallas import tpu as pltpu


# ----------------------------------------------------------------------------
# Fused conv3x3 + InstanceNorm (+ ReLU | + residual) Pallas kernel
# ----------------------------------------------------------------------------

def _fused_conv_in_kernel(*refs, H, W, dil, eps, relu, residual, pad_out):
    if residual:
        xp_ref, w_ref, xres_ref, o_ref = refs
    else:
        xp_ref, w_ref, o_ref = refs
        xres_ref = None

    xp = xp_ref[0]                       # (H + 2d, W + 2d, Cp), matmul dtype
    Cin = xp.shape[-1]
    Kk = 3 * Cin                         # K depth of each per-row dot

    # Three accumulating MXU dots (one per kernel row kh); the three kw-shifted
    # column windows are folded into the K (lane) axis of each dot.
    # TODO(synk): the kw*dil column windows are sublane-misaligned slices; a
    # pltpu.roll along W would move that shuffle onto the XLU slot.
    acc = None
    for kh in range(3):
        rows = xp[kh * dil: kh * dil + H]                               # (H, Wp, Cp)
        xt = jnp.concatenate(
            [rows[:, kw * dil: kw * dil + W, :] for kw in range(3)],
            axis=-1).reshape(H * W, Kk)                                 # (HW, 3*Cp)
        part = jnp.dot(xt, w_ref[kh * Kk:(kh + 1) * Kk, :],
                       preferred_element_type=jnp.float32)              # (HW, TCo)
        acc = part if acc is None else acc + part

    # InstanceNorm (affine=False), biased variance, two-pass in f32.
    # (No bias add: conv bias cancels exactly under IN's mean subtraction.)
    mean = jnp.mean(acc, axis=0, keepdims=True)
    cen = acc - mean
    var = jnp.mean(cen * cen, axis=0, keepdims=True)
    y = cen * lax.rsqrt(var + eps)

    if relu:
        y = jnp.maximum(y, 0.0)

    y = y.reshape(H, W, o_ref.shape[-1])

    if residual:
        y = y + xres_ref[0].astype(jnp.float32)

    y = y.astype(o_ref.dtype)

    if pad_out:
        # Emit the next conv's 1-px reflect halo straight from VMEM so the
        # intermediate never round-trips through an XLA pad in HBM.
        y = jnp.concatenate([y[1:2], y, y[H - 2:H - 1]], axis=0)
        y = jnp.concatenate([y[:, 1:2], y, y[:, W - 2:W - 1]], axis=1)

    o_ref[0] = y


def _fused_conv_call(N, H, W, Cp, TCo, dil, *, relu, residual, pad_out, out_dtype):
    Hp, Wp = H + 2 * dil, W + 2 * dil
    Ho, Wo = (H + 2, W + 2) if pad_out else (H, W)
    kernel = functools.partial(_fused_conv_in_kernel, H=H, W=W, dil=dil,
                               eps=1e-5, relu=relu, residual=residual,
                               pad_out=pad_out)
    in_specs = [
        pl.BlockSpec((1, Hp, Wp, Cp), lambda n, j: (n, 0, 0, 0)),   # padded image
        pl.BlockSpec((9 * Cp, TCo), lambda n, j: (0, j)),           # folded weights
    ]
    if residual:
        in_specs.append(pl.BlockSpec((1, H, W, TCo), lambda n, j: (n, 0, 0, j)))
    return pl.pallas_call(
        kernel,
        out_shape=jax.ShapeDtypeStruct((N, Ho, Wo, Cp), jnp.dtype(out_dtype)),
        grid=(N, Cp // TCo),
        in_specs=in_specs,
        out_specs=pl.BlockSpec((1, Ho, Wo, TCo), lambda n, j: (n, 0, 0, j)),
        compiler_params=pltpu.CompilerParams(
            dimension_semantics=("parallel", "parallel"),
            vmem_limit_bytes=48 * 1024 * 1024),   # above v5e/v6e scoped defaults
    )


# ----------------------------------------------------------------------------
# Forward pass (wrapper: channel packing / input reflect pad is plain-JAX glue)
# ----------------------------------------------------------------------------

def _round_up(n, m):
    return (n + m - 1) // m * m


def resnet_block_forward(params, x, *, dilation=1, mm_dtype="bfloat16"):
    """ResnetBlock forward.  x: (N, H, W, C) f32, NHWC."""
    N, H, W, C = x.shape
    d = int(dilation)
    mm_dt = jnp.dtype(mm_dtype)
    Cp = _round_up(C, 128)               # lane-dense channel count
    pc = Cp - C
    TCo = 256 if Cp % 256 == 0 else 128  # output-channel tile (MXU column fill)

    def prep_w(w):                       # (3,3,C,C) -> (9*Cp, Cp), (kh,kw,cin) K order
        w = jnp.pad(w, ((0, 0), (0, 0), (0, pc), (0, pc)))
        return w.reshape(9 * Cp, Cp).astype(mm_dt)

    # Channel pad + cast + reflect pad of x in one prologue (conv1's halo is
    # produced inside kernel 1, so the intermediate skips the XLA pad entirely).
    x_c = (jnp.pad(x, ((0, 0), (0, 0), (0, 0), (0, pc))) if pc else x).astype(mm_dt)
    xp0 = jnp.pad(x_c, ((0, 0), (d, d), (d, d), (0, 0)), mode="reflect")

    # conv_0 (dilated) + InstanceNorm + ReLU  -> 1-px reflect-padded output.
    # (Bias is intentionally not passed: it cancels under InstanceNorm.)
    hp = _fused_conv_call(N, H, W, Cp, TCo, d, relu=True, residual=False,
                          pad_out=True, out_dtype=mm_dt.name)(
        xp0, prep_w(params["conv0"]["w"]))

    # conv_1 + InstanceNorm + residual add (residual read in matmul dtype).
    out = _fused_conv_call(N, H, W, Cp, TCo, 1, relu=False, residual=True,
                           pad_out=False, out_dtype="float32")(
        hp, prep_w(params["conv1"]["w"]), x_c)

    return out[..., :C] if pc else out


# ----------------------------------------------------------------------------
# Parameters
# ----------------------------------------------------------------------------

def _spectral_normalize(w, key, n_iter=5, eps=1e-12):
    """nn.utils.spectral_norm semantics: W / sigma(W as (Cout, -1)), power iter."""
    kh, kw, cin, cout = w.shape
    wm = jnp.transpose(w, (3, 2, 0, 1)).reshape(cout, -1)
    u = jax.random.normal(key, (cout,), jnp.float32)
    u = u / (jnp.linalg.norm(u) + eps)
    v = None
    for _ in range(n_iter):
        v = wm.T @ u
        v = v / (jnp.linalg.norm(v) + eps)
        u = wm @ v
        u = u / (jnp.linalg.norm(u) + eps)
    sigma = u @ (wm @ v)
    return w / sigma


def init_resnet_block_params(key, dim, use_spectral_norm=False):
    def conv_init(k, cin, cout, bias):
        kw_, kb_ = jax.random.split(k)
        bound = 1.0 / float(cin * 9) ** 0.5          # PyTorch Conv2d default init
        w = jax.random.uniform(kw_, (3, 3, cin, cout), jnp.float32, -bound, bound)
        b = (jax.random.uniform(kb_, (cout,), jnp.float32, -bound, bound)
             if bias else None)
        return {"w": w, "b": b}

    k0, k1, s0, s1 = jax.random.split(key, 4)
    bias = not use_spectral_norm
    c0 = conv_init(k0, dim, dim, bias)
    c1 = conv_init(k1, dim, dim, bias)
    if use_spectral_norm:
        c0["w"] = _spectral_normalize(c0["w"], s0)
        c1["w"] = _spectral_normalize(c1["w"], s1)
    return {"conv0": c0, "conv1": c1}


# ----------------------------------------------------------------------------
# Plain-JAX reference (numerical check; keeps the bias that the kernel drops)
# ----------------------------------------------------------------------------

def resnet_block_reference(params, x, *, dilation=1):
    def conv(v, w, b, d):
        vp = jnp.pad(v, ((0, 0), (d, d), (d, d), (0, 0)), mode="reflect")
        y = lax.conv_general_dilated(
            vp, w, window_strides=(1, 1), padding="VALID",
            rhs_dilation=(d, d), dimension_numbers=("NHWC", "HWIO", "NHWC"),
            precision=lax.Precision.HIGHEST)
        return y if b is None else y + b

    def inorm(v, eps=1e-5):
        mean = jnp.mean(v, axis=(1, 2), keepdims=True)
        var = jnp.mean(jnp.square(v - mean), axis=(1, 2), keepdims=True)
        return (v - mean) * lax.rsqrt(var + eps)

    h = jnp.maximum(
        inorm(conv(x, params["conv0"]["w"], params["conv0"]["b"], dilation)), 0.0)
    h = inorm(conv(h, params["conv1"]["w"], params["conv1"]["b"], 1))
    return x + h


# ----------------------------------------------------------------------------

if __name__ == "__main__":
    key = jax.random.PRNGKey(0)
    pkey, xkey = jax.random.split(key)

    N, H, W, C = 2, 16, 16, 64         # small demo shapes (NHWC)
    dilation = 2

    params = init_resnet_block_params(pkey, C, use_spectral_norm=False)
    x = jax.random.normal(xkey, (N, H, W, C), jnp.float32)

    fwd = jax.jit(resnet_block_forward, static_argnames=("dilation", "mm_dtype"))

    ref = jax.block_until_ready(resnet_block_reference(params, x, dilation=dilation))

    # f32 path: tight check against the plain-JAX reference (also confirms the
    # dropped conv bias cancels exactly under InstanceNorm).
    out_f32 = jax.block_until_ready(fwd(params, x, dilation=dilation,
                                        mm_dtype="float32"))
    assert out_f32.shape == (N, H, W, C)
    err32 = float(jnp.max(jnp.abs(out_f32 - ref)))
    assert bool(jnp.allclose(out_f32, ref, atol=2e-2, rtol=2e-2)), err32

    # perf path: bf16 MXU operands / bf16 intermediate + residual traffic,
    # f32 accumulate and f32 InstanceNorm statistics.
    out_bf16 = jax.block_until_ready(fwd(params, x, dilation=dilation,
                                         mm_dtype="bfloat16"))
    assert out_bf16.shape == (N, H, W, C)
    assert bool(jnp.all(jnp.isfinite(out_bf16)))
    err16 = float(jnp.max(jnp.abs(out_bf16 - ref)))
    assert err16 < 2.5e-1, err16

    print("KERNEL_OK")
</pallas_src>

<mosaic_0001>
module attributes {stable_mosaic.version = 11 : i64} {
  func.func @_fused_conv_in_kernel(%arg0: i32, %arg1: i32, %arg2: memref<1x20x20x128xf32, #tpu.memory_space<vmem>>, %arg3: memref<1152x128xf32, #tpu.memory_space<vmem>>, %arg4: memref<1x18x18x128xf32, #tpu.memory_space<vmem>>) attributes {dimension_semantics = [#tpu.dimension_semantics<parallel>, #tpu.dimension_semantics<parallel>], iteration_bounds = array<i64: 2, 1>, scalar_prefetch = 0 : i64, scratch_operands = 0 : i64, tpu.core_type = #tpu.core_type<tc>, window_params = [{transform_indices = @transform_0, window_bounds = array<i64: 1, 20, 20, 128>}, {transform_indices = @transform_1, window_bounds = array<i64: 1152, 128>}, {transform_indices = @transform_2, window_bounds = array<i64: 1, 18, 18, 128>}]} {
    %c0 = arith.constant 0 : index
    %c0_0 = arith.constant 0 : index
    %c0_1 = arith.constant 0 : index
    %c0_2 = arith.constant 0 : index
    %0 = vector.load %arg2[%c0, %c0_0, %c0_1, %c0_2] : memref<1x20x20x128xf32, #tpu.memory_space<vmem>>, vector<1x20x20x128xf32>
    %1 = vector.shape_cast %0 : vector<1x20x20x128xf32> to vector<20x20x128xf32>
    %2 = vector.extract_strided_slice %1 {offsets = [0, 0, 0], sizes = [16, 20, 128], strides = [1, 1, 1]} : vector<20x20x128xf32> to vector<16x20x128xf32>
    %3 = vector.extract_strided_slice %2 {offsets = [0, 0, 0], sizes = [16, 16, 128], strides = [1, 1, 1]} : vector<16x20x128xf32> to vector<16x16x128xf32>
    %4 = vector.extract_strided_slice %2 {offsets = [0, 2, 0], sizes = [16, 16, 128], strides = [1, 1, 1]} : vector<16x20x128xf32> to vector<16x16x128xf32>
    %5 = vector.extract_strided_slice %2 {offsets = [0, 4, 0], sizes = [16, 16, 128], strides = [1, 1, 1]} : vector<16x20x128xf32> to vector<16x16x128xf32>
    %6 = tpu.concatenate %3, %4, %5 in 2 : vector<16x16x128xf32>, vector<16x16x128xf32>, vector<16x16x128xf32> -> vector<16x16x384xf32>
    %7 = vector.shape_cast %6 : vector<16x16x384xf32> to vector<256x384xf32>
    %c0_3 = arith.constant 0 : index
    %c0_4 = arith.constant 0 : index
    %8 = vector.load %arg3[%c0_3, %c0_4] : memref<1152x128xf32, #tpu.memory_space<vmem>>, vector<384x128xf32>
    %cst = arith.constant dense<0.000000e+00> : vector<256x128xf32>
    %9 = tpu.matmul %7, %8, %cst {dimension_numbers = #tpu.dot_dimension_numbers<[1], [0], [0], [1], [0, 0, 1, 1], [], []>} : vector<256x384xf32>, vector<384x128xf32>, vector<256x128xf32> -> vector<256x128xf32>
    %10 = vector.extract_strided_slice %1 {offsets = [2, 0, 0], sizes = [16, 20, 128], strides = [1, 1, 1]} : vector<20x20x128xf32> to vector<16x20x128xf32>
    %11 = vector.extract_strided_slice %10 {offsets = [0, 0, 0], sizes = [16, 16, 128], strides = [1, 1, 1]} : vector<16x20x128xf32> to vector<16x16x128xf32>
    %12 = vector.extract_strided_slice %10 {offsets = [0, 2, 0], sizes = [16, 16, 128], strides = [1, 1, 1]} : vector<16x20x128xf32> to vector<16x16x128xf32>
    %13 = vector.extract_strided_slice %10 {offsets = [0, 4, 0], sizes = [16, 16, 128], strides = [1, 1, 1]} : vector<16x20x128xf32> to vector<16x16x128xf32>
    %14 = tpu.concatenate %11, %12, %13 in 2 : vector<16x16x128xf32>, vector<16x16x128xf32>, vector<16x16x128xf32> -> vector<16x16x384xf32>
    %15 = vector.shape_cast %14 : vector<16x16x384xf32> to vector<256x384xf32>
    %c384 = arith.constant 384 : index
    %c0_5 = arith.constant 0 : index
    %16 = vector.load %arg3[%c384, %c0_5] : memref<1152x128xf32, #tpu.memory_space<vmem>>, vector<384x128xf32>
    %cst_6 = arith.constant dense<0.000000e+00> : vector<256x128xf32>
    %17 = tpu.matmul %15, %16, %cst_6 {dimension_numbers = #tpu.dot_dimension_numbers<[1], [0], [0], [1], [0, 0, 1, 1], [], []>} : vector<256x384xf32>, vector<384x128xf32>, vector<256x128xf32> -> vector<256x128xf32>
    %18 = arith.addf %9, %17 : vector<256x128xf32>
    %19 = vector.extract_strided_slice %1 {offsets = [4, 0, 0], sizes = [16, 20, 128], strides = [1, 1, 1]} : vector<20x20x128xf32> to vector<16x20x128xf32>
    %20 = vector.extract_strided_slice %19 {offsets = [0, 0, 0], sizes = [16, 16, 128], strides = [1, 1, 1]} : vector<16x20x128xf32> to vector<16x16x128xf32>
    %21 = vector.extract_strided_slice %19 {offsets = [0, 2, 0], sizes = [16, 16, 128], strides = [1, 1, 1]} : vector<16x20x128xf32> to vector<16x16x128xf32>
    %22 = vector.extract_strided_slice %19 {offsets = [0, 4, 0], sizes = [16, 16, 128], strides = [1, 1, 1]} : vector<16x20x128xf32> to vector<16x16x128xf32>
    %23 = tpu.concatenate %20, %21, %22 in 2 : vector<16x16x128xf32>, vector<16x16x128xf32>, vector<16x16x128xf32> -> vector<16x16x384xf32>
    %24 = vector.shape_cast %23 : vector<16x16x384xf32> to vector<256x384xf32>
    %c768 = arith.constant 768 : index
    %c0_7 = arith.constant 0 : index
    %25 = vector.load %arg3[%c768, %c0_7] : memref<1152x128xf32, #tpu.memory_space<vmem>>, vector<384x128xf32>
    %cst_8 = arith.constant dense<0.000000e+00> : vector<256x128xf32>
    %26 = tpu.matmul %24, %25, %cst_8 {dimension_numbers = #tpu.dot_dimension_numbers<[1], [0], [0], [1], [0, 0, 1, 1], [], []>} : vector<256x384xf32>, vector<384x128xf32>, vector<256x128xf32> -> vector<256x128xf32>
    %27 = arith.addf %18, %26 : vector<256x128xf32>
    %cst_9 = arith.constant dense<0.000000e+00> : vector<128xf32>
    %28 = vector.multi_reduction <add>, %27, %cst_9 [0] : vector<256x128xf32> to vector<128xf32>
    %29 = vector.shape_cast %28 : vector<128xf32> to vector<1x128xf32>
    %cst_10 = arith.constant 2.560000e+02 : f32
    %30 = vector.broadcast %cst_10 : f32 to vector<1x128xf32>
    %31 = arith.divf %29, %30 : vector<1x128xf32>
    %32 = vector.broadcast %31 : vector<1x128xf32> to vector<256x128xf32>
    %33 = arith.subf %27, %32 : vector<256x128xf32>
    %34 = arith.mulf %33, %33 : vector<256x128xf32>
    %cst_11 = arith.constant dense<0.000000e+00> : vector<128xf32>
    %35 = vector.multi_reduction <add>, %34, %cst_11 [0] : vector<256x128xf32> to vector<128xf32>
    %36 = vector.shape_cast %35 : vector<128xf32> to vector<1x128xf32>
    %cst_12 = arith.constant 2.560000e+02 : f32
    %37 = vector.broadcast %cst_12 : f32 to vector<1x128xf32>
    %38 = arith.divf %36, %37 : vector<1x128xf32>
    %cst_13 = arith.constant 9.99999974E-6 : f32
    %39 = vector.broadcast %cst_13 : f32 to vector<1x128xf32>
    %40 = arith.addf %38, %39 : vector<1x128xf32>
    %41 = math.rsqrt %40 : vector<1x128xf32>
    %42 = vector.broadcast %41 : vector<1x128xf32> to vector<256x128xf32>
    %43 = arith.mulf %33, %42 : vector<256x128xf32>
    %cst_14 = arith.constant 0.000000e+00 : f32
    %44 = vector.broadcast %cst_14 : f32 to vector<256x128xf32>
    %45 = arith.maximumf %43, %44 : vector<256x128xf32>
    %46 = vector.shape_cast %45 : vector<256x128xf32> to vector<16x16x128xf32>
    %47 = vector.extract_strided_slice %46 {offsets = [1, 0, 0], sizes = [1, 16, 128], strides = [1, 1, 1]} : vector<16x16x128xf32> to vector<1x16x128xf32>
    %48 = vector.extract_strided_slice %46 {offsets = [14, 0, 0], sizes = [1, 16, 128], strides = [1, 1, 1]} : vector<16x16x128xf32> to vector<1x16x128xf32>
    %49 = tpu.concatenate %47, %46, %48 in 0 : vector<1x16x128xf32>, vector<16x16x128xf32>, vector<1x16x128xf32> -> vector<18x16x128xf32>
    %50 = vector.extract_strided_slice %49 {offsets = [0, 1, 0], sizes = [18, 1, 128], strides = [1, 1, 1]} : vector<18x16x128xf32> to vector<18x1x128xf32>
    %51 = vector.extract_strided_slice %49 {offsets = [0, 14, 0], sizes = [18, 1, 128], strides = [1, 1, 1]} : vector<18x16x128xf32> to vector<18x1x128xf32>
    %52 = tpu.concatenate %50, %49, %51 in 1 : vector<18x1x128xf32>, vector<18x16x128xf32>, vector<18x1x128xf32> -> vector<18x18x128xf32>
    %c0_15 = arith.constant 0 : index
    %c0_16 = arith.constant 0 : index
    %c0_17 = arith.constant 0 : index
    %c0_18 = arith.constant 0 : index
    %53 = vector.load %arg4[%c0_15, %c0_16, %c0_17, %c0_18] : memref<1x18x18x128xf32, #tpu.memory_space<vmem>>, vector<1x18x18x128xf32>
    %54 = vector.shape_cast %53 : vector<1x18x18x128xf32> to vector<18x18x128xf32>
    %55 = vector.shape_cast %52 : vector<18x18x128xf32> to vector<1x18x18x128xf32>
    tpu.vector_store %arg4[%c0_15, %c0_16, %c0_17, %c0_18], %55 {strides = array<i32>} : memref<1x18x18x128xf32, #tpu.memory_space<vmem>>, vector<1x18x18x128xf32>,
    return
  }
  func.func @transform_0(%arg0: i32, %arg1: i32) -> (i32, i32, i32, i32) {
    %c0_i32 = arith.constant 0 : i32
    %c0_i32_0 = arith.constant 0 : i32
    %c0_i32_1 = arith.constant 0 : i32
    %c0_i32_2 = arith.constant 0 : i32
    return %arg0, %c0_i32, %c0_i32_0, %c0_i32_1 : i32, i32, i32, i32
  }
  func.func @transform_1(%arg0: i32, %arg1: i32) -> (i32, i32) {
    %c0_i32 = arith.constant 0 : i32
    %c0_i32_0 = arith.constant 0 : i32
    return %c0_i32, %arg1 : i32, i32
  }
  func.func @transform_2(%arg0: i32, %arg1: i32) -> (i32, i32, i32, i32) {
    %c0_i32 = arith.constant 0 : i32
    %c0_i32_0 = arith.constant 0 : i32
    %c0_i32_1 = arith.constant 0 : i32
    return %arg0, %c0_i32, %c0_i32_0, %arg1 : i32, i32, i32, i32
  }
}

module attributes {stable_mosaic.version = 11 : i64} {
  func.func @_fused_conv_in_kernel(%arg0: i32, %arg1: i32, %arg2: memref<1x18x18x128xf32, #tpu.memory_space<vmem>>, %arg3: memref<1152x128xf32, #tpu.memory_space<vmem>>, %arg4: memref<1x16x16x128xf32, #tpu.memory_space<vmem>>, %arg5: memref<1x16x16x128xf32, #tpu.memory_space<vmem>>) attributes {dimension_semantics = [#tpu.dimension_semantics<parallel>, #tpu.dimension_semantics<parallel>], iteration_bounds = array<i64: 2, 1>, scalar_prefetch = 0 : i64, scratch_operands = 0 : i64, tpu.core_type = #tpu.core_type<tc>, window_params = [{transform_indices = @transform_0, window_bounds = array<i64: 1, 18, 18, 128>}, {transform_indices = @transform_1, window_bounds = array<i64: 1152, 128>}, {transform_indices = @transform_2, window_bounds = array<i64: 1, 16, 16, 128>}, {transform_indices = @transform_3, window_bounds = array<i64: 1, 16, 16, 128>}]} {
    %c0 = arith.constant 0 : index
    %c0_0 = arith.constant 0 : index
    %c0_1 = arith.constant 0 : index
    %c0_2 = arith.constant 0 : index
    %0 = vector.load %arg2[%c0, %c0_0, %c0_1, %c0_2] : memref<1x18x18x128xf32, #tpu.memory_space<vmem>>, vector<1x18x18x128xf32>
    %1 = vector.shape_cast %0 : vector<1x18x18x128xf32> to vector<18x18x128xf32>
    %2 = vector.extract_strided_slice %1 {offsets = [0, 0, 0], sizes = [16, 18, 128], strides = [1, 1, 1]} : vector<18x18x128xf32> to vector<16x18x128xf32>
    %3 = vector.extract_strided_slice %2 {offsets = [0, 0, 0], sizes = [16, 16, 128], strides = [1, 1, 1]} : vector<16x18x128xf32> to vector<16x16x128xf32>
    %4 = vector.extract_strided_slice %2 {offsets = [0, 1, 0], sizes = [16, 16, 128], strides = [1, 1, 1]} : vector<16x18x128xf32> to vector<16x16x128xf32>
    %5 = vector.extract_strided_slice %2 {offsets = [0, 2, 0], sizes = [16, 16, 128], strides = [1, 1, 1]} : vector<16x18x128xf32> to vector<16x16x128xf32>
    %6 = tpu.concatenate %3, %4, %5 in 2 : vector<16x16x128xf32>, vector<16x16x128xf32>, vector<16x16x128xf32> -> vector<16x16x384xf32>
    %7 = vector.shape_cast %6 : vector<16x16x384xf32> to vector<256x384xf32>
    %c0_3 = arith.constant 0 : index
    %c0_4 = arith.constant 0 : index
    %8 = vector.load %arg3[%c0_3, %c0_4] : memref<1152x128xf32, #tpu.memory_space<vmem>>, vector<384x128xf32>
    %cst = arith.constant dense<0.000000e+00> : vector<256x128xf32>
    %9 = tpu.matmul %7, %8, %cst {dimension_numbers = #tpu.dot_dimension_numbers<[1], [0], [0], [1], [0, 0, 1, 1], [], []>} : vector<256x384xf32>, vector<384x128xf32>, vector<256x128xf32> -> vector<256x128xf32>
    %10 = vector.extract_strided_slice %1 {offsets = [1, 0, 0], sizes = [16, 18, 128], strides = [1, 1, 1]} : vector<18x18x128xf32> to vector<16x18x128xf32>
    %11 = vector.extract_strided_slice %10 {offsets = [0, 0, 0], sizes = [16, 16, 128], strides = [1, 1, 1]} : vector<16x18x128xf32> to vector<16x16x128xf32>
    %12 = vector.extract_strided_slice %10 {offsets = [0, 1, 0], sizes = [16, 16, 128], strides = [1, 1, 1]} : vector<16x18x128xf32> to vector<16x16x128xf32>
    %13 = vector.extract_strided_slice %10 {offsets = [0, 2, 0], sizes = [16, 16, 128], strides = [1, 1, 1]} : vector<16x18x128xf32> to vector<16x16x128xf32>
    %14 = tpu.concatenate %11, %12, %13 in 2 : vector<16x16x128xf32>, vector<16x16x128xf32>, vector<16x16x128xf32> -> vector<16x16x384xf32>
    %15 = vector.shape_cast %14 : vector<16x16x384xf32> to vector<256x384xf32>
    %c384 = arith.constant 384 : index
    %c0_5 = arith.constant 0 : index
    %16 = vector.load %arg3[%c384, %c0_5] : memref<1152x128xf32, #tpu.memory_space<vmem>>, vector<384x128xf32>
    %cst_6 = arith.constant dense<0.000000e+00> : vector<256x128xf32>
    %17 = tpu.matmul %15, %16, %cst_6 {dimension_numbers = #tpu.dot_dimension_numbers<[1], [0], [0], [1], [0, 0, 1, 1], [], []>} : vector<256x384xf32>, vector<384x128xf32>, vector<256x128xf32> -> vector<256x128xf32>
    %18 = arith.addf %9, %17 : vector<256x128xf32>
    %19 = vector.extract_strided_slice %1 {offsets = [2, 0, 0], sizes = [16, 18, 128], strides = [1, 1, 1]} : vector<18x18x128xf32> to vector<16x18x128xf32>
    %20 = vector.extract_strided_slice %19 {offsets = [0, 0, 0], sizes = [16, 16, 128], strides = [1, 1, 1]} : vector<16x18x128xf32> to vector<16x16x128xf32>
    %21 = vector.extract_strided_slice %19 {offsets = [0, 1, 0], sizes = [16, 16, 128], strides = [1, 1, 1]} : vector<16x18x128xf32> to vector<16x16x128xf32>
    %22 = vector.extract_strided_slice %19 {offsets = [0, 2, 0], sizes = [16, 16, 128], strides = [1, 1, 1]} : vector<16x18x128xf32> to vector<16x16x128xf32>
    %23 = tpu.concatenate %20, %21, %22 in 2 : vector<16x16x128xf32>, vector<16x16x128xf32>, vector<16x16x128xf32> -> vector<16x16x384xf32>
    %24 = vector.shape_cast %23 : vector<16x16x384xf32> to vector<256x384xf32>
    %c768 = arith.constant 768 : index
    %c0_7 = arith.constant 0 : index
    %25 = vector.load %arg3[%c768, %c0_7] : memref<1152x128xf32, #tpu.memory_space<vmem>>, vector<384x128xf32>
    %cst_8 = arith.constant dense<0.000000e+00> : vector<256x128xf32>
    %26 = tpu.matmul %24, %25, %cst_8 {dimension_numbers = #tpu.dot_dimension_numbers<[1], [0], [0], [1], [0, 0, 1, 1], [], []>} : vector<256x384xf32>, vector<384x128xf32>, vector<256x128xf32> -> vector<256x128xf32>
    %27 = arith.addf %18, %26 : vector<256x128xf32>
    %cst_9 = arith.constant dense<0.000000e+00> : vector<128xf32>
    %28 = vector.multi_reduction <add>, %27, %cst_9 [0] : vector<256x128xf32> to vector<128xf32>
    %29 = vector.shape_cast %28 : vector<128xf32> to vector<1x128xf32>
    %cst_10 = arith.constant 2.560000e+02 : f32
    %30 = vector.broadcast %cst_10 : f32 to vector<1x128xf32>
    %31 = arith.divf %29, %30 : vector<1x128xf32>
    %32 = vector.broadcast %31 : vector<1x128xf32> to vector<256x128xf32>
    %33 = arith.subf %27, %32 : vector<256x128xf32>
    %34 = arith.mulf %33, %33 : vector<256x128xf32>
    %cst_11 = arith.constant dense<0.000000e+00> : vector<128xf32>
    %35 = vector.multi_reduction <add>, %34, %cst_11 [0] : vector<256x128xf32> to vector<128xf32>
    %36 = vector.shape_cast %35 : vector<128xf32> to vector<1x128xf32>
    %cst_12 = arith.constant 2.560000e+02 : f32
    %37 = vector.broadcast %cst_12 : f32 to vector<1x128xf32>
    %38 = arith.divf %36, %37 : vector<1x128xf32>
    %cst_13 = arith.constant 9.99999974E-6 : f32
    %39 = vector.broadcast %cst_13 : f32 to vector<1x128xf32>
    %40 = arith.addf %38, %39 : vector<1x128xf32>
    %41 = math.rsqrt %40 : vector<1x128xf32>
    %42 = vector.broadcast %41 : vector<1x128xf32> to vector<256x128xf32>
    %43 = arith.mulf %33, %42 : vector<256x128xf32>
    %44 = vector.shape_cast %43 : vector<256x128xf32> to vector<16x16x128xf32>
    %c0_14 = arith.constant 0 : index
    %c0_15 = arith.constant 0 : index
    %c0_16 = arith.constant 0 : index
    %c0_17 = arith.constant 0 : index
    %45 = vector.load %arg4[%c0_14, %c0_15, %c0_16, %c0_17] : memref<1x16x16x128xf32, #tpu.memory_space<vmem>>, vector<1x16x16x128xf32>
    %46 = vector.shape_cast %45 : vector<1x16x16x128xf32> to vector<16x16x128xf32>
    %47 = arith.addf %44, %46 : vector<16x16x128xf32>
    %c0_18 = arith.constant 0 : index
    %c0_19 = arith.constant 0 : index
    %c0_20 = arith.constant 0 : index
    %c0_21 = arith.constant 0 : index
    %48 = vector.load %arg5[%c0_18, %c0_19, %c0_20, %c0_21] : memref<1x16x16x128xf32, #tpu.memory_space<vmem>>, vector<1x16x16x128xf32>
    %49 = vector.shape_cast %48 : vector<1x16x16x128xf32> to vector<16x16x128xf32>
    %50 = vector.shape_cast %47 : vector<16x16x128xf32> to vector<1x16x16x128xf32>
    tpu.vector_store %arg5[%c0_18, %c0_19, %c0_20, %c0_21], %50 {strides = array<i32>} : memref<1x16x16x128xf32, #tpu.memory_space<vmem>>, vector<1x16x16x128xf32>,
    return
  }
  func.func @transform_0(%arg0: i32, %arg1: i32) -> (i32, i32, i32, i32) {
    %c0_i32 = arith.constant 0 : i32
    %c0_i32_0 = arith.constant 0 : i32
    %c0_i32_1 = arith.constant 0 : i32
    %c0_i32_2 = arith.constant 0 : i32
    return %arg0, %c0_i32, %c0_i32_0, %c0_i32_1 : i32, i32, i32, i32
  }
  func.func @transform_1(%arg0: i32, %arg1: i32) -> (i32, i32) {
    %c0_i32 = arith.constant 0 : i32
    %c0_i32_0 = arith.constant 0 : i32
    return %c0_i32, %arg1 : i32, i32
  }
  func.func @transform_2(%arg0: i32, %arg1: i32) -> (i32, i32, i32, i32) {
    %c0_i32 = arith.constant 0 : i32
    %c0_i32_0 = arith.constant 0 : i32
    %c0_i32_1 = arith.constant 0 : i32
    return %arg0, %c0_i32, %c0_i32_0, %arg1 : i32, i32, i32, i32
  }
  func.func @transform_3(%arg0: i32, %arg1: i32) -> (i32, i32, i32, i32) {
    %c0_i32 = arith.constant 0 : i32
    %c0_i32_0 = arith.constant 0 : i32
    %c0_i32_1 = arith.constant 0 : i32
    return %arg0, %c0_i32, %c0_i32_0, %arg1 : i32, i32, i32, i32
  }
}

</mosaic_0001>

<llo_original>
// kernel: resnet_block_forward.3
$region0: #{resnet_block_forward.3}
  #allocation0 [shape = 'u32[]', space=smem, size = 0x4, offset = 0x4, fixed_abs, tag = 'smem constant byte address 0x4 - core index']
  #allocation1 [shape = 'u32[72,128]{1,0:T(1,128)}', space=vmem, size = 0x9000, scoped, tag = 'internal scratch']
  %s0 = inlined_call_operand.vmem [shape: f32[2,18,18,128], index: 0, kind: input, shape index: {}]
  %s1 = inlined_call_operand.vmem [shape: f32[1152,128], index: 1, kind: input, shape index: {}]
  %s2 = inlined_call_operand.vmem [shape: f32[2,16,16,128], index: 2, kind: input, shape index: {}]
  %s3 = inlined_call_operand.hbm [shape: f32[2,16,16,128], index: 3, kind: output, shape index: {}]
  %s4 = sld [smem:[#allocation0]]
  $region45: #{resnet_block_forward.3} parent=0
    _
  %s6 = ssub.s32 1, %s4
  %s7 = scalar_select 0, %s6, %s4
  $region1: #{resnet_block_forward.3} parent=0
    #allocation2 [shape = 'u8[262144]{0}', space=vmem, size = 0x40000, scoped, tag = 'output window, operand 0']
    #allocation3 [shape = 's32[2]{0}', space=sflag, size = 0x8, scoped, tag = 'scoped memory for resnet_block_forward.3']
    %8 = vsyncpa [#allocation3], 0
    %s9 = scalar_lea.sflag [#allocation3], 1
    %10 = vsyncpa %s9, 0
    loop: start=0, step=1, limit=4
    $region2: #{resnet_block_forward.3} parent=1 // loop_pre_header
      _
    $region3: #{resnet_block_forward.3} parent=1 // loop_header
      %s12 = sphi 0, %s16
      %p13 = scmp.ge.s32.totalorder %s12, 4
      %s19 = sphi 0, %s31
      %s20 = sphi 0, %s27
      %s21 = sphi 0, %s19
      %s22 = sphi 0, %s20
      %s23 = sphi 0, %s21
      %s24 = sphi 0, %s22
      %s34 = sphi 0, %s36
      %s37 = sphi 0, %s34
      %s38 = sphi 0, %s37
      %s54 = sphi 0, %s38
      %s60 = sphi 0, %s62
      %s63 = sphi 0, %s60
      %s64 = sphi 0, %s63
      %s80 = sphi 0, %s64
      %s88 = sphi 0, %s90
      %s91 = sphi 0, %s88
      %s92 = sphi 0, %s91
      %s108 = sphi 0, %s92
      %s116 = sphi 0, %s118
      %s119 = sphi 0, %s116
      %s120 = sphi 0, %s119
      %s136 = sphi 0, %s120
    $region4: #{resnet_block_forward.3} parent=1 // loop_header_branch
      %15 = sbr.rel (%p13) target = $region8
    $region5: #{resnet_block_forward.3} parent=1 // loop_body
      %s17 = ssub.s32 %s12, 1
      %s18 = ssub.s32 %s12, 2
      %s25 = sadd.s32 1, %s20
      %p26 = scmp.ge.s32.totalorder %s25, 1
      %s27 = scalar_select %p26, 0, %s25
      %s28 = sadd.s32 1, %s19
      %s29 = scalar_select %p26, %s28, %s19
      %p30 = scmp.ge.s32.totalorder %s29, 2
      %s31 = scalar_select %p30, 0, %s29
      %s32 = ssub.s32 %s19, %s31
      %p33 = scmp.eq.s32.totalorder %s32, 0
      %s35 = sadd.s32 %s34, 1
      %s36 = scalar_select %p33, %s34, %s35
      %p39 = pneg %p33
      %p40 = scmp.eq.s32.totalorder %s12, 1
      %p41 = por %p39, %p40
      %p42 = scmp.ne.s32.totalorder %s34, %s37
      %p43 = scmp.eq.s32.totalorder %s12, 0
      %p44 = por %p42, %p43
      %p45 = scmp.ne.s32.totalorder %s34, %s37
      %p46 = scmp.eq.s32.totalorder %s17, 1
      %p47 = por %p45, %p46
      %p48 = scmp.ne.s32.totalorder %s37, %s38
      %p49 = scmp.eq.s32.totalorder %s17, 0
      %p50 = por %p48, %p49
      %p51 = scmp.ne.s32.totalorder %s37, %s38
      %p52 = scmp.eq.s32.totalorder %s18, 1
      %p53 = por %p51, %p52
      %p55 = scmp.ne.s32.totalorder %s38, %s54
      %p56 = scmp.eq.s32.totalorder %s18, 0
      %p57 = por %p55, %p56
      %s58 = ssub.s32 %s20, %s27
      %p59 = scmp.eq.s32.totalorder %s58, 0
      %s61 = sadd.s32 %s60, 1
      %s62 = scalar_select %p59, %s60, %s61
      %p65 = pneg %p59
      %p66 = scmp.eq.s32.totalorder %s12, 1
      %p67 = por %p65, %p66
      %p68 = scmp.ne.s32.totalorder %s60, %s63
      %p69 = scmp.eq.s32.totalorder %s12, 0
      %p70 = por %p68, %p69
      %p71 = scmp.ne.s32.totalorder %s60, %s63
      %p72 = scmp.eq.s32.totalorder %s17, 1
      %p73 = por %p71, %p72
      %p74 = scmp.ne.s32.totalorder %s63, %s64
      %p75 = scmp.eq.s32.totalorder %s17, 0
      %p76 = por %p74, %p75
      %p77 = scmp.ne.s32.totalorder %s63, %s64
      %p78 = scmp.eq.s32.totalorder %s18, 1
      %p79 = por %p77, %p78
      %p81 = scmp.ne.s32.totalorder %s64, %s80
      %p82 = scmp.eq.s32.totalorder %s18, 0
      %p83 = por %p81, %p82
      %s84 = ssub.s32 %s19, %s31
      %s85 = ssub.s32 %s20, %s27
      %s86 = sor.u32 %s84, %s85
      %p87 = scmp.eq.s32.totalorder %s86, 0
      %s89 = sadd.s32 %s88, 1
      %s90 = scalar_select %p87, %s88, %s89
      %p93 = pneg %p87
      %p94 = scmp.eq.s32.totalorder %s12, 1
      %p95 = por %p93, %p94
      %p96 = scmp.ne.s32.totalorder %s88, %s91
      %p97 = scmp.eq.s32.totalorder %s12, 0
      %p98 = por %p96, %p97
      %p99 = scmp.ne.s32.totalorder %s88, %s91
      %p100 = scmp.eq.s32.totalorder %s17, 1
      %p101 = por %p99, %p100
      %p102 = scmp.ne.s32.totalorder %s91, %s92
      %p103 = scmp.eq.s32.totalorder %s17, 0
      %p104 = por %p102, %p103
      %p105 = scmp.ne.s32.totalorder %s91, %s92
      %p106 = scmp.eq.s32.totalorder %s18, 1
      %p107 = por %p105, %p106
      %p109 = scmp.ne.s32.totalorder %s92, %s108
      %p110 = scmp.eq.s32.totalorder %s18, 0
      %p111 = por %p109, %p110
      %s112 = ssub.s32 %s19, %s31
      %s113 = ssub.s32 %s20, %s27
      %s114 = sor.u32 %s112, %s113
      %p115 = scmp.eq.s32.totalorder %s114, 0
      %s117 = sadd.s32 %s116, 1
      %s118 = scalar_select %p115, %s116, %s117
      %p121 = pneg %p115
      %p122 = scmp.eq.s32.totalorder %s12, 1
      %p123 = por %p121, %p122
      %p124 = scmp.ne.s32.totalorder %s116, %s119
      %p125 = scmp.eq.s32.totalorder %s12, 0
      %p126 = por %p124, %p125
      %p127 = scmp.ne.s32.totalorder %s116, %s119
      %p128 = scmp.eq.s32.totalorder %s17, 1
      %p129 = por %p127, %p128
      %p130 = scmp.ne.s32.totalorder %s119, %s120
      %p131 = scmp.eq.s32.totalorder %s17, 0
      %p132 = por %p130, %p131
      %p133 = scmp.ne.s32.totalorder %s119, %s120
      %p134 = scmp.eq.s32.totalorder %s18, 1
      %p135 = por %p133, %p134
      %p137 = scmp.ne.s32.totalorder %s120, %s136
      %p138 = scmp.eq.s32.totalorder %s18, 0
      %p139 = por %p137, %p138
      %p140 = scmp.le.s32.totalorder 1, %s12
      %p141 = scmp.lt.s32.totalorder %s12, 3
      %p142 = pnand %p140, %p141
      %p143 = pneg %p142
      // Predicated region
      $region9: #{resnet_block_forward.3} parent=5 // pred_check
        _
      $region10: #{resnet_block_forward.3} parent=5 // pred_check_branch
        %145 = sbr.rel (%p142) target = $region12
      $region11: #{resnet_block_forward.3} parent=5 // pred_region
        %s146 = ssub.s32 %s12, 1
        // Predicated region
        $region13: #{resnet_block_forward.3} parent=11 // pred_check
          %p147 = pneg %p76
        $region14: #{resnet_block_forward.3} parent=11 // pred_check_branch
          %149 = sbr.rel (%p147) target = $region16
        $region15: #{resnet_block_forward.3} parent=11 // pred_region
          %p150 = scmp.lt.s32.totalorder %s22, 0
          %s151 = scalar_select %p150, %s22, 0
          %s152 = smul.addr %s151, 8
          %s153 = scalar_lea.vmem %s1, %s152
        $region16: #{resnet_block_forward.3} parent=11 // pred_fallthru
          _
      $region12: #{resnet_block_forward.3} parent=5 // pred_fallthru
        _
      %p154 = scmp.lt.s32.totalorder %s12, 2
      // Predicated region
      $region17: #{resnet_block_forward.3} parent=5 // pred_check
        %p155 = pneg %p154
      $region18: #{resnet_block_forward.3} parent=5 // pred_check_branch
        %157 = sbr.rel (%p155) target = $region20
      $region19: #{resnet_block_forward.3} parent=5 // pred_region
        // Predicated region
        $region21: #{resnet_block_forward.3} parent=19 // pred_check
          %p158 = pneg %p44
        $region22: #{resnet_block_forward.3} parent=19 // pred_check_branch
          %160 = sbr.rel (%p158) target = $region24
        $region23: #{resnet_block_forward.3} parent=19 // pred_region
          %p161 = scmp.lt.s32.totalorder %s19, 1
          %s162 = scalar_select %p161, %s19, 1
          %s163 = smul.addr %s162, 54
          %s164 = smul.addr %s163, 8
          %s165 = scalar_lea.vmem %s0, %s164
        $region24: #{resnet_block_forward.3} parent=19 // pred_fallthru
          _
        // Predicated region
        $region25: #{resnet_block_forward.3} parent=19 // pred_check
          %p166 = pneg %p98
        $region26: #{resnet_block_forward.3} parent=19 // pred_check_branch
          %168 = sbr.rel (%p166) target = $region28
        $region27: #{resnet_block_forward.3} parent=19 // pred_region
          %p169 = scmp.lt.s32.totalorder %s19, 1
          %s170 = scalar_select %p169, %s19, 1
          %p171 = scmp.lt.s32.totalorder %s20, 0
          %s172 = scalar_select %p171, %s20, 0
          %s173 = smul.addr %s170, 32
          %s174 = sadd.s32 %s172, %s173
          %s175 = smul.addr %s174, 8
          %s176 = scalar_lea.vmem %s2, %s175
        $region28: #{resnet_block_forward.3} parent=19 // pred_fallthru
          _
      $region20: #{resnet_block_forward.3} parent=5 // pred_fallthru
        _
      %p177 = scmp.le.s32.totalorder 1, %s12
      %p178 = scmp.lt.s32.totalorder %s12, 3
      %p179 = pnand %p177, %p178
      %p180 = pneg %p179
      // Predicated region
      $region29: #{resnet_block_forward.3} parent=5 // pred_check
        _
      $region30: #{resnet_block_forward.3} parent=5 // pred_check_branch
        %182 = sbr.rel (%p179) target = $region32
      $region31: #{resnet_block_forward.3} parent=5 // pred_region
        %s183 = ssub.s32 %s12, 1
        %p184 = scmp.lt.s32.totalorder %s21, 1
        %s185 = scalar_select %p184, %s21, 1
        %s186 = smul.addr %s185, 54
        %s187 = smul.addr %s186, 8
        %s188 = scalar_lea.vmem %s0, %s187
        %p189 = pneg %p50
        %p190 = pneg %p47
        %p191 = scmp.lt.s32.totalorder %s22, 0
        %s192 = scalar_select %p191, %s22, 0
        %s193 = smul.addr %s192, 8
        %s194 = scalar_lea.vmem %s1, %s193
        %p195 = pneg %p76
        %p196 = pneg %p73
        %p197 = scmp.lt.s32.totalorder %s21, 1
        %s198 = scalar_select %p197, %s21, 1
        %p199 = scmp.lt.s32.totalorder %s22, 0
        %s200 = scalar_select %p199, %s22, 0
        %s201 = smul.addr %s198, 32
        %s202 = sadd.s32 %s200, %s201
        %s203 = smul.addr %s202, 8
        %s204 = scalar_lea.vmem %s2, %s203
        %p205 = pneg %p104
        %p206 = pneg %p101
        %p207 = pneg %p132
        %p208 = pneg %p129
        %s209 = sand.u32 %s119, 1
        %s210 = scalar_lea.sflag [#allocation3], %s209
        %s211 = sand.u32 %s119, 1
        %s212 = smul.addr %s211, 256
        %s213 = scalar_lea.vmem [#allocation2], %s212
        %p214 = scmp.lt.s32.totalorder %s21, 1
        %s215 = scalar_select %p214, %s21, 1
        %s216 = smul.addr %s215, 54
        %s217 = smul.addr %s216, 8
        %s218 = scalar_lea.vmem %s0, %s217
        %p219 = scmp.lt.s32.totalorder %s22, 0
        %s220 = scalar_select %p219, %s22, 0
        %s221 = smul.addr %s220, 8
        %s222 = scalar_lea.vmem %s1, %s221
        %p223 = scmp.lt.s32.totalorder %s21, 1
        %s224 = scalar_select %p223, %s21, 1
        %p225 = scmp.lt.s32.totalorder %s22, 0
        %s226 = scalar_select %p225, %s22, 0
        %s227 = smul.addr %s224, 32
        %s228 = sadd.s32 %s226, %s227
        %s229 = smul.addr %s228, 8
        %s230 = scalar_lea.vmem %s2, %s229
        %v231 = vld [vmem:[%s218] sm:$0xff]
        %v232 = vld [vmem:[%s218 + $0x8] sm:$0xff]
        %v233 = vld [vmem:[%s218 + $0x10] sm:$0x3]
        %v234 = vld [vmem:[%s218 + $0x18] sm:$0xff]
        %v235 = vld [vmem:[%s218 + $0x20] sm:$0xff]
        %v236 = vld [vmem:[%s218 + $0x28] sm:$0x3]
        %v237 = vld [vmem:[%s218 + $0x30] sm:$0xff]
        %v238 = vld [vmem:[%s218 + $0x38] sm:$0xff]
        %v239 = vld [vmem:[%s218 + $0x40] sm:$0x3]
        %v240 = vld [vmem:[%s218 + $0x48] sm:$0xff]
        %v241 = vld [vmem:[%s218 + $0x50] sm:$0xff]
        %v242 = vld [vmem:[%s218 + $0x58] sm:$0x3]
        %v243 = vld [vmem:[%s218 + $0x60] sm:$0xff]
        %v244 = vld [vmem:[%s218 + $0x68] sm:$0xff]
        %v245 = vld [vmem:[%s218 + $0x70] sm:$0x3]
        %v246 = vld [vmem:[%s218 + $0x78] sm:$0xff]
        %v247 = vld [vmem:[%s218 + $0x80] sm:$0xff]
        %v248 = vld [vmem:[%s218 + $0x88] sm:$0x3]
        %v249 = vld [vmem:[%s218 + $0x90] sm:$0xff]
        %v250 = vld [vmem:[%s218 + $0x98] sm:$0xff]
        %v251 = vld [vmem:[%s218 + $0xa0] sm:$0x3]
        %v252 = vld [vmem:[%s218 + $0xa8] sm:$0xff]
        %v253 = vld [vmem:[%s218 + $0xb0] sm:$0xff]
        %v254 = vld [vmem:[%s218 + $0xb8] sm:$0x3]
        %v255 = vld [vmem:[%s218 + $0xc0] sm:$0xff]
        %v256 = vld [vmem:[%s218 + $0xc8] sm:$0xff]
        %v257 = vld [vmem:[%s218 + $0xd0] sm:$0x3]
        %v258 = vld [vmem:[%s218 + $0xd8] sm:$0xff]
        %v259 = vld [vmem:[%s218 + $0xe0] sm:$0xff]
        %v260 = vld [vmem:[%s218 + $0xe8] sm:$0x3]
        %v261 = vld [vmem:[%s218 + $0xf0] sm:$0xff]
        %v262 = vld [vmem:[%s218 + $0xf8] sm:$0xff]
        %v263 = vld [vmem:[%s218 + $0x100] sm:$0x3]
        %v264 = vld [vmem:[%s218 + $0x108] sm:$0xff]
        %v265 = vld [vmem:[%s218 + $0x110] sm:$0xff]
        %v266 = vld [vmem:[%s218 + $0x118] sm:$0x3]
        %v267 = vld [vmem:[%s218 + $0x120] sm:$0xff]
        %v268 = vld [vmem:[%s218 + $0x128] sm:$0xff]
        %v269 = vld [vmem:[%s218 + $0x130] sm:$0x3]
        %v270 = vld [vmem:[%s218 + $0x138] sm:$0xff]
        %v271 = vld [vmem:[%s218 + $0x140] sm:$0xff]
        %v272 = vld [vmem:[%s218 + $0x148] sm:$0x3]
        %v273 = vld [vmem:[%s218 + $0x150] sm:$0xff]
        %v274 = vld [vmem:[%s218 + $0x158] sm:$0xff]
        %v275 = vld [vmem:[%s218 + $0x160] sm:$0x3]
        %v276 = vld [vmem:[%s218 + $0x168] sm:$0xff]
        %v277 = vld [vmem:[%s218 + $0x170] sm:$0xff]
        %v278 = vld [vmem:[%s218 + $0x178] sm:$0x3]
        %v279 = vld [vmem:[%s218 + $0x180] sm:$0xff]
        %v280 = vld [vmem:[%s218 + $0x188] sm:$0xff]
        %v281 = vld [vmem:[%s218 + $0x190] sm:$0x3]
        %v282 = vld [vmem:[%s218 + $0x198] sm:$0xff]
        %v283 = vld [vmem:[%s218 + $0x1a0] sm:$0xff]
        %v284 = vld [vmem:[%s218 + $0x1a8] sm:$0x3]
        %vm333 = vcmask 1046528
        %v334 = vrot.slane %v231, 1
        %v335 = vrot.slane %v232, 1
        %v336 = vsel %vm333, %v334, %v335
        %v337 = vrot.slane %v233, 1
        %v338 = vsel %vm333, %v335, %v337
        %v339 = vrot.slane %v234, 1
        %v340 = vrot.slane %v235, 1
        %v341 = vsel %vm333, %v339, %v340
        %v342 = vrot.slane %v236, 1
        %v343 = vsel %vm333, %v340, %v342
        %v344 = vrot.slane %v237, 1
        %v345 = vrot.slane %v238, 1
        %v346 = vsel %vm333, %v344, %v345
        %v347 = vrot.slane %v239, 1
        %v348 = vsel %vm333, %v345, %v347
        %v349 = vrot.slane %v240, 1
        %v350 = vrot.slane %v241, 1
        %v351 = vsel %vm333, %v349, %v350
        %v352 = vrot.slane %v242, 1
        %v353 = vsel %vm333, %v350, %v352
        %v354 = vrot.slane %v243, 1
        %v355 = vrot.slane %v244, 1
        %v356 = vsel %vm333, %v354, %v355
        %v357 = vrot.slane %v245, 1
        %v358 = vsel %vm333, %v355, %v357
        %v359 = vrot.slane %v246, 1
        %v360 = vrot.slane %v247, 1
        %v361 = vsel %vm333, %v359, %v360
        %v362 = vrot.slane %v248, 1
        %v363 = vsel %vm333, %v360, %v362
        %v364 = vrot.slane %v249, 1
        %v365 = vrot.slane %v250, 1
        %v366 = vsel %vm333, %v364, %v365
        %v367 = vrot.slane %v251, 1
        %v368 = vsel %vm333, %v365, %v367
        %v369 = vrot.slane %v252, 1
        %v370 = vrot.slane %v253, 1
        %v371 = vsel %vm333, %v369, %v370
        %v372 = vrot.slane %v254, 1
        %v373 = vsel %vm333, %v370, %v372
        %v374 = vrot.slane %v255, 1
        %v375 = vrot.slane %v256, 1
        %v376 = vsel %vm333, %v374, %v375
        %v377 = vrot.slane %v257, 1
        %v378 = vsel %vm333, %v375, %v377
        %v379 = vrot.slane %v258, 1
        %v380 = vrot.slane %v259, 1
        %v381 = vsel %vm333, %v379, %v380
        %v382 = vrot.slane %v260, 1
        %v383 = vsel %vm333, %v380, %v382
        %v384 = vrot.slane %v261, 1
        %v385 = vrot.slane %v262, 1
        %v386 = vsel %vm333, %v384, %v385
        %v387 = vrot.slane %v263, 1
        %v388 = vsel %vm333, %v385, %v387
        %v389 = vrot.slane %v264, 1
        %v390 = vrot.slane %v265, 1
        %v391 = vsel %vm333, %v389, %v390
        %v392 = vrot.slane %v266, 1
        %v393 = vsel %vm333, %v390, %v392
        %v394 = vrot.slane %v267, 1
        %v395 = vrot.slane %v268, 1
        %v396 = vsel %vm333, %v394, %v395
        %v397 = vrot.slane %v269, 1
        %v398 = vsel %vm333, %v395, %v397
        %v399 = vrot.slane %v270, 1
        %v400 = vrot.slane %v271, 1
        %v401 = vsel %vm333, %v399, %v400
        %v402 = vrot.slane %v272, 1
        %v403 = vsel %vm333, %v400, %v402
        %v404 = vrot.slane %v273, 1
        %v405 = vrot.slane %v274, 1
        %v406 = vsel %vm333, %v404, %v405
        %v407 = vrot.slane %v275, 1
        %v408 = vsel %vm333, %v405, %v407
        %v409 = vrot.slane %v276, 1
        %v410 = vrot.slane %v277, 1
        %v411 = vsel %vm333, %v409, %v410
        %v412 = vrot.slane %v278, 1
        %v413 = vsel %vm333, %v410, %v412
        %vm446 = vcmask 1045504
        %v447 = vrot.slane %v231, 2
        %v448 = vrot.slane %v232, 2
        %v449 = vsel %vm446, %v447, %v448
        %v450 = vrot.slane %v233, 2
        %v451 = vsel %vm446, %v448, %v450
        %v452 = vrot.slane %v234, 2
        %v453 = vrot.slane %v235, 2
        %v454 = vsel %vm446, %v452, %v453
        %v455 = vrot.slane %v236, 2
        %v456 = vsel %vm446, %v453, %v455
        %v457 = vrot.slane %v237, 2
        %v458 = vrot.slane %v238, 2
        %v459 = vsel %vm446, %v457, %v458
        %v460 = vrot.slane %v239, 2
        %v461 = vsel %vm446, %v458, %v460
        %v462 = vrot.slane %v240, 2
        %v463 = vrot.slane %v241, 2
        %v464 = vsel %vm446, %v462, %v463
        %v465 = vrot.slane %v242, 2
        %v466 = vsel %vm446, %v463, %v465
        %v467 = vrot.slane %v243, 2
        %v468 = vrot.slane %v244, 2
        %v469 = vsel %vm446, %v467, %v468
        %v470 = vrot.slane %v245, 2
        %v471 = vsel %vm446, %v468, %v470
        %v472 = vrot.slane %v246, 2
        %v473 = vrot.slane %v247, 2
        %v474 = vsel %vm446, %v472, %v473
        %v475 = vrot.slane %v248, 2
        %v476 = vsel %vm446, %v473, %v475
        %v477 = vrot.slane %v249, 2
        %v478 = vrot.slane %v250, 2
        %v479 = vsel %vm446, %v477, %v478
        %v480 = vrot.slane %v251, 2
        %v481 = vsel %vm446, %v478, %v480
        %v482 = vrot.slane %v252, 2
        %v483 = vrot.slane %v253, 2
        %v484 = vsel %vm446, %v482, %v483
        %v485 = vrot.slane %v254, 2
        %v486 = vsel %vm446, %v483, %v485
        %v487 = vrot.slane %v255, 2
        %v488 = vrot.slane %v256, 2
        %v489 = vsel %vm446, %v487, %v488
        %v490 = vrot.slane %v257, 2
        %v491 = vsel %vm446, %v488, %v490
        %v492 = vrot.slane %v258, 2
        %v493 = vrot.slane %v259, 2
        %v494 = vsel %vm446, %v492, %v493
        %v495 = vrot.slane %v260, 2
        %v496 = vsel %vm446, %v493, %v495
        %v497 = vrot.slane %v261, 2
        %v498 = vrot.slane %v262, 2
        %v499 = vsel %vm446, %v497, %v498
        %v500 = vrot.slane %v263, 2
        %v501 = vsel %vm446, %v498, %v500
        %v502 = vrot.slane %v264, 2
        %v503 = vrot.slane %v265, 2
        %v504 = vsel %vm446, %v502, %v503
        %v505 = vrot.slane %v266, 2
        %v506 = vsel %vm446, %v503, %v505
        %v507 = vrot.slane %v267, 2
        %v508 = vrot.slane %v268, 2
        %v509 = vsel %vm446, %v507, %v508
        %v510 = vrot.slane %v269, 2
        %v511 = vsel %vm446, %v508, %v510
        %v512 = vrot.slane %v270, 2
        %v513 = vrot.slane %v271, 2
        %v514 = vsel %vm446, %v512, %v513
        %v515 = vrot.slane %v272, 2
        %v516 = vsel %vm446, %v513, %v515
        %v517 = vrot.slane %v273, 2
        %v518 = vrot.slane %v274, 2
        %v519 = vsel %vm446, %v517, %v518
        %v520 = vrot.slane %v275, 2
        %v521 = vsel %vm446, %v518, %v520
        %v522 = vrot.slane %v276, 2
        %v523 = vrot.slane %v277, 2
        %v524 = vsel %vm446, %v522, %v523
        %v525 = vrot.slane %v278, 2
        %v526 = vsel %vm446, %v523, %v525
        %v559 = vld [vmem:[%s222] sm:$0xff]
        %v560 = vld [vmem:[%s222 + $0x8] sm:$0xff]
        %v561 = vld [vmem:[%s222 + $0x10] sm:$0xff]
        %v562 = vld [vmem:[%s222 + $0x18] sm:$0xff]
        %v563 = vld [vmem:[%s222 + $0x20] sm:$0xff]
        %v564 = vld [vmem:[%s222 + $0x28] sm:$0xff]
        %v565 = vld [vmem:[%s222 + $0x30] sm:$0xff]
        %v566 = vld [vmem:[%s222 + $0x38] sm:$0xff]
        %v567 = vld [vmem:[%s222 + $0x40] sm:$0xff]
        %v568 = vld [vmem:[%s222 + $0x48] sm:$0xff]
        %v569 = vld [vmem:[%s222 + $0x50] sm:$0xff]
        %v570 = vld [vmem:[%s222 + $0x58] sm:$0xff]
        %v571 = vld [vmem:[%s222 + $0x60] sm:$0xff]
        %v572 = vld [vmem:[%s222 + $0x68] sm:$0xff]
        %v573 = vld [vmem:[%s222 + $0x70] sm:$0xff]
        %v574 = vld [vmem:[%s222 + $0x78] sm:$0xff]
        %v575 = vld [vmem:[%s222 + $0x80] sm:$0xff]
        %v576 = vld [vmem:[%s222 + $0x88] sm:$0xff]
        %v577 = vld [vmem:[%s222 + $0x90] sm:$0xff]
        %v578 = vld [vmem:[%s222 + $0x98] sm:$0xff]
        %v579 = vld [vmem:[%s222 + $0xa0] sm:$0xff]
        %v580 = vld [vmem:[%s222 + $0xa8] sm:$0xff]
        %v581 = vld [vmem:[%s222 + $0xb0] sm:$0xff]
        %v582 = vld [vmem:[%s222 + $0xb8] sm:$0xff]
        %v583 = vld [vmem:[%s222 + $0xc0] sm:$0xff]
        %v584 = vld [vmem:[%s222 + $0xc8] sm:$0xff]
        %v585 = vld [vmem:[%s222 + $0xd0] sm:$0xff]
        %v586 = vld [vmem:[%s222 + $0xd8] sm:$0xff]
        %v587 = vld [vmem:[%s222 + $0xe0] sm:$0xff]
        %v588 = vld [vmem:[%s222 + $0xe8] sm:$0xff]
        %v589 = vld [vmem:[%s222 + $0xf0] sm:$0xff]
        %v590 = vld [vmem:[%s222 + $0xf8] sm:$0xff]
        %v591 = vld [vmem:[%s222 + $0x100] sm:$0xff]
        %v592 = vld [vmem:[%s222 + $0x108] sm:$0xff]
        %v593 = vld [vmem:[%s222 + $0x110] sm:$0xff]
        %v594 = vld [vmem:[%s222 + $0x118] sm:$0xff]
        %v595 = vld [vmem:[%s222 + $0x120] sm:$0xff]
        %v596 = vld [vmem:[%s222 + $0x128] sm:$0xff]
        %v597 = vld [vmem:[%s222 + $0x130] sm:$0xff]
        %v598 = vld [vmem:[%s222 + $0x138] sm:$0xff]
        %v599 = vld [vmem:[%s222 + $0x140] sm:$0xff]
        %v600 = vld [vmem:[%s222 + $0x148] sm:$0xff]
        %v601 = vld [vmem:[%s222 + $0x150] sm:$0xff]
        %v602 = vld [vmem:[%s222 + $0x158] sm:$0xff]
        %v603 = vld [vmem:[%s222 + $0x160] sm:$0xff]
        %v604 = vld [vmem:[%s222 + $0x168] sm:$0xff]
        %v605 = vld [vmem:[%s222 + $0x170] sm:$0xff]
        %v606 = vld [vmem:[%s222 + $0x178] sm:$0xff]
        %v610 = vrot.slane %v279, 1
        %v611 = vrot.slane %v280, 1
        %v612 = vsel %vm333, %v610, %v611
        %v613 = vrot.slane %v281, 1
        %v614 = vsel %vm333, %v611, %v613
        %v617 = vrot.slane %v279, 2
        %v618 = vrot.slane %v280, 2
        %v619 = vsel %vm446, %v617, %v618
        %v620 = vrot.slane %v281, 2
        %v621 = vsel %vm446, %v618, %v620
        %v624 = vld [vmem:[%s222 + $0x180] sm:$0xff]
        %v625 = vld [vmem:[%s222 + $0x188] sm:$0xff]
        %v626 = vld [vmem:[%s222 + $0x190] sm:$0xff]
        %v627 = vld [vmem:[%s222 + $0x198] sm:$0xff]
        %v628 = vld [vmem:[%s222 + $0x1a0] sm:$0xff]
        %v629 = vld [vmem:[%s222 + $0x1a8] sm:$0xff]
        %v630 = vld [vmem:[%s222 + $0x1b0] sm:$0xff]
        %v631 = vld [vmem:[%s222 + $0x1b8] sm:$0xff]
        %v632 = vld [vmem:[%s222 + $0x1c0] sm:$0xff]
        %v633 = vld [vmem:[%s222 + $0x1c8] sm:$0xff]
        %v634 = vld [vmem:[%s222 + $0x1d0] sm:$0xff]
        %v635 = vld [vmem:[%s222 + $0x1d8] sm:$0xff]
        %v636 = vld [vmem:[%s222 + $0x1e0] sm:$0xff]
        %v637 = vld [vmem:[%s222 + $0x1e8] sm:$0xff]
        %v638 = vld [vmem:[%s222 + $0x1f0] sm:$0xff]
        %v639 = vld [vmem:[%s222 + $0x1f8] sm:$0xff]
        %v640 = vld [vmem:[%s222 + $0x200] sm:$0xff]
        %v641 = vld [vmem:[%s222 + $0x208] sm:$0xff]
        %v642 = vld [vmem:[%s222 + $0x210] sm:$0xff]
        %v643 = vld [vmem:[%s222 + $0x218] sm:$0xff]
        %v644 = vld [vmem:[%s222 + $0x220] sm:$0xff]
        %v645 = vld [vmem:[%s222 + $0x228] sm:$0xff]
        %v646 = vld [vmem:[%s222 + $0x230] sm:$0xff]
        %v647 = vld [vmem:[%s222 + $0x238] sm:$0xff]
        %v648 = vld [vmem:[%s222 + $0x240] sm:$0xff]
        %v649 = vld [vmem:[%s222 + $0x248] sm:$0xff]
        %v650 = vld [vmem:[%s222 + $0x250] sm:$0xff]
        %v651 = vld [vmem:[%s222 + $0x258] sm:$0xff]
        %v652 = vld [vmem:[%s222 + $0x260] sm:$0xff]
        %v653 = vld [vmem:[%s222 + $0x268] sm:$0xff]
        %v654 = vld [vmem:[%s222 + $0x270] sm:$0xff]
        %v655 = vld [vmem:[%s222 + $0x278] sm:$0xff]
        %v656 = vld [vmem:[%s222 + $0x280] sm:$0xff]
        %v657 = vld [vmem:[%s222 + $0x288] sm:$0xff]
        %v658 = vld [vmem:[%s222 + $0x290] sm:$0xff]
        %v659 = vld [vmem:[%s222 + $0x298] sm:$0xff]
        %v660 = vld [vmem:[%s222 + $0x2a0] sm:$0xff]
        %v661 = vld [vmem:[%s222 + $0x2a8] sm:$0xff]
        %v662 = vld [vmem:[%s222 + $0x2b0] sm:$0xff]
        %v663 = vld [vmem:[%s222 + $0x2b8] sm:$0xff]
        %v664 = vld [vmem:[%s222 + $0x2c0] sm:$0xff]
        %v665 = vld [vmem:[%s222 + $0x2c8] sm:$0xff]
        %v666 = vld [vmem:[%s222 + $0x2d0] sm:$0xff]
        %v667 = vld [vmem:[%s222 + $0x2d8] sm:$0xff]
        %v668 = vld [vmem:[%s222 + $0x2e0] sm:$0xff]
        %v669 = vld [vmem:[%s222 + $0x2e8] sm:$0xff]
        %v670 = vld [vmem:[%s222 + $0x2f0] sm:$0xff]
        %v671 = vld [vmem:[%s222 + $0x2f8] sm:$0xff]
        %672 = vmatpush.msra.mxu0 %v639
        %673 = vmatpush.msra.mxu0 %v638
        %674 = vmatpush.msra.mxu0 %v637
        %675 = vmatpush.msra.mxu0 %v636
        %676 = vmatpush.msra.mxu0 %v635
        %677 = vmatpush.msra.mxu0 %v634
        %678 = vmatpush.msra.mxu0 %v633
        %679 = vmatpush.msra.mxu0 %v632
        %680 = vmatpush.msra.mxu0 %v631
        %681 = vmatpush.msra.mxu0 %v630
        %682 = vmatpush.msra.mxu0 %v629
        %683 = vmatpush.msra.mxu0 %v628
        %684 = vmatpush.msra.mxu0 %v627
        %685 = vmatpush.msra.mxu0 %v626
        %686 = vmatpush.msra.mxu0 %v625
        %687 = vmatpush.msra.mxu0 %v624
        %688 = vmatmul.f32.gmra.mxu0 %v234
        %v689 = vpop.f32.mrf.mxu0
        %v690 = vadd.f32 0.0, %v689
        %691 = vmatmul.f32.gmra.mxu0 %v235
        %v692 = vpop.f32.mrf.mxu0
        %v693 = vadd.f32 0.0, %v692
        %694 = vmatmul.f32.gmra.mxu0 %v237
        %v695 = vpop.f32.mrf.mxu0
        %v696 = vadd.f32 0.0, %v695
        %697 = vmatmul.f32.gmra.mxu0 %v238
        %v698 = vpop.f32.mrf.mxu0
        %v699 = vadd.f32 0.0, %v698
        %700 = vmatmul.f32.gmra.mxu0 %v240
        %v701 = vpop.f32.mrf.mxu0
        %v702 = vadd.f32 0.0, %v701
        %703 = vmatmul.f32.gmra.mxu0 %v241
        %v704 = vpop.f32.mrf.mxu0
        %v705 = vadd.f32 0.0, %v704
        %706 = vmatmul.f32.gmra.mxu0 %v243
        %v707 = vpop.f32.mrf.mxu0
        %v708 = vadd.f32 0.0, %v707
        %709 = vmatmul.f32.gmra.mxu0 %v244
        %v710 = vpop.f32.mrf.mxu0
        %v711 = vadd.f32 0.0, %v710
        %712 = vmatmul.f32.gmra.mxu0 %v246
        %v713 = vpop.f32.mrf.mxu0
        %v714 = vadd.f32 0.0, %v713
        %715 = vmatmul.f32.gmra.mxu0 %v247
        %v716 = vpop.f32.mrf.mxu0
        %v717 = vadd.f32 0.0, %v716
        %718 = vmatmul.f32.gmra.mxu0 %v249
        %v719 = vpop.f32.mrf.mxu0
        %v720 = vadd.f32 0.0, %v719
        %721 = vmatmul.f32.gmra.mxu0 %v250
        %v722 = vpop.f32.mrf.mxu0
        %v723 = vadd.f32 0.0, %v722
        %724 = vmatmul.f32.gmra.mxu0 %v252
        %v725 = vpop.f32.mrf.mxu0
        %v726 = vadd.f32 0.0, %v725
        %727 = vmatmul.f32.gmra.mxu0 %v253
        %v728 = vpop.f32.mrf.mxu0
        %v729 = vadd.f32 0.0, %v728
        %730 = vmatmul.f32.gmra.mxu0 %v255
        %v731 = vpop.f32.mrf.mxu0
        %v732 = vadd.f32 0.0, %v731
        %733 = vmatmul.f32.gmra.mxu0 %v256
        %v734 = vpop.f32.mrf.mxu0
        %v735 = vadd.f32 0.0, %v734
        %736 = vmatmul.f32.gmra.mxu0 %v258
        %v737 = vpop.f32.mrf.mxu0
        %v738 = vadd.f32 0.0, %v737
        %739 = vmatmul.f32.gmra.mxu0 %v259
        %v740 = vpop.f32.mrf.mxu0
        %v741 = vadd.f32 0.0, %v740
        %742 = vmatmul.f32.gmra.mxu0 %v261
        %v743 = vpop.f32.mrf.mxu0
        %v744 = vadd.f32 0.0, %v743
        %745 = vmatmul.f32.gmra.mxu0 %v262
        %v746 = vpop.f32.mrf.mxu0
        %v747 = vadd.f32 0.0, %v746
        %748 = vmatmul.f32.gmra.mxu0 %v264
        %v749 = vpop.f32.mrf.mxu0
        %v750 = vadd.f32 0.0, %v749
        %751 = vmatmul.f32.gmra.mxu0 %v265
        %v752 = vpop.f32.mrf.mxu0
        %v753 = vadd.f32 0.0, %v752
        %754 = vmatmul.f32.gmra.mxu0 %v267
        %v755 = vpop.f32.mrf.mxu0
        %v756 = vadd.f32 0.0, %v755
        %757 = vmatmul.f32.gmra.mxu0 %v268
        %v758 = vpop.f32.mrf.mxu0
        %v759 = vadd.f32 0.0, %v758
        %760 = vmatmul.f32.gmra.mxu0 %v270
        %v761 = vpop.f32.mrf.mxu0
        %v762 = vadd.f32 0.0, %v761
        %763 = vmatmul.f32.gmra.mxu0 %v271
        %v764 = vpop.f32.mrf.mxu0
        %v765 = vadd.f32 0.0, %v764
        %766 = vmatmul.f32.gmra.mxu0 %v273
        %v767 = vpop.f32.mrf.mxu0
        %v768 = vadd.f32 0.0, %v767
        %769 = vmatmul.f32.gmra.mxu0 %v274
        %v770 = vpop.f32.mrf.mxu0
        %v771 = vadd.f32 0.0, %v770
        %772 = vmatmul.f32.gmra.mxu0 %v276
        %v773 = vpop.f32.mrf.mxu0
        %v774 = vadd.f32 0.0, %v773
        %775 = vmatmul.f32.gmra.mxu0 %v277
        %v776 = vpop.f32.mrf.mxu0
        %v777 = vadd.f32 0.0, %v776
        %778 = vmatmul.f32.gmra.mxu0 %v279
        %v779 = vpop.f32.mrf.mxu0
        %v780 = vadd.f32 0.0, %v779
        %781 = vmatmul.f32.gmra.mxu0 %v280
        %v782 = vpop.f32.mrf.mxu0
        %v783 = vadd.f32 0.0, %v782
        %784 = vdwg.mxu0
        %785 = vmatpush.msra.mxu0 %v655
        %786 = vmatpush.msra.mxu0 %v654
        %787 = vmatpush.msra.mxu0 %v653
        %788 = vmatpush.msra.mxu0 %v652
        %789 = vmatpush.msra.mxu0 %v651
        %790 = vmatpush.msra.mxu0 %v650
        %791 = vmatpush.msra.mxu0 %v649
        %792 = vmatpush.msra.mxu0 %v648
        %793 = vmatpush.msra.mxu0 %v647
        %794 = vmatpush.msra.mxu0 %v646
        %795 = vmatpush.msra.mxu0 %v645
        %796 = vmatpush.msra.mxu0 %v644
        %797 = vmatpush.msra.mxu0 %v643
        %798 = vmatpush.msra.mxu0 %v642
        %799 = vmatpush.msra.mxu0 %v641
        %800 = vmatpush.msra.mxu0 %v640
        %801 = vmatmul.f32.gmra.mxu0 %v341
        %v802 = vpop.f32.mrf.mxu0
        %v803 = vadd.f32 %v690, %v802
        %804 = vmatmul.f32.gmra.mxu0 %v343
        %v805 = vpop.f32.mrf.mxu0
        %v806 = vadd.f32 %v693, %v805
        %807 = vmatmul.f32.gmra.mxu0 %v346
        %v808 = vpop.f32.mrf.mxu0
        %v809 = vadd.f32 %v696, %v808
        %810 = vmatmul.f32.gmra.mxu0 %v348
        %v811 = vpop.f32.mrf.mxu0
        %v812 = vadd.f32 %v699, %v811
        %813 = vmatmul.f32.gmra.mxu0 %v351
        %v814 = vpop.f32.mrf.mxu0
        %v815 = vadd.f32 %v702, %v814
        %816 = vmatmul.f32.gmra.mxu0 %v353
        %v817 = vpop.f32.mrf.mxu0
        %v818 = vadd.f32 %v705, %v817
        %819 = vmatmul.f32.gmra.mxu0 %v356
        %v820 = vpop.f32.mrf.mxu0
        %v821 = vadd.f32 %v708, %v820
        %822 = vmatmul.f32.gmra.mxu0 %v358
        %v823 = vpop.f32.mrf.mxu0
        %v824 = vadd.f32 %v711, %v823
        %825 = vmatmul.f32.gmra.mxu0 %v361
        %v826 = vpop.f32.mrf.mxu0
        %v827 = vadd.f32 %v714, %v826
        %828 = vmatmul.f32.gmra.mxu0 %v363
        %v829 = vpop.f32.mrf.mxu0
        %v830 = vadd.f32 %v717, %v829
        %831 = vmatmul.f32.gmra.mxu0 %v366
        %v832 = vpop.f32.mrf.mxu0
        %v833 = vadd.f32 %v720, %v832
        %834 = vmatmul.f32.gmra.mxu0 %v368
        %v835 = vpop.f32.mrf.mxu0
        %v836 = vadd.f32 %v723, %v835
        %837 = vmatmul.f32.gmra.mxu0 %v371
        %v838 = vpop.f32.mrf.mxu0
        %v839 = vadd.f32 %v726, %v838
        %840 = vmatmul.f32.gmra.mxu0 %v373
        %v841 = vpop.f32.mrf.mxu0
        %v842 = vadd.f32 %v729, %v841
        %843 = vmatmul.f32.gmra.mxu0 %v376
        %v844 = vpop.f32.mrf.mxu0
        %v845 = vadd.f32 %v732, %v844
        %846 = vmatmul.f32.gmra.mxu0 %v378
        %v847 = vpop.f32.mrf.mxu0
        %v848 = vadd.f32 %v735, %v847
        %849 = vmatmul.f32.gmra.mxu0 %v381
        %v850 = vpop.f32.mrf.mxu0
        %v851 = vadd.f32 %v738, %v850
        %852 = vmatmul.f32.gmra.mxu0 %v383
        %v853 = vpop.f32.mrf.mxu0
        %v854 = vadd.f32 %v741, %v853
        %855 = vmatmul.f32.gmra.mxu0 %v386
        %v856 = vpop.f32.mrf.mxu0
        %v857 = vadd.f32 %v744, %v856
        %858 = vmatmul.f32.gmra.mxu0 %v388
        %v859 = vpop.f32.mrf.mxu0
        %v860 = vadd.f32 %v747, %v859
        %861 = vmatmul.f32.gmra.mxu0 %v391
        %v862 = vpop.f32.mrf.mxu0
        %v863 = vadd.f32 %v750, %v862
        %864 = vmatmul.f32.gmra.mxu0 %v393
        %v865 = vpop.f32.mrf.mxu0
        %v866 = vadd.f32 %v753, %v865
        %867 = vmatmul.f32.gmra.mxu0 %v396
        %v868 = vpop.f32.mrf.mxu0
        %v869 = vadd.f32 %v756, %v868
        %870 = vmatmul.f32.gmra.mxu0 %v398
        %v871 = vpop.f32.mrf.mxu0
        %v872 = vadd.f32 %v759, %v871
        %873 = vmatmul.f32.gmra.mxu0 %v401
        %v874 = vpop.f32.mrf.mxu0
        %v875 = vadd.f32 %v762, %v874
        %876 = vmatmul.f32.gmra.mxu0 %v403
        %v877 = vpop.f32.mrf.mxu0
        %v878 = vadd.f32 %v765, %v877
        %879 = vmatmul.f32.gmra.mxu0 %v406
        %v880 = vpop.f32.mrf.mxu0
        %v881 = vadd.f32 %v768, %v880
        %882 = vmatmul.f32.gmra.mxu0 %v408
        %v883 = vpop.f32.mrf.mxu0
        %v884 = vadd.f32 %v771, %v883
        %885 = vmatmul.f32.gmra.mxu0 %v411
        %v886 = vpop.f32.mrf.mxu0
        %v887 = vadd.f32 %v774, %v886
        %888 = vmatmul.f32.gmra.mxu0 %v413
        %v889 = vpop.f32.mrf.mxu0
        %v890 = vadd.f32 %v777, %v889
        %891 = vmatmul.f32.gmra.mxu0 %v612
        %v892 = vpop.f32.mrf.mxu0
        %v893 = vadd.f32 %v780, %v892
        %894 = vmatmul.f32.gmra.mxu0 %v614
        %v895 = vpop.f32.mrf.mxu0
        %v896 = vadd.f32 %v783, %v895
        %897 = vdwg.mxu0
        %898 = vmatpush.msra.mxu0 %v671
        %899 = vmatpush.msra.mxu0 %v670
        %900 = vmatpush.msra.mxu0 %v669
        %901 = vmatpush.msra.mxu0 %v668
        %902 = vmatpush.msra.mxu0 %v667
        %903 = vmatpush.msra.mxu0 %v666
        %904 = vmatpush.msra.mxu0 %v665
        %905 = vmatpush.msra.mxu0 %v664
        %906 = vmatpush.msra.mxu0 %v663
        %907 = vmatpush.msra.mxu0 %v662
        %908 = vmatpush.msra.mxu0 %v661
        %909 = vmatpush.msra.mxu0 %v660
        %910 = vmatpush.msra.mxu0 %v659
        %911 = vmatpush.msra.mxu0 %v658
        %912 = vmatpush.msra.mxu0 %v657
        %913 = vmatpush.msra.mxu0 %v656
        %914 = vmatmul.f32.gmra.mxu0 %v454
        %v915 = vpop.f32.mrf.mxu0
        %v916 = vadd.f32 %v803, %v915
        %917 = vmatmul.f32.gmra.mxu0 %v456
        %v918 = vpop.f32.mrf.mxu0
        %v919 = vadd.f32 %v806, %v918
        %920 = vmatmul.f32.gmra.mxu0 %v459
        %v921 = vpop.f32.mrf.mxu0
        %v922 = vadd.f32 %v809, %v921
        %923 = vmatmul.f32.gmra.mxu0 %v461
        %v924 = vpop.f32.mrf.mxu0
        %v925 = vadd.f32 %v812, %v924
        %926 = vmatmul.f32.gmra.mxu0 %v464
        %v927 = vpop.f32.mrf.mxu0
        %v928 = vadd.f32 %v815, %v927
        %929 = vmatmul.f32.gmra.mxu0 %v466
        %v930 = vpop.f32.mrf.mxu0
        %v931 = vadd.f32 %v818, %v930
        %932 = vmatmul.f32.gmra.mxu0 %v469
        %v933 = vpop.f32.mrf.mxu0
        %v934 = vadd.f32 %v821, %v933
        %935 = vmatmul.f32.gmra.mxu0 %v471
        %v936 = vpop.f32.mrf.mxu0
        %v937 = vadd.f32 %v824, %v936
        %938 = vmatmul.f32.gmra.mxu0 %v474
        %v939 = vpop.f32.mrf.mxu0
        %v940 = vadd.f32 %v827, %v939
        %941 = vmatmul.f32.gmra.mxu0 %v476
        %v942 = vpop.f32.mrf.mxu0
        %v943 = vadd.f32 %v830, %v942
        %944 = vmatmul.f32.gmra.mxu0 %v479
        %v945 = vpop.f32.mrf.mxu0
        %v946 = vadd.f32 %v833, %v945
        %947 = vmatmul.f32.gmra.mxu0 %v481
        %v948 = vpop.f32.mrf.mxu0
        %v949 = vadd.f32 %v836, %v948
        %950 = vmatmul.f32.gmra.mxu0 %v484
        %v951 = vpop.f32.mrf.mxu0
        %v952 = vadd.f32 %v839, %v951
        %953 = vmatmul.f32.gmra.mxu0 %v486
        %v954 = vpop.f32.mrf.mxu0
        %v955 = vadd.f32 %v842, %v954
        %956 = vmatmul.f32.gmra.mxu0 %v489
        %v957 = vpop.f32.mrf.mxu0
        %v958 = vadd.f32 %v845, %v957
        %959 = vmatmul.f32.gmra.mxu0 %v491
        %v960 = vpop.f32.mrf.mxu0
        %v961 = vadd.f32 %v848, %v960
        %962 = vmatmul.f32.gmra.mxu0 %v494
        %v963 = vpop.f32.mrf.mxu0
        %v964 = vadd.f32 %v851, %v963
        %965 = vmatmul.f32.gmra.mxu0 %v496
        %v966 = vpop.f32.mrf.mxu0
        %v967 = vadd.f32 %v854, %v966
        %968 = vmatmul.f32.gmra.mxu0 %v499
        %v969 = vpop.f32.mrf.mxu0
        %v970 = vadd.f32 %v857, %v969
        %971 = vmatmul.f32.gmra.mxu0 %v501
        %v972 = vpop.f32.mrf.mxu0
        %v973 = vadd.f32 %v860, %v972
        %974 = vmatmul.f32.gmra.mxu0 %v504
        %v975 = vpop.f32.mrf.mxu0
        %v976 = vadd.f32 %v863, %v975
        %977 = vmatmul.f32.gmra.mxu0 %v506
        %v978 = vpop.f32.mrf.mxu0
        %v979 = vadd.f32 %v866, %v978
        %980 = vmatmul.f32.gmra.mxu0 %v509
        %v981 = vpop.f32.mrf.mxu0
        %v982 = vadd.f32 %v869, %v981
        %983 = vmatmul.f32.gmra.mxu0 %v511
        %v984 = vpop.f32.mrf.mxu0
        %v985 = vadd.f32 %v872, %v984
        %986 = vmatmul.f32.gmra.mxu0 %v514
        %v987 = vpop.f32.mrf.mxu0
        %v988 = vadd.f32 %v875, %v987
        %989 = vmatmul.f32.gmra.mxu0 %v516
        %v990 = vpop.f32.mrf.mxu0
        %v991 = vadd.f32 %v878, %v990
        %992 = vmatmul.f32.gmra.mxu0 %v519
        %v993 = vpop.f32.mrf.mxu0
        %v994 = vadd.f32 %v881, %v993
        %995 = vmatmul.f32.gmra.mxu0 %v521
        %v996 = vpop.f32.mrf.mxu0
        %v997 = vadd.f32 %v884, %v996
        %998 = vmatmul.f32.gmra.mxu0 %v524
        %v999 = vpop.f32.mrf.mxu0
        %v1000 = vadd.f32 %v887, %v999
        %1001 = vmatmul.f32.gmra.mxu0 %v526
        %v1002 = vpop.f32.mrf.mxu0
        %v1003 = vadd.f32 %v890, %v1002
        %1004 = vmatmul.f32.gmra.mxu0 %v619
        %v1005 = vpop.f32.mrf.mxu0
        %v1006 = vadd.f32 %v893, %v1005
        %1007 = vmatmul.f32.gmra.mxu0 %v621
        %v1008 = vpop.f32.mrf.mxu0
        %v1009 = vadd.f32 %v896, %v1008
        %1010 = vdwg.mxu0
        %1011 = vmatpush.msra.mxu0 %v574
        %1012 = vmatpush.msra.mxu0 %v573
        %1013 = vmatpush.msra.mxu0 %v572
        %1014 = vmatpush.msra.mxu0 %v571
        %1015 = vmatpush.msra.mxu0 %v570
        %1016 = vmatpush.msra.mxu0 %v569
        %1017 = vmatpush.msra.mxu0 %v568
        %1018 = vmatpush.msra.mxu0 %v567
        %1019 = vmatpush.msra.mxu0 %v566
        %1020 = vmatpush.msra.mxu0 %v565
        %1021 = vmatpush.msra.mxu0 %v564
        %1022 = vmatpush.msra.mxu0 %v563
        %1023 = vmatpush.msra.mxu0 %v562
        %1024 = vmatpush.msra.mxu0 %v561
        %1025 = vmatpush.msra.mxu0 %v560
        %1026 = vmatpush.msra.mxu0 %v559
        %1027 = vmatmul.f32.gmra.mxu0 %v231
        %v1028 = vpop.f32.mrf.mxu0
        %v1029 = vadd.f32 %v916, %v1028
        %1030 = vmatmul.f32.gmra.mxu0 %v232
        %v1031 = vpop.f32.mrf.mxu0
        %v1032 = vadd.f32 %v919, %v1031
        %1033 = vmatmul.f32.gmra.mxu0 %v234
        %v1034 = vpop.f32.mrf.mxu0
        %v1035 = vadd.f32 %v922, %v1034
        %1036 = vmatmul.f32.gmra.mxu0 %v235
        %v1037 = vpop.f32.mrf.mxu0
        %v1038 = vadd.f32 %v925, %v1037
        %1039 = vmatmul.f32.gmra.mxu0 %v237
        %v1040 = vpop.f32.mrf.mxu0
        %v1041 = vadd.f32 %v928, %v1040
        %1042 = vmatmul.f32.gmra.mxu0 %v238
        %v1043 = vpop.f32.mrf.mxu0
        %v1044 = vadd.f32 %v931, %v1043
        %1045 = vmatmul.f32.gmra.mxu0 %v240
        %v1046 = vpop.f32.mrf.mxu0
        %v1047 = vadd.f32 %v934, %v1046
        %1048 = vmatmul.f32.gmra.mxu0 %v241
        %v1049 = vpop.f32.mrf.mxu0
        %v1050 = vadd.f32 %v937, %v1049
        %1051 = vmatmul.f32.gmra.mxu0 %v243
        %v1052 = vpop.f32.mrf.mxu0
        %v1053 = vadd.f32 %v940, %v1052
        %1054 = vmatmul.f32.gmra.mxu0 %v244
        %v1055 = vpop.f32.mrf.mxu0
        %v1056 = vadd.f32 %v943, %v1055
        %1057 = vmatmul.f32.gmra.mxu0 %v246
        %v1058 = vpop.f32.mrf.mxu0
        %v1059 = vadd.f32 %v946, %v1058
        %1060 = vmatmul.f32.gmra.mxu0 %v247
        %v1061 = vpop.f32.mrf.mxu0
        %v1062 = vadd.f32 %v949, %v1061
        %1063 = vmatmul.f32.gmra.mxu0 %v249
        %v1064 = vpop.f32.mrf.mxu0
        %v1065 = vadd.f32 %v952, %v1064
        %1066 = vmatmul.f32.gmra.mxu0 %v250
        %v1067 = vpop.f32.mrf.mxu0
        %v1068 = vadd.f32 %v955, %v1067
        %1069 = vmatmul.f32.gmra.mxu0 %v252
        %v1070 = vpop.f32.mrf.mxu0
        %v1071 = vadd.f32 %v958, %v1070
        %1072 = vmatmul.f32.gmra.mxu0 %v253
        %v1073 = vpop.f32.mrf.mxu0
        %v1074 = vadd.f32 %v961, %v1073
        %1075 = vmatmul.f32.gmra.mxu0 %v255
        %v1076 = vpop.f32.mrf.mxu0
        %v1077 = vadd.f32 %v964, %v1076
        %1078 = vmatmul.f32.gmra.mxu0 %v256
        %v1079 = vpop.f32.mrf.mxu0
        %v1080 = vadd.f32 %v967, %v1079
        %1081 = vmatmul.f32.gmra.mxu0 %v258
        %v1082 = vpop.f32.mrf.mxu0
        %v1083 = vadd.f32 %v970, %v1082
        %1084 = vmatmul.f32.gmra.mxu0 %v259
        %v1085 = vpop.f32.mrf.mxu0
        %v1086 = vadd.f32 %v973, %v1085
        %1087 = vmatmul.f32.gmra.mxu0 %v261
        %v1088 = vpop.f32.mrf.mxu0
        %v1089 = vadd.f32 %v976, %v1088
        %1090 = vmatmul.f32.gmra.mxu0 %v262
        %v1091 = vpop.f32.mrf.mxu0
        %v1092 = vadd.f32 %v979, %v1091
        %1093 = vmatmul.f32.gmra.mxu0 %v264
        %v1094 = vpop.f32.mrf.mxu0
        %v1095 = vadd.f32 %v982, %v1094
        %1096 = vmatmul.f32.gmra.mxu0 %v265
        %v1097 = vpop.f32.mrf.mxu0
        %v1098 = vadd.f32 %v985, %v1097
        %1099 = vmatmul.f32.gmra.mxu0 %v267
        %v1100 = vpop.f32.mrf.mxu0
        %v1101 = vadd.f32 %v988, %v1100
        %1102 = vmatmul.f32.gmra.mxu0 %v268
        %v1103 = vpop.f32.mrf.mxu0
        %v1104 = vadd.f32 %v991, %v1103
        %1105 = vmatmul.f32.gmra.mxu0 %v270
        %v1106 = vpop.f32.mrf.mxu0
        %v1107 = vadd.f32 %v994, %v1106
        %1108 = vmatmul.f32.gmra.mxu0 %v271
        %v1109 = vpop.f32.mrf.mxu0
        %v1110 = vadd.f32 %v997, %v1109
        %1111 = vmatmul.f32.gmra.mxu0 %v273
        %v1112 = vpop.f32.mrf.mxu0
        %v1113 = vadd.f32 %v1000, %v1112
        %1114 = vmatmul.f32.gmra.mxu0 %v274
        %v1115 = vpop.f32.mrf.mxu0
        %v1116 = vadd.f32 %v1003, %v1115
        %1117 = vmatmul.f32.gmra.mxu0 %v276
        %v1118 = vpop.f32.mrf.mxu0
        %v1119 = vadd.f32 %v1006, %v1118
        %1120 = vmatmul.f32.gmra.mxu0 %v277
        %v1121 = vpop.f32.mrf.mxu0
        %v1122 = vadd.f32 %v1009, %v1121
        %1123 = vdwg.mxu0
        %1124 = vmatpush.msra.mxu0 %v590
        %1125 = vmatpush.msra.mxu0 %v589
        %1126 = vmatpush.msra.mxu0 %v588
        %1127 = vmatpush.msra.mxu0 %v587
        %1128 = vmatpush.msra.mxu0 %v586
        %1129 = vmatpush.msra.mxu0 %v585
        %1130 = vmatpush.msra.mxu0 %v584
        %1131 = vmatpush.msra.mxu0 %v583
        %1132 = vmatpush.msra.mxu0 %v582
        %1133 = vmatpush.msra.mxu0 %v581
        %1134 = vmatpush.msra.mxu0 %v580
        %1135 = vmatpush.msra.mxu0 %v579
        %1136 = vmatpush.msra.mxu0 %v578
        %1137 = vmatpush.msra.mxu0 %v577
        %1138 = vmatpush.msra.mxu0 %v576
        %1139 = vmatpush.msra.mxu0 %v575
        %1140 = vmatmul.f32.gmra.mxu0 %v336
        %v1141 = vpop.f32.mrf.mxu0
        %v1142 = vadd.f32 %v1029, %v1141
        %1143 = vmatmul.f32.gmra.mxu0 %v338
        %v1144 = vpop.f32.mrf.mxu0
        %v1145 = vadd.f32 %v1032, %v1144
        %1146 = vmatmul.f32.gmra.mxu0 %v341
        %v1147 = vpop.f32.mrf.mxu0
        %v1148 = vadd.f32 %v1035, %v1147
        %1149 = vmatmul.f32.gmra.mxu0 %v343
        %v1150 = vpop.f32.mrf.mxu0
        %v1151 = vadd.f32 %v1038, %v1150
        %1152 = vmatmul.f32.gmra.mxu0 %v346
        %v1153 = vpop.f32.mrf.mxu0
        %v1154 = vadd.f32 %v1041, %v1153
        %1155 = vmatmul.f32.gmra.mxu0 %v348
        %v1156 = vpop.f32.mrf.mxu0
        %v1157 = vadd.f32 %v1044, %v1156
        %1158 = vmatmul.f32.gmra.mxu0 %v351
        %v1159 = vpop.f32.mrf.mxu0
        %v1160 = vadd.f32 %v1047, %v1159
        %1161 = vmatmul.f32.gmra.mxu0 %v353
        %v1162 = vpop.f32.mrf.mxu0
        %v1163 = vadd.f32 %v1050, %v1162
        %1164 = vmatmul.f32.gmra.mxu0 %v356
        %v1165 = vpop.f32.mrf.mxu0
        %v1166 = vadd.f32 %v1053, %v1165
        %1167 = vmatmul.f32.gmra.mxu0 %v358
        %v1168 = vpop.f32.mrf.mxu0
        %v1169 = vadd.f32 %v1056, %v1168
        %1170 = vmatmul.f32.gmra.mxu0 %v361
        %v1171 = vpop.f32.mrf.mxu0
        %v1172 = vadd.f32 %v1059, %v1171
        %1173 = vmatmul.f32.gmra.mxu0 %v363
        %v1174 = vpop.f32.mrf.mxu0
        %v1175 = vadd.f32 %v1062, %v1174
        %1176 = vmatmul.f32.gmra.mxu0 %v366
        %v1177 = vpop.f32.mrf.mxu0
        %v1178 = vadd.f32 %v1065, %v1177
        %1179 = vmatmul.f32.gmra.mxu0 %v368
        %v1180 = vpop.f32.mrf.mxu0
        %v1181 = vadd.f32 %v1068, %v1180
        %1182 = vmatmul.f32.gmra.mxu0 %v371
        %v1183 = vpop.f32.mrf.mxu0
        %v1184 = vadd.f32 %v1071, %v1183
        %1185 = vmatmul.f32.gmra.mxu0 %v373
        %v1186 = vpop.f32.mrf.mxu0
        %v1187 = vadd.f32 %v1074, %v1186
        %1188 = vmatmul.f32.gmra.mxu0 %v376
        %v1189 = vpop.f32.mrf.mxu0
        %v1190 = vadd.f32 %v1077, %v1189
        %1191 = vmatmul.f32.gmra.mxu0 %v378
        %v1192 = vpop.f32.mrf.mxu0
        %v1193 = vadd.f32 %v1080, %v1192
        %1194 = vmatmul.f32.gmra.mxu0 %v381
        %v1195 = vpop.f32.mrf.mxu0
        %v1196 = vadd.f32 %v1083, %v1195
        %1197 = vmatmul.f32.gmra.mxu0 %v383
        %v1198 = vpop.f32.mrf.mxu0
        %v1199 = vadd.f32 %v1086, %v1198
        %1200 = vmatmul.f32.gmra.mxu0 %v386
        %v1201 = vpop.f32.mrf.mxu0
        %v1202 = vadd.f32 %v1089, %v1201
        %1203 = vmatmul.f32.gmra.mxu0 %v388
        %v1204 = vpop.f32.mrf.mxu0
        %v1205 = vadd.f32 %v1092, %v1204
        %1206 = vmatmul.f32.gmra.mxu0 %v391
        %v1207 = vpop.f32.mrf.mxu0
        %v1208 = vadd.f32 %v1095, %v1207
        %1209 = vmatmul.f32.gmra.mxu0 %v393
        %v1210 = vpop.f32.mrf.mxu0
        %v1211 = vadd.f32 %v1098, %v1210
        %1212 = vmatmul.f32.gmra.mxu0 %v396
        %v1213 = vpop.f32.mrf.mxu0
        %v1214 = vadd.f32 %v1101, %v1213
        %1215 = vmatmul.f32.gmra.mxu0 %v398
        %v1216 = vpop.f32.mrf.mxu0
        %v1217 = vadd.f32 %v1104, %v1216
        %1218 = vmatmul.f32.gmra.mxu0 %v401
        %v1219 = vpop.f32.mrf.mxu0
        %v1220 = vadd.f32 %v1107, %v1219
        %1221 = vmatmul.f32.gmra.mxu0 %v403
        %v1222 = vpop.f32.mrf.mxu0
        %v1223 = vadd.f32 %v1110, %v1222
        %1224 = vmatmul.f32.gmra.mxu0 %v406
        %v1225 = vpop.f32.mrf.mxu0
        %v1226 = vadd.f32 %v1113, %v1225
        %1227 = vmatmul.f32.gmra.mxu0 %v408
        %v1228 = vpop.f32.mrf.mxu0
        %v1229 = vadd.f32 %v1116, %v1228
        %1230 = vmatmul.f32.gmra.mxu0 %v411
        %v1231 = vpop.f32.mrf.mxu0
        %v1232 = vadd.f32 %v1119, %v1231
        %1233 = vmatmul.f32.gmra.mxu0 %v413
        %v1234 = vpop.f32.mrf.mxu0
        %v1235 = vadd.f32 %v1122, %v1234
        %1236 = vdwg.mxu0
        %1237 = vmatpush.msra.mxu0 %v606
        %1238 = vmatpush.msra.mxu0 %v605
        %1239 = vmatpush.msra.mxu0 %v604
        %1240 = vmatpush.msra.mxu0 %v603
        %1241 = vmatpush.msra.mxu0 %v602
        %1242 = vmatpush.msra.mxu0 %v601
        %1243 = vmatpush.msra.mxu0 %v600
        %1244 = vmatpush.msra.mxu0 %v599
        %1245 = vmatpush.msra.mxu0 %v598
        %1246 = vmatpush.msra.mxu0 %v597
        %1247 = vmatpush.msra.mxu0 %v596
        %1248 = vmatpush.msra.mxu0 %v595
        %1249 = vmatpush.msra.mxu0 %v594
        %1250 = vmatpush.msra.mxu0 %v593
        %1251 = vmatpush.msra.mxu0 %v592
        %1252 = vmatpush.msra.mxu0 %v591
        %1253 = vmatmul.f32.gmra.mxu0 %v449
        %v1254 = vpop.f32.mrf.mxu0
        %v1255 = vadd.f32 %v1142, %v1254
        %1256 = vmatmul.f32.gmra.mxu0 %v451
        %v1257 = vpop.f32.mrf.mxu0
        %v1258 = vadd.f32 %v1145, %v1257
        %1259 = vmatmul.f32.gmra.mxu0 %v454
        %v1260 = vpop.f32.mrf.mxu0
        %v1261 = vadd.f32 %v1148, %v1260
        %1262 = vmatmul.f32.gmra.mxu0 %v456
        %v1263 = vpop.f32.mrf.mxu0
        %v1264 = vadd.f32 %v1151, %v1263
        %1265 = vmatmul.f32.gmra.mxu0 %v459
        %v1266 = vpop.f32.mrf.mxu0
        %v1267 = vadd.f32 %v1154, %v1266
        %1268 = vmatmul.f32.gmra.mxu0 %v461
        %v1269 = vpop.f32.mrf.mxu0
        %v1270 = vadd.f32 %v1157, %v1269
        %1271 = vmatmul.f32.gmra.mxu0 %v464
        %v1272 = vpop.f32.mrf.mxu0
        %v1273 = vadd.f32 %v1160, %v1272
        %1274 = vmatmul.f32.gmra.mxu0 %v466
        %v1275 = vpop.f32.mrf.mxu0
        %v1276 = vadd.f32 %v1163, %v1275
        %1277 = vmatmul.f32.gmra.mxu0 %v469
        %v1278 = vpop.f32.mrf.mxu0
        %v1279 = vadd.f32 %v1166, %v1278
        %1280 = vmatmul.f32.gmra.mxu0 %v471
        %v1281 = vpop.f32.mrf.mxu0
        %v1282 = vadd.f32 %v1169, %v1281
        %1283 = vmatmul.f32.gmra.mxu0 %v474
        %v1284 = vpop.f32.mrf.mxu0
        %v1285 = vadd.f32 %v1172, %v1284
        %1286 = vmatmul.f32.gmra.mxu0 %v476
        %v1287 = vpop.f32.mrf.mxu0
        %v1288 = vadd.f32 %v1175, %v1287
        %1289 = vmatmul.f32.gmra.mxu0 %v479
        %v1290 = vpop.f32.mrf.mxu0
        %v1291 = vadd.f32 %v1178, %v1290
        %1292 = vmatmul.f32.gmra.mxu0 %v481
        %v1293 = vpop.f32.mrf.mxu0
        %v1294 = vadd.f32 %v1181, %v1293
        %1295 = vmatmul.f32.gmra.mxu0 %v484
        %v1296 = vpop.f32.mrf.mxu0
        %v1297 = vadd.f32 %v1184, %v1296
        %1298 = vmatmul.f32.gmra.mxu0 %v486
        %v1299 = vpop.f32.mrf.mxu0
        %v1300 = vadd.f32 %v1187, %v1299
        %1301 = vmatmul.f32.gmra.mxu0 %v489
        %v1302 = vpop.f32.mrf.mxu0
        %v1303 = vadd.f32 %v1190, %v1302
        %1304 = vmatmul.f32.gmra.mxu0 %v491
        %v1305 = vpop.f32.mrf.mxu0
        %v1306 = vadd.f32 %v1193, %v1305
        %1307 = vmatmul.f32.gmra.mxu0 %v494
        %v1308 = vpop.f32.mrf.mxu0
        %v1309 = vadd.f32 %v1196, %v1308
        %1310 = vmatmul.f32.gmra.mxu0 %v496
        %v1311 = vpop.f32.mrf.mxu0
        %v1312 = vadd.f32 %v1199, %v1311
        %1313 = vmatmul.f32.gmra.mxu0 %v499
        %v1314 = vpop.f32.mrf.mxu0
        %v1315 = vadd.f32 %v1202, %v1314
        %1316 = vmatmul.f32.gmra.mxu0 %v501
        %v1317 = vpop.f32.mrf.mxu0
        %v1318 = vadd.f32 %v1205, %v1317
        %1319 = vmatmul.f32.gmra.mxu0 %v504
        %v1320 = vpop.f32.mrf.mxu0
        %v1321 = vadd.f32 %v1208, %v1320
        %1322 = vmatmul.f32.gmra.mxu0 %v506
        %v1323 = vpop.f32.mrf.mxu0
        %v1324 = vadd.f32 %v1211, %v1323
        %1325 = vmatmul.f32.gmra.mxu0 %v509
        %v1326 = vpop.f32.mrf.mxu0
        %v1327 = vadd.f32 %v1214, %v1326
        %1328 = vmatmul.f32.gmra.mxu0 %v511
        %v1329 = vpop.f32.mrf.mxu0
        %v1330 = vadd.f32 %v1217, %v1329
        %1331 = vmatmul.f32.gmra.mxu0 %v514
        %v1332 = vpop.f32.mrf.mxu0
        %v1333 = vadd.f32 %v1220, %v1332
        %1334 = vmatmul.f32.gmra.mxu0 %v516
        %v1335 = vpop.f32.mrf.mxu0
        %v1336 = vadd.f32 %v1223, %v1335
        %1337 = vmatmul.f32.gmra.mxu0 %v519
        %v1338 = vpop.f32.mrf.mxu0
        %v1339 = vadd.f32 %v1226, %v1338
        %1340 = vmatmul.f32.gmra.mxu0 %v521
        %v1341 = vpop.f32.mrf.mxu0
        %v1342 = vadd.f32 %v1229, %v1341
        %1343 = vmatmul.f32.gmra.mxu0 %v524
        %v1344 = vpop.f32.mrf.mxu0
        %v1345 = vadd.f32 %v1232, %v1344
        %1346 = vmatmul.f32.gmra.mxu0 %v526
        %v1347 = vpop.f32.mrf.mxu0
        %v1348 = vadd.f32 %v1235, %v1347
        %1349 = vdwg.mxu0
        %v1353 = vrot.slane %v282, 1
        %v1354 = vrot.slane %v283, 1
        %v1355 = vsel %vm333, %v1353, %v1354
        %v1356 = vrot.slane %v284, 1
        %v1357 = vsel %vm333, %v1354, %v1356
        %v1360 = vrot.slane %v282, 2
        %v1361 = vrot.slane %v283, 2
        %v1362 = vsel %vm446, %v1360, %v1361
        %v1363 = vrot.slane %v284, 2
        %v1364 = vsel %vm446, %v1361, %v1363
        %v1367 = vld [vmem:[%s222 + $0x300] sm:$0xff]
        %v1368 = vld [vmem:[%s222 + $0x308] sm:$0xff]
        %v1369 = vld [vmem:[%s222 + $0x310] sm:$0xff]
        %v1370 = vld [vmem:[%s222 + $0x318] sm:$0xff]
        %v1371 = vld [vmem:[%s222 + $0x320] sm:$0xff]
        %v1372 = vld [vmem:[%s222 + $0x328] sm:$0xff]
        %v1373 = vld [vmem:[%s222 + $0x330] sm:$0xff]
        %v1374 = vld [vmem:[%s222 + $0x338] sm:$0xff]
        %v1375 = vld [vmem:[%s222 + $0x340] sm:$0xff]
        %v1376 = vld [vmem:[%s222 + $0x348] sm:$0xff]
        %v1377 = vld [vmem:[%s222 + $0x350] sm:$0xff]
        %v1378 = vld [vmem:[%s222 + $0x358] sm:$0xff]
        %v1379 = vld [vmem:[%s222 + $0x360] sm:$0xff]
        %v1380 = vld [vmem:[%s222 + $0x368] sm:$0xff]
        %v1381 = vld [vmem:[%s222 + $0x370] sm:$0xff]
        %v1382 = vld [vmem:[%s222 + $0x378] sm:$0xff]
        %v1383 = vld [vmem:[%s222 + $0x380] sm:$0xff]
        %v1384 = vld [vmem:[%s222 + $0x388] sm:$0xff]
        %v1385 = vld [vmem:[%s222 + $0x390] sm:$0xff]
        %v1386 = vld [vmem:[%s222 + $0x398] sm:$0xff]
        %v1387 = vld [vmem:[%s222 + $0x3a0] sm:$0xff]
        %v1388 = vld [vmem:[%s222 + $0x3a8] sm:$0xff]
        %v1389 = vld [vmem:[%s222 + $0x3b0] sm:$0xff]
        %v1390 = vld [vmem:[%s222 + $0x3b8] sm:$0xff]
        %v1391 = vld [vmem:[%s222 + $0x3c0] sm:$0xff]
        %v1392 = vld [vmem:[%s222 + $0x3c8] sm:$0xff]
        %v1393 = vld [vmem:[%s222 + $0x3d0] sm:$0xff]
        %v1394 = vld [vmem:[%s222 + $0x3d8] sm:$0xff]
        %v1395 = vld [vmem:[%s222 + $0x3e0] sm:$0xff]
        %v1396 = vld [vmem:[%s222 + $0x3e8] sm:$0xff]
        %v1397 = vld [vmem:[%s222 + $0x3f0] sm:$0xff]
        %v1398 = vld [vmem:[%s222 + $0x3f8] sm:$0xff]
        %v1399 = vld [vmem:[%s222 + $0x400] sm:$0xff]
        %v1400 = vld [vmem:[%s222 + $0x408] sm:$0xff]
        %v1401 = vld [vmem:[%s222 + $0x410] sm:$0xff]
        %v1402 = vld [vmem:[%s222 + $0x418] sm:$0xff]
        %v1403 = vld [vmem:[%s222 + $0x420] sm:$0xff]
        %v1404 = vld [vmem:[%s222 + $0x428] sm:$0xff]
        %v1405 = vld [vmem:[%s222 + $0x430] sm:$0xff]
        %v1406 = vld [vmem:[%s222 + $0x438] sm:$0xff]
        %v1407 = vld [vmem:[%s222 + $0x440] sm:$0xff]
        %v1408 = vld [vmem:[%s222 + $0x448] sm:$0xff]
        %v1409 = vld [vmem:[%s222 + $0x450] sm:$0xff]
        %v1410 = vld [vmem:[%s222 + $0x458] sm:$0xff]
        %v1411 = vld [vmem:[%s222 + $0x460] sm:$0xff]
        %v1412 = vld [vmem:[%s222 + $0x468] sm:$0xff]
        %v1413 = vld [vmem:[%s222 + $0x470] sm:$0xff]
        %v1414 = vld [vmem:[%s222 + $0x478] sm:$0xff]
        %1415 = vmatpush.msra.mxu0 %v1382
        %1416 = vmatpush.msra.mxu0 %v1381
        %1417 = vmatpush.msra.mxu0 %v1380
        %1418 = vmatpush.msra.mxu0 %v1379
        %1419 = vmatpush.msra.mxu0 %v1378
        %1420 = vmatpush.msra.mxu0 %v1377
        %1421 = vmatpush.msra.mxu0 %v1376
        %1422 = vmatpush.msra.mxu0 %v1375
        %1423 = vmatpush.msra.mxu0 %v1374
        %1424 = vmatpush.msra.mxu0 %v1373
        %1425 = vmatpush.msra.mxu0 %v1372
        %1426 = vmatpush.msra.mxu0 %v1371
        %1427 = vmatpush.msra.mxu0 %v1370
        %1428 = vmatpush.msra.mxu0 %v1369
        %1429 = vmatpush.msra.mxu0 %v1368
        %1430 = vmatpush.msra.mxu0 %v1367
        %1431 = vmatmul.f32.gmra.mxu0 %v237
        %v1432 = vpop.f32.mrf.mxu0
        %v1433 = vadd.f32 0.0, %v1432
        %1434 = vmatmul.f32.gmra.mxu0 %v238
        %v1435 = vpop.f32.mrf.mxu0
        %v1436 = vadd.f32 0.0, %v1435
        %1437 = vmatmul.f32.gmra.mxu0 %v240
        %v1438 = vpop.f32.mrf.mxu0
        %v1439 = vadd.f32 0.0, %v1438
        %1440 = vmatmul.f32.gmra.mxu0 %v241
        %v1441 = vpop.f32.mrf.mxu0
        %v1442 = vadd.f32 0.0, %v1441
        %1443 = vmatmul.f32.gmra.mxu0 %v243
        %v1444 = vpop.f32.mrf.mxu0
        %v1445 = vadd.f32 0.0, %v1444
        %1446 = vmatmul.f32.gmra.mxu0 %v244
        %v1447 = vpop.f32.mrf.mxu0
        %v1448 = vadd.f32 0.0, %v1447
        %1449 = vmatmul.f32.gmra.mxu0 %v246
        %v1450 = vpop.f32.mrf.mxu0
        %v1451 = vadd.f32 0.0, %v1450
        %1452 = vmatmul.f32.gmra.mxu0 %v247
        %v1453 = vpop.f32.mrf.mxu0
        %v1454 = vadd.f32 0.0, %v1453
        %1455 = vmatmul.f32.gmra.mxu0 %v249
        %v1456 = vpop.f32.mrf.mxu0
        %v1457 = vadd.f32 0.0, %v1456
        %1458 = vmatmul.f32.gmra.mxu0 %v250
        %v1459 = vpop.f32.mrf.mxu0
        %v1460 = vadd.f32 0.0, %v1459
        %1461 = vmatmul.f32.gmra.mxu0 %v252
        %v1462 = vpop.f32.mrf.mxu0
        %v1463 = vadd.f32 0.0, %v1462
        %1464 = vmatmul.f32.gmra.mxu0 %v253
        %v1465 = vpop.f32.mrf.mxu0
        %v1466 = vadd.f32 0.0, %v1465
        %1467 = vmatmul.f32.gmra.mxu0 %v255
        %v1468 = vpop.f32.mrf.mxu0
        %v1469 = vadd.f32 0.0, %v1468
        %1470 = vmatmul.f32.gmra.mxu0 %v256
        %v1471 = vpop.f32.mrf.mxu0
        %v1472 = vadd.f32 0.0, %v1471
        %1473 = vmatmul.f32.gmra.mxu0 %v258
        %v1474 = vpop.f32.mrf.mxu0
        %v1475 = vadd.f32 0.0, %v1474
        %1476 = vmatmul.f32.gmra.mxu0 %v259
        %v1477 = vpop.f32.mrf.mxu0
        %v1478 = vadd.f32 0.0, %v1477
        %1479 = vmatmul.f32.gmra.mxu0 %v261
        %v1480 = vpop.f32.mrf.mxu0
        %v1481 = vadd.f32 0.0, %v1480
        %1482 = vmatmul.f32.gmra.mxu0 %v262
        %v1483 = vpop.f32.mrf.mxu0
        %v1484 = vadd.f32 0.0, %v1483
        %1485 = vmatmul.f32.gmra.mxu0 %v264
        %v1486 = vpop.f32.mrf.mxu0
        %v1487 = vadd.f32 0.0, %v1486
        %1488 = vmatmul.f32.gmra.mxu0 %v265
        %v1489 = vpop.f32.mrf.mxu0
        %v1490 = vadd.f32 0.0, %v1489
        %1491 = vmatmul.f32.gmra.mxu0 %v267
        %v1492 = vpop.f32.mrf.mxu0
        %v1493 = vadd.f32 0.0, %v1492
        %1494 = vmatmul.f32.gmra.mxu0 %v268
        %v1495 = vpop.f32.mrf.mxu0
        %v1496 = vadd.f32 0.0, %v1495
        %1497 = vmatmul.f32.gmra.mxu0 %v270
        %v1498 = vpop.f32.mrf.mxu0
        %v1499 = vadd.f32 0.0, %v1498
        %1500 = vmatmul.f32.gmra.mxu0 %v271
        %v1501 = vpop.f32.mrf.mxu0
        %v1502 = vadd.f32 0.0, %v1501
        %1503 = vmatmul.f32.gmra.mxu0 %v273
        %v1504 = vpop.f32.mrf.mxu0
        %v1505 = vadd.f32 0.0, %v1504
        %1506 = vmatmul.f32.gmra.mxu0 %v274
        %v1507 = vpop.f32.mrf.mxu0
        %v1508 = vadd.f32 0.0, %v1507
        %1509 = vmatmul.f32.gmra.mxu0 %v276
        %v1510 = vpop.f32.mrf.mxu0
        %v1511 = vadd.f32 0.0, %v1510
        %1512 = vmatmul.f32.gmra.mxu0 %v277
        %v1513 = vpop.f32.mrf.mxu0
        %v1514 = vadd.f32 0.0, %v1513
        %1515 = vmatmul.f32.gmra.mxu0 %v279
        %v1516 = vpop.f32.mrf.mxu0
        %v1517 = vadd.f32 0.0, %v1516
        %1518 = vmatmul.f32.gmra.mxu0 %v280
        %v1519 = vpop.f32.mrf.mxu0
        %v1520 = vadd.f32 0.0, %v1519
        %1521 = vmatmul.f32.gmra.mxu0 %v282
        %v1522 = vpop.f32.mrf.mxu0
        %v1523 = vadd.f32 0.0, %v1522
        %1524 = vmatmul.f32.gmra.mxu0 %v283
        %v1525 = vpop.f32.mrf.mxu0
        %v1526 = vadd.f32 0.0, %v1525
        %1527 = vdwg.mxu0
        %1528 = vmatpush.msra.mxu0 %v1398
        %1529 = vmatpush.msra.mxu0 %v1397
        %1530 = vmatpush.msra.mxu0 %v1396
        %1531 = vmatpush.msra.mxu0 %v1395
        %1532 = vmatpush.msra.mxu0 %v1394
        %1533 = vmatpush.msra.mxu0 %v1393
        %1534 = vmatpush.msra.mxu0 %v1392
        %1535 = vmatpush.msra.mxu0 %v1391
        %1536 = vmatpush.msra.mxu0 %v1390
        %1537 = vmatpush.msra.mxu0 %v1389
        %1538 = vmatpush.msra.mxu0 %v1388
        %1539 = vmatpush.msra.mxu0 %v1387
        %1540 = vmatpush.msra.mxu0 %v1386
        %1541 = vmatpush.msra.mxu0 %v1385
        %1542 = vmatpush.msra.mxu0 %v1384
        %1543 = vmatpush.msra.mxu0 %v1383
        %1544 = vmatmul.f32.gmra.mxu0 %v346
        %v1545 = vpop.f32.mrf.mxu0
        %v1546 = vadd.f32 %v1433, %v1545
        %1547 = vmatmul.f32.gmra.mxu0 %v348
        %v1548 = vpop.f32.mrf.mxu0
        %v1549 = vadd.f32 %v1436, %v1548
        %1550 = vmatmul.f32.gmra.mxu0 %v351
        %v1551 = vpop.f32.mrf.mxu0
        %v1552 = vadd.f32 %v1439, %v1551
        %1553 = vmatmul.f32.gmra.mxu0 %v353
        %v1554 = vpop.f32.mrf.mxu0
        %v1555 = vadd.f32 %v1442, %v1554
        %1556 = vmatmul.f32.gmra.mxu0 %v356
        %v1557 = vpop.f32.mrf.mxu0
        %v1558 = vadd.f32 %v1445, %v1557
        %1559 = vmatmul.f32.gmra.mxu0 %v358
        %v1560 = vpop.f32.mrf.mxu0
        %v1561 = vadd.f32 %v1448, %v1560
        %1562 = vmatmul.f32.gmra.mxu0 %v361
        %v1563 = vpop.f32.mrf.mxu0
        %v1564 = vadd.f32 %v1451, %v1563
        %1565 = vmatmul.f32.gmra.mxu0 %v363
        %v1566 = vpop.f32.mrf.mxu0
        %v1567 = vadd.f32 %v1454, %v1566
        %1568 = vmatmul.f32.gmra.mxu0 %v366
        %v1569 = vpop.f32.mrf.mxu0
        %v1570 = vadd.f32 %v1457, %v1569
        %1571 = vmatmul.f32.gmra.mxu0 %v368
        %v1572 = vpop.f32.mrf.mxu0
        %v1573 = vadd.f32 %v1460, %v1572
        %1574 = vmatmul.f32.gmra.mxu0 %v371
        %v1575 = vpop.f32.mrf.mxu0
        %v1576 = vadd.f32 %v1463, %v1575
        %1577 = vmatmul.f32.gmra.mxu0 %v373
        %v1578 = vpop.f32.mrf.mxu0
        %v1579 = vadd.f32 %v1466, %v1578
        %1580 = vmatmul.f32.gmra.mxu0 %v376
        %v1581 = vpop.f32.mrf.mxu0
        %v1582 = vadd.f32 %v1469, %v1581
        %1583 = vmatmul.f32.gmra.mxu0 %v378
        %v1584 = vpop.f32.mrf.mxu0
        %v1585 = vadd.f32 %v1472, %v1584
        %1586 = vmatmul.f32.gmra.mxu0 %v381
        %v1587 = vpop.f32.mrf.mxu0
        %v1588 = vadd.f32 %v1475, %v1587
        %1589 = vmatmul.f32.gmra.mxu0 %v383
        %v1590 = vpop.f32.mrf.mxu0
        %v1591 = vadd.f32 %v1478, %v1590
        %1592 = vmatmul.f32.gmra.mxu0 %v386
        %v1593 = vpop.f32.mrf.mxu0
        %v1594 = vadd.f32 %v1481, %v1593
        %1595 = vmatmul.f32.gmra.mxu0 %v388
        %v1596 = vpop.f32.mrf.mxu0
        %v1597 = vadd.f32 %v1484, %v1596
        %1598 = vmatmul.f32.gmra.mxu0 %v391
        %v1599 = vpop.f32.mrf.mxu0
        %v1600 = vadd.f32 %v1487, %v1599
        %1601 = vmatmul.f32.gmra.mxu0 %v393
        %v1602 = vpop.f32.mrf.mxu0
        %v1603 = vadd.f32 %v1490, %v1602
        %1604 = vmatmul.f32.gmra.mxu0 %v396
        %v1605 = vpop.f32.mrf.mxu0
        %v1606 = vadd.f32 %v1493, %v1605
        %1607 = vmatmul.f32.gmra.mxu0 %v398
        %v1608 = vpop.f32.mrf.mxu0
        %v1609 = vadd.f32 %v1496, %v1608
        %1610 = vmatmul.f32.gmra.mxu0 %v401
        %v1611 = vpop.f32.mrf.mxu0
        %v1612 = vadd.f32 %v1499, %v1611
        %1613 = vmatmul.f32.gmra.mxu0 %v403
        %v1614 = vpop.f32.mrf.mxu0
        %v1615 = vadd.f32 %v1502, %v1614
        %1616 = vmatmul.f32.gmra.mxu0 %v406
        %v1617 = vpop.f32.mrf.mxu0
        %v1618 = vadd.f32 %v1505, %v1617
        %1619 = vmatmul.f32.gmra.mxu0 %v408
        %v1620 = vpop.f32.mrf.mxu0
        %v1621 = vadd.f32 %v1508, %v1620
        %1622 = vmatmul.f32.gmra.mxu0 %v411
        %v1623 = vpop.f32.mrf.mxu0
        %v1624 = vadd.f32 %v1511, %v1623
        %1625 = vmatmul.f32.gmra.mxu0 %v413
        %v1626 = vpop.f32.mrf.mxu0
        %v1627 = vadd.f32 %v1514, %v1626
        %1628 = vmatmul.f32.gmra.mxu0 %v612
        %v1629 = vpop.f32.mrf.mxu0
        %v1630 = vadd.f32 %v1517, %v1629
        %1631 = vmatmul.f32.gmra.mxu0 %v614
        %v1632 = vpop.f32.mrf.mxu0
        %v1633 = vadd.f32 %v1520, %v1632
        %1634 = vmatmul.f32.gmra.mxu0 %v1355
        %v1635 = vpop.f32.mrf.mxu0
        %v1636 = vadd.f32 %v1523, %v1635
        %1637 = vmatmul.f32.gmra.mxu0 %v1357
        %v1638 = vpop.f32.mrf.mxu0
        %v1639 = vadd.f32 %v1526, %v1638
        %1640 = vdwg.mxu0
        %1641 = vmatpush.msra.mxu0 %v1414
        %1642 = vmatpush.msra.mxu0 %v1413
        %1643 = vmatpush.msra.mxu0 %v1412
        %1644 = vmatpush.msra.mxu0 %v1411
        %1645 = vmatpush.msra.mxu0 %v1410
        %1646 = vmatpush.msra.mxu0 %v1409
        %1647 = vmatpush.msra.mxu0 %v1408
        %1648 = vmatpush.msra.mxu0 %v1407
        %1649 = vmatpush.msra.mxu0 %v1406
        %1650 = vmatpush.msra.mxu0 %v1405
        %1651 = vmatpush.msra.mxu0 %v1404
        %1652 = vmatpush.msra.mxu0 %v1403
        %1653 = vmatpush.msra.mxu0 %v1402
        %1654 = vmatpush.msra.mxu0 %v1401
        %1655 = vmatpush.msra.mxu0 %v1400
        %1656 = vmatpush.msra.mxu0 %v1399
        %1657 = vmatmul.f32.gmra.mxu0 %v459
        %v1658 = vpop.f32.mrf.mxu0
        %v1659 = vadd.f32 %v1546, %v1658
        %1660 = vmatmul.f32.gmra.mxu0 %v461
        %v1661 = vpop.f32.mrf.mxu0
        %v1662 = vadd.f32 %v1549, %v1661
        %1663 = vmatmul.f32.gmra.mxu0 %v464
        %v1664 = vpop.f32.mrf.mxu0
        %v1665 = vadd.f32 %v1552, %v1664
        %1666 = vmatmul.f32.gmra.mxu0 %v466
        %v1667 = vpop.f32.mrf.mxu0
        %v1668 = vadd.f32 %v1555, %v1667
        %1669 = vmatmul.f32.gmra.mxu0 %v469
        %v1670 = vpop.f32.mrf.mxu0
        %v1671 = vadd.f32 %v1558, %v1670
        %1672 = vmatmul.f32.gmra.mxu0 %v471
        %v1673 = vpop.f32.mrf.mxu0
        %v1674 = vadd.f32 %v1561, %v1673
        %1675 = vmatmul.f32.gmra.mxu0 %v474
        %v1676 = vpop.f32.mrf.mxu0
        %v1677 = vadd.f32 %v1564, %v1676
        %1678 = vmatmul.f32.gmra.mxu0 %v476
        %v1679 = vpop.f32.mrf.mxu0
        %v1680 = vadd.f32 %v1567, %v1679
        %1681 = vmatmul.f32.gmra.mxu0 %v479
        %v1682 = vpop.f32.mrf.mxu0
        %v1683 = vadd.f32 %v1570, %v1682
        %1684 = vmatmul.f32.gmra.mxu0 %v481
        %v1685 = vpop.f32.mrf.mxu0
        %v1686 = vadd.f32 %v1573, %v1685
        %1687 = vmatmul.f32.gmra.mxu0 %v484
        %v1688 = vpop.f32.mrf.mxu0
        %v1689 = vadd.f32 %v1576, %v1688
        %1690 = vmatmul.f32.gmra.mxu0 %v486
        %v1691 = vpop.f32.mrf.mxu0
        %v1692 = vadd.f32 %v1579, %v1691
        %1693 = vmatmul.f32.gmra.mxu0 %v489
        %v1694 = vpop.f32.mrf.mxu0
        %v1695 = vadd.f32 %v1582, %v1694
        %1696 = vmatmul.f32.gmra.mxu0 %v491
        %v1697 = vpop.f32.mrf.mxu0
        %v1698 = vadd.f32 %v1585, %v1697
        %1699 = vmatmul.f32.gmra.mxu0 %v494
        %v1700 = vpop.f32.mrf.mxu0
        %v1701 = vadd.f32 %v1588, %v1700
        %1702 = vmatmul.f32.gmra.mxu0 %v496
        %v1703 = vpop.f32.mrf.mxu0
        %v1704 = vadd.f32 %v1591, %v1703
        %1705 = vmatmul.f32.gmra.mxu0 %v499
        %v1706 = vpop.f32.mrf.mxu0
        %v1707 = vadd.f32 %v1594, %v1706
        %1708 = vmatmul.f32.gmra.mxu0 %v501
        %v1709 = vpop.f32.mrf.mxu0
        %v1710 = vadd.f32 %v1597, %v1709
        %1711 = vmatmul.f32.gmra.mxu0 %v504
        %v1712 = vpop.f32.mrf.mxu0
        %v1713 = vadd.f32 %v1600, %v1712
        %1714 = vmatmul.f32.gmra.mxu0 %v506
        %v1715 = vpop.f32.mrf.mxu0
        %v1716 = vadd.f32 %v1603, %v1715
        %1717 = vmatmul.f32.gmra.mxu0 %v509
        %v1718 = vpop.f32.mrf.mxu0
        %v1719 = vadd.f32 %v1606, %v1718
        %1720 = vmatmul.f32.gmra.mxu0 %v511
        %v1721 = vpop.f32.mrf.mxu0
        %v1722 = vadd.f32 %v1609, %v1721
        %1723 = vmatmul.f32.gmra.mxu0 %v514
        %v1724 = vpop.f32.mrf.mxu0
        %v1725 = vadd.f32 %v1612, %v1724
        %1726 = vmatmul.f32.gmra.mxu0 %v516
        %v1727 = vpop.f32.mrf.mxu0
        %v1728 = vadd.f32 %v1615, %v1727
        %1729 = vmatmul.f32.gmra.mxu0 %v519
        %v1730 = vpop.f32.mrf.mxu0
        %v1731 = vadd.f32 %v1618, %v1730
        %1732 = vmatmul.f32.gmra.mxu0 %v521
        %v1733 = vpop.f32.mrf.mxu0
        %v1734 = vadd.f32 %v1621, %v1733
        %1735 = vmatmul.f32.gmra.mxu0 %v524
        %v1736 = vpop.f32.mrf.mxu0
        %v1737 = vadd.f32 %v1624, %v1736
        %1738 = vmatmul.f32.gmra.mxu0 %v526
        %v1739 = vpop.f32.mrf.mxu0
        %v1740 = vadd.f32 %v1627, %v1739
        %1741 = vmatmul.f32.gmra.mxu0 %v619
        %v1742 = vpop.f32.mrf.mxu0
        %v1743 = vadd.f32 %v1630, %v1742
        %1744 = vmatmul.f32.gmra.mxu0 %v621
        %v1745 = vpop.f32.mrf.mxu0
        %v1746 = vadd.f32 %v1633, %v1745
        %1747 = vmatmul.f32.gmra.mxu0 %v1362
        %v1748 = vpop.f32.mrf.mxu0
        %v1749 = vadd.f32 %v1636, %v1748
        %1750 = vmatmul.f32.gmra.mxu0 %v1364
        %v1751 = vpop.f32.mrf.mxu0
        %v1752 = vadd.f32 %v1639, %v1751
        %1753 = vdwg.mxu0
        %v1754 = vadd.f32 %v1255, %v1659
        %v1755 = vadd.f32 %v1258, %v1662
        %v1756 = vadd.f32 %v1261, %v1665
        %v1757 = vadd.f32 %v1264, %v1668
        %v1758 = vadd.f32 %v1267, %v1671
        %v1759 = vadd.f32 %v1270, %v1674
        %v1760 = vadd.f32 %v1273, %v1677
        %v1761 = vadd.f32 %v1276, %v1680
        %v1762 = vadd.f32 %v1279, %v1683
        %v1763 = vadd.f32 %v1282, %v1686
        %v1764 = vadd.f32 %v1285, %v1689
        %v1765 = vadd.f32 %v1288, %v1692
        %v1766 = vadd.f32 %v1291, %v1695
        %v1767 = vadd.f32 %v1294, %v1698
        %v1768 = vadd.f32 %v1297, %v1701
        %v1769 = vadd.f32 %v1300, %v1704
        %v1770 = vadd.f32 %v1303, %v1707
        %v1771 = vadd.f32 %v1306, %v1710
        %v1772 = vadd.f32 %v1309, %v1713
        %v1773 = vadd.f32 %v1312, %v1716
        %v1774 = vadd.f32 %v1315, %v1719
        %v1775 = vadd.f32 %v1318, %v1722
        %v1776 = vadd.f32 %v1321, %v1725
        %v1777 = vadd.f32 %v1324, %v1728
        %v1778 = vadd.f32 %v1327, %v1731
        %v1779 = vadd.f32 %v1330, %v1734
        %v1780 = vadd.f32 %v1333, %v1737
        %v1781 = vadd.f32 %v1336, %v1740
        %v1782 = vadd.f32 %v1339, %v1743
        %v1783 = vadd.f32 %v1342, %v1746
        %v1784 = vadd.f32 %v1345, %v1749
        %v1785 = vadd.f32 %v1348, %v1752
        %v1786 = vadd.f32 %v1754, %v1755
        %v1787 = vadd.f32 %v1786, %v1756
        %v1788 = vadd.f32 %v1787, %v1757
        %v1789 = vadd.f32 %v1788, %v1758
        %v1790 = vadd.f32 %v1789, %v1759
        %v1791 = vadd.f32 %v1790, %v1760
        %v1792 = vadd.f32 %v1791, %v1761
        %v1793 = vadd.f32 %v1792, %v1762
        %v1794 = vadd.f32 %v1793, %v1763
        %v1795 = vadd.f32 %v1794, %v1764
        %v1796 = vadd.f32 %v1795, %v1765
        %v1797 = vadd.f32 %v1796, %v1766
        %v1798 = vadd.f32 %v1797, %v1767
        %v1799 = vadd.f32 %v1798, %v1768
        %v1800 = vadd.f32 %v1799, %v1769
        %v1801 = vadd.f32 %v1800, %v1770
        %v1802 = vadd.f32 %v1801, %v1771
        %v1803 = vadd.f32 %v1802, %v1772
        %v1804 = vadd.f32 %v1803, %v1773
        %v1805 = vadd.f32 %v1804, %v1774
        %v1806 = vadd.f32 %v1805, %v1775
        %v1807 = vadd.f32 %v1806, %v1776
        %v1808 = vadd.f32 %v1807, %v1777
        %v1809 = vadd.f32 %v1808, %v1778
        %v1810 = vadd.f32 %v1809, %v1779
        %v1811 = vadd.f32 %v1810, %v1780
        %v1812 = vadd.f32 %v1811, %v1781
        %v1813 = vadd.f32 %v1812, %v1782
        %v1814 = vadd.f32 %v1813, %v1783
        %v1815 = vadd.f32 %v1814, %v1784
        %v1816 = vadd.f32 %v1815, %v1785
        %v1817 = vrot.slane %v1816, 4
        %v1818 = vadd.f32 %v1816, %v1817
        %v1819 = vrot.slane %v1818, 2
        %v1820 = vadd.f32 %v1818, %v1819
        %v1821 = vrot.slane %v1820, 1
        %v1822 = vadd.f32 %v1820, %v1821
        %v1823 = vrcp.pop 256.0
        %v1824 = vmul.f32 256.0, %v1823
        %v1825 = vsub.f32 1.0, %v1824
        %v1826 = vmul.f32 %v1823, %v1825
        %v1827 = vadd.f32 %v1823, %v1826
        %vm1828 = vweird.f32 %v1823
        %v1829 = vsel %vm1828, %v1823, %v1827
        %v1830 = vmul.f32 %v1822, %v1829
        %v1831 = vsub.f32 %v1754, %v1830
        %v1832 = vsub.f32 %v1755, %v1830
        %v1833 = vsub.f32 %v1756, %v1830
        %v1834 = vsub.f32 %v1757, %v1830
        %v1835 = vsub.f32 %v1758, %v1830
        %v1836 = vsub.f32 %v1759, %v1830
        %v1837 = vsub.f32 %v1760, %v1830
        %v1838 = vsub.f32 %v1761, %v1830
        %v1839 = vsub.f32 %v1762, %v1830
        %v1840 = vsub.f32 %v1763, %v1830
        %v1841 = vsub.f32 %v1764, %v1830
        %v1842 = vsub.f32 %v1765, %v1830
        %v1843 = vsub.f32 %v1766, %v1830
        %v1844 = vsub.f32 %v1767, %v1830
        %v1845 = vsub.f32 %v1768, %v1830
        %v1846 = vsub.f32 %v1769, %v1830
        %v1847 = vsub.f32 %v1770, %v1830
        %v1848 = vsub.f32 %v1771, %v1830
        %v1849 = vsub.f32 %v1772, %v1830
        %v1850 = vsub.f32 %v1773, %v1830
        %v1851 = vsub.f32 %v1774, %v1830
        %v1852 = vsub.f32 %v1775, %v1830
        %v1853 = vsub.f32 %v1776, %v1830
        %v1854 = vsub.f32 %v1777, %v1830
        %v1855 = vsub.f32 %v1778, %v1830
        %v1856 = vsub.f32 %v1779, %v1830
        %v1857 = vsub.f32 %v1780, %v1830
        %v1858 = vsub.f32 %v1781, %v1830
        %v1859 = vsub.f32 %v1782, %v1830
        %v1860 = vsub.f32 %v1783, %v1830
        %v1861 = vsub.f32 %v1784, %v1830
        %v1862 = vsub.f32 %v1785, %v1830
        %v1863 = vmul.f32 %v1831, %v1831
        %v1864 = vmul.f32 %v1832, %v1832
        %v1865 = vmul.f32 %v1833, %v1833
        %v1866 = vmul.f32 %v1834, %v1834
        %v1867 = vmul.f32 %v1835, %v1835
        %v1868 = vmul.f32 %v1836, %v1836
        %v1869 = vmul.f32 %v1837, %v1837
        %v1870 = vmul.f32 %v1838, %v1838
        %v1871 = vmul.f32 %v1839, %v1839
        %v1872 = vmul.f32 %v1840, %v1840
        %v1873 = vmul.f32 %v1841, %v1841
        %v1874 = vmul.f32 %v1842, %v1842
        %v1875 = vmul.f32 %v1843, %v1843
        %v1876 = vmul.f32 %v1844, %v1844
        %v1877 = vmul.f32 %v1845, %v1845
        %v1878 = vmul.f32 %v1846, %v1846
        %v1879 = vmul.f32 %v1847, %v1847
        %v1880 = vmul.f32 %v1848, %v1848
        %v1881 = vmul.f32 %v1849, %v1849
        %v1882 = vmul.f32 %v1850, %v1850
        %v1883 = vmul.f32 %v1851, %v1851
        %v1884 = vmul.f32 %v1852, %v1852
        %v1885 = vmul.f32 %v1853, %v1853
        %v1886 = vmul.f32 %v1854, %v1854
        %v1887 = vmul.f32 %v1855, %v1855
        %v1888 = vmul.f32 %v1856, %v1856
        %v1889 = vmul.f32 %v1857, %v1857
        %v1890 = vmul.f32 %v1858, %v1858
        %v1891 = vmul.f32 %v1859, %v1859
        %v1892 = vmul.f32 %v1860, %v1860
        %v1893 = vmul.f32 %v1861, %v1861
        %v1894 = vmul.f32 %v1862, %v1862
        %v1895 = vadd.f32 %v1863, %v1864
        %v1896 = vadd.f32 %v1895, %v1865
        %v1897 = vadd.f32 %v1896, %v1866
        %v1898 = vadd.f32 %v1897, %v1867
        %v1899 = vadd.f32 %v1898, %v1868
        %v1900 = vadd.f32 %v1899, %v1869
        %v1901 = vadd.f32 %v1900, %v1870
        %v1902 = vadd.f32 %v1901, %v1871
        %v1903 = vadd.f32 %v1902, %v1872
        %v1904 = vadd.f32 %v1903, %v1873
        %v1905 = vadd.f32 %v1904, %v1874
        %v1906 = vadd.f32 %v1905, %v1875
        %v1907 = vadd.f32 %v1906, %v1876
        %v1908 = vadd.f32 %v1907, %v1877
        %v1909 = vadd.f32 %v1908, %v1878
        %v1910 = vadd.f32 %v1909, %v1879
        %v1911 = vadd.f32 %v1910, %v1880
        %v1912 = vadd.f32 %v1911, %v1881
        %v1913 = vadd.f32 %v1912, %v1882
        %v1914 = vadd.f32 %v1913, %v1883
        %v1915 = vadd.f32 %v1914, %v1884
        %v1916 = vadd.f32 %v1915, %v1885
        %v1917 = vadd.f32 %v1916, %v1886
        %v1918 = vadd.f32 %v1917, %v1887
        %v1919 = vadd.f32 %v1918, %v1888
        %v1920 = vadd.f32 %v1919, %v1889
        %v1921 = vadd.f32 %v1920, %v1890
        %v1922 = vadd.f32 %v1921, %v1891
        %v1923 = vadd.f32 %v1922, %v1892
        %v1924 = vadd.f32 %v1923, %v1893
        %v1925 = vadd.f32 %v1924, %v1894
        %v1926 = vrot.slane %v1925, 4
        %v1927 = vadd.f32 %v1925, %v1926
        %v1928 = vrot.slane %v1927, 2
        %v1929 = vadd.f32 %v1927, %v1928
        %v1930 = vrot.slane %v1929, 1
        %v1931 = vadd.f32 %v1929, %v1930
        %v1932 = vmul.f32 %v1931, %v1829
        %v1933 = vadd.f32 %v1932, 1e-05
        %v1934 = vrsqrt.pop %v1933
        %v1935 = vmul.f32 %v1934, %v1933
        %v1936 = vmul.f32 %v1935, %v1934
        %v1937 = vmul.f32 0.5, %v1936
        %v1938 = vsub.f32 1.5, %v1937
        %v1939 = vmul.f32 %v1934, %v1938
        %vm1940 = vweird.f32 %v1933
        %vm1941 = vweird.f32 %v1934
        %vm1942 = vmor %vm1940, %vm1941
        %v1943 = vsel %vm1942, %v1934, %v1939
        %v1944 = vmul.f32 %v1831, %v1943
        %v1945 = vmul.f32 %v1832, %v1943
        %v1946 = vmul.f32 %v1833, %v1943
        %v1947 = vmul.f32 %v1834, %v1943
        %v1948 = vmul.f32 %v1835, %v1943
        %v1949 = vmul.f32 %v1836, %v1943
        %v1950 = vmul.f32 %v1837, %v1943
        %v1951 = vmul.f32 %v1838, %v1943
        %v1952 = vmul.f32 %v1839, %v1943
        %v1953 = vmul.f32 %v1840, %v1943
        %v1954 = vmul.f32 %v1841, %v1943
        %v1955 = vmul.f32 %v1842, %v1943
        %v1956 = vmul.f32 %v1843, %v1943
        %v1957 = vmul.f32 %v1844, %v1943
        %v1958 = vmul.f32 %v1845, %v1943
        %v1959 = vmul.f32 %v1846, %v1943
        %v1960 = vmul.f32 %v1847, %v1943
        %v1961 = vmul.f32 %v1848, %v1943
        %v1962 = vmul.f32 %v1849, %v1943
        %v1963 = vmul.f32 %v1850, %v1943
        %v1964 = vmul.f32 %v1851, %v1943
        %v1965 = vmul.f32 %v1852, %v1943
        %v1966 = vmul.f32 %v1853, %v1943
        %v1967 = vmul.f32 %v1854, %v1943
        %v1968 = vmul.f32 %v1855, %v1943
        %v1969 = vmul.f32 %v1856, %v1943
        %v1970 = vmul.f32 %v1857, %v1943
        %v1971 = vmul.f32 %v1858, %v1943
        %v1972 = vmul.f32 %v1859, %v1943
        %v1973 = vmul.f32 %v1860, %v1943
        %v1974 = vmul.f32 %v1861, %v1943
        %v1975 = vmul.f32 %v1862, %v1943
        %v1976 = vld [vmem:[%s230] sm:$0xff]
        %v1977 = vld [vmem:[%s230 + $0x8] sm:$0xff]
        %v1978 = vld [vmem:[%s230 + $0x10] sm:$0xff]
        %v1979 = vld [vmem:[%s230 + $0x18] sm:$0xff]
        %v1980 = vld [vmem:[%s230 + $0x20] sm:$0xff]
        %v1981 = vld [vmem:[%s230 + $0x28] sm:$0xff]
        %v1982 = vld [vmem:[%s230 + $0x30] sm:$0xff]
        %v1983 = vld [vmem:[%s230 + $0x38] sm:$0xff]
        %v1984 = vld [vmem:[%s230 + $0x40] sm:$0xff]
        %v1985 = vld [vmem:[%s230 + $0x48] sm:$0xff]
        %v1986 = vld [vmem:[%s230 + $0x50] sm:$0xff]
        %v1987 = vld [vmem:[%s230 + $0x58] sm:$0xff]
        %v1988 = vld [vmem:[%s230 + $0x60] sm:$0xff]
        %v1989 = vld [vmem:[%s230 + $0x68] sm:$0xff]
        %v1990 = vld [vmem:[%s230 + $0x70] sm:$0xff]
        %v1991 = vld [vmem:[%s230 + $0x78] sm:$0xff]
        %v1992 = vld [vmem:[%s230 + $0x80] sm:$0xff]
        %v1993 = vld [vmem:[%s230 + $0x88] sm:$0xff]
        %v1994 = vld [vmem:[%s230 + $0x90] sm:$0xff]
        %v1995 = vld [vmem:[%s230 + $0x98] sm:$0xff]
        %v1996 = vld [vmem:[%s230 + $0xa0] sm:$0xff]
        %v1997 = vld [vmem:[%s230 + $0xa8] sm:$0xff]
        %v1998 = vld [vmem:[%s230 + $0xb0] sm:$0xff]
        %v1999 = vld [vmem:[%s230 + $0xb8] sm:$0xff]
        %v2000 = vld [vmem:[%s230 + $0xc0] sm:$0xff]
        %v2001 = vld [vmem:[%s230 + $0xc8] sm:$0xff]
        %v2002 = vld [vmem:[%s230 + $0xd0] sm:$0xff]
        %v2003 = vld [vmem:[%s230 + $0xd8] sm:$0xff]
        %v2004 = vld [vmem:[%s230 + $0xe0] sm:$0xff]
        %v2005 = vld [vmem:[%s230 + $0xe8] sm:$0xff]
        %v2006 = vld [vmem:[%s230 + $0xf0] sm:$0xff]
        %v2007 = vld [vmem:[%s230 + $0xf8] sm:$0xff]
        %v2008 = vadd.f32 %v1944, %v1976
        %v2009 = vadd.f32 %v1945, %v1977
        %v2010 = vadd.f32 %v1946, %v1978
        %v2011 = vadd.f32 %v1947, %v1979
        %v2012 = vadd.f32 %v1948, %v1980
        %v2013 = vadd.f32 %v1949, %v1981
        %v2014 = vadd.f32 %v1950, %v1982
        %v2015 = vadd.f32 %v1951, %v1983
        %v2016 = vadd.f32 %v1952, %v1984
        %v2017 = vadd.f32 %v1953, %v1985
        %v2018 = vadd.f32 %v1954, %v1986
        %v2019 = vadd.f32 %v1955, %v1987
        %v2020 = vadd.f32 %v1956, %v1988
        %v2021 = vadd.f32 %v1957, %v1989
        %v2022 = vadd.f32 %v1958, %v1990
        %v2023 = vadd.f32 %v1959, %v1991
        %v2024 = vadd.f32 %v1960, %v1992
        %v2025 = vadd.f32 %v1961, %v1993
        %v2026 = vadd.f32 %v1962, %v1994
        %v2027 = vadd.f32 %v1963, %v1995
        %v2028 = vadd.f32 %v1964, %v1996
        %v2029 = vadd.f32 %v1965, %v1997
        %v2030 = vadd.f32 %v1966, %v1998
        %v2031 = vadd.f32 %v1967, %v1999
        %v2032 = vadd.f32 %v1968, %v2000
        %v2033 = vadd.f32 %v1969, %v2001
        %v2034 = vadd.f32 %v1970, %v2002
        %v2035 = vadd.f32 %v1971, %v2003
        %v2036 = vadd.f32 %v1972, %v2004
        %v2037 = vadd.f32 %v1973, %v2005
        %v2038 = vadd.f32 %v1974, %v2006
        %v2039 = vadd.f32 %v1975, %v2007
        %2040 = vst [vmem:[%s213] sm:$0xff] %v2008
        %2041 = vst [vmem:[%s213 + $0x8] sm:$0xff] %v2009
        %2042 = vst [vmem:[%s213 + $0x10] sm:$0xff] %v2010
        %2043 = vst [vmem:[%s213 + $0x18] sm:$0xff] %v2011
        %2044 = vst [vmem:[%s213 + $0x20] sm:$0xff] %v2012
        %2045 = vst [vmem:[%s213 + $0x28] sm:$0xff] %v2013
        %2046 = vst [vmem:[%s213 + $0x30] sm:$0xff] %v2014
        %2047 = vst [vmem:[%s213 + $0x38] sm:$0xff] %v2015
        %2048 = vst [vmem:[%s213 + $0x40] sm:$0xff] %v2016
        %2049 = vst [vmem:[%s213 + $0x48] sm:$0xff] %v2017
        %2050 = vst [vmem:[%s213 + $0x50] sm:$0xff] %v2018
        %2051 = vst [vmem:[%s213 + $0x58] sm:$0xff] %v2019
        %2052 = vst [vmem:[%s213 + $0x60] sm:$0xff] %v2020
        %2053 = vst [vmem:[%s213 + $0x68] sm:$0xff] %v2021
        %2054 = vst [vmem:[%s213 + $0x70] sm:$0xff] %v2022
        %2055 = vst [vmem:[%s213 + $0x78] sm:$0xff] %v2023
        %2056 = vst [vmem:[%s213 + $0x80] sm:$0xff] %v2024
        %2057 = vst [vmem:[%s213 + $0x88] sm:$0xff] %v2025
        %2058 = vst [vmem:[%s213 + $0x90] sm:$0xff] %v2026
        %2059 = vst [vmem:[%s213 + $0x98] sm:$0xff] %v2027
        %2060 = vst [vmem:[%s213 + $0xa0] sm:$0xff] %v2028
        %2061 = vst [vmem:[%s213 + $0xa8] sm:$0xff] %v2029
        %2062 = vst [vmem:[%s213 + $0xb0] sm:$0xff] %v2030
        %2063 = vst [vmem:[%s213 + $0xb8] sm:$0xff] %v2031
        %2064 = vst [vmem:[%s213 + $0xc0] sm:$0xff] %v2032
        %2065 = vst [vmem:[%s213 + $0xc8] sm:$0xff] %v2033
        %2066 = vst [vmem:[%s213 + $0xd0] sm:$0xff] %v2034
        %2067 = vst [vmem:[%s213 + $0xd8] sm:$0xff] %v2035
        %2068 = vst [vmem:[%s213 + $0xe0] sm:$0xff] %v2036
        %2069 = vst [vmem:[%s213 + $0xe8] sm:$0xff] %v2037
        %2070 = vst [vmem:[%s213 + $0xf0] sm:$0xff] %v2038
        %2071 = vst [vmem:[%s213 + $0xf8] sm:$0xff] %v2039
        %s2072 = sand.u32 %s119, 1
        %s2073 = scalar_lea.sflag [#allocation3], %s2072
        %s2074 = sand.u32 %s119, 1
        %s2075 = smul.addr %s2074, 256
        %s2076 = scalar_lea.vmem [#allocation2], %s2075
        // Predicated region
        $region33: #{resnet_block_forward.3} parent=31 // pred_check
          %p2077 = pneg %p129
        $region34: #{resnet_block_forward.3} parent=31 // pred_check_branch
          %2079 = sbr.rel (%p2077) target = $region36
        $region35: #{resnet_block_forward.3} parent=31 // pred_region
          %2081 = vsyncadd %s2073, 0
          %s2082 = smul.addr %s21, 32
          %s2083 = sadd.s32 %s22, %s2082
          %s2084 = smul.addr %s2083, 8
          %s2085 = scalar_lea.hbm %s3, %s2084
          %s2086 = sshll.u32 %s2076, 4
          %s2087 = int_to_ptr.vmem [resolvable:$true] %s2086
          %s2088 = sshll.u32 %s2085, 4
          %s2089 = int_to_ptr.hbm [resolvable:$true] %s2088
          %2094 = dma.vmem_to_hbm [thread:$0]  %s2087, 4096, %s2089, %s2073, 128, 128, 8
        $region36: #{resnet_block_forward.3} parent=31 // pred_fallthru
          _
      $region32: #{resnet_block_forward.3} parent=5 // pred_fallthru
        _
      %p2095 = scmp.le.s32.totalorder 2, %s12
      // Predicated region
      $region37: #{resnet_block_forward.3} parent=5 // pred_check
        %p2096 = pneg %p2095
      $region38: #{resnet_block_forward.3} parent=5 // pred_check_branch
        %2098 = sbr.rel (%p2096) target = $region40
      $region39: #{resnet_block_forward.3} parent=5 // pred_region
        %s2099 = ssub.s32 %s12, 2
        // Predicated region
        $region41: #{resnet_block_forward.3} parent=39 // pred_check
          %p2100 = pneg %p135
        $region42: #{resnet_block_forward.3} parent=39 // pred_check_branch
          %2102 = sbr.rel (%p2100) target = $region44
        $region43: #{resnet_block_forward.3} parent=39 // pred_region
          %s2103 = sand.u32 %s120, 1
          %s2104 = scalar_lea.sflag [#allocation3], %s2103
          %s2105 = sand.u32 %s120, 1
          %s2106 = smul.addr %s2105, 256
          %s2107 = scalar_lea.vmem [#allocation2], %s2106
          %2109 = dma.done %s2104, 4096
        $region44: #{resnet_block_forward.3} parent=39 // pred_fallthru
          _
      $region40: #{resnet_block_forward.3} parent=5 // pred_fallthru
        _
    $region6: #{resnet_block_forward.3} parent=1 // loop_footer
      %s16 = sadd.s32 1, %s12
    $region7: #{resnet_block_forward.3} parent=1 // loop_footer_branch
      %11 = sbr.rel target = $region3
    $region8: #{resnet_block_forward.3} parent=1 // loop_exit
      _
    %2110 = vsyncpa [#allocation3], 1
    %s2111 = scalar_lea.sflag [#allocation3], 1
    %2112 = vsyncpa %s2111, 1

// kernel: resnet_block_forward.2
$region0: #{resnet_block_forward.2}
  #allocation0 [shape = 'u32[]', space=smem, size = 0x4, offset = 0x4, fixed_abs, tag = 'smem constant byte address 0x4 - core index']
  #allocation1 [shape = 'u32[72,128]{1,0:T(1,128)}', space=vmem, size = 0x9000, scoped, tag = 'internal scratch']
  %s0 = inlined_call_operand.vmem [shape: f32[2,20,20,128], index: 0, kind: input, shape index: {}]
  %s1 = inlined_call_operand.vmem [shape: f32[1152,128], index: 1, kind: input, shape index: {}]
  %s2 = inlined_call_operand.vmem [shape: f32[2,18,18,128], index: 2, kind: output, shape index: {}]
  %s3 = sld [smem:[#allocation0]]
  $region41: #{resnet_block_forward.2} parent=0
    _
  %s5 = ssub.s32 1, %s3
  %s6 = scalar_select 0, %s5, %s3
  loop: start=0, step=1, limit=4
  $region2: #{resnet_block_forward.2} parent=0 // loop_pre_header
    _
  $region3: #{resnet_block_forward.2} parent=0 // loop_header
    %s8 = sphi 0, %s12
    %p9 = scmp.ge.s32.totalorder %s8, 4
    %s15 = sphi 0, %s27
    %s16 = sphi 0, %s23
    %s17 = sphi 0, %s15
    %s18 = sphi 0, %s16
    %s19 = sphi 0, %s17
    %s20 = sphi 0, %s18
    %s30 = sphi 0, %s32
    %s33 = sphi 0, %s30
    %s34 = sphi 0, %s33
    %s50 = sphi 0, %s34
    %s56 = sphi 0, %s58
    %s59 = sphi 0, %s56
    %s60 = sphi 0, %s59
    %s76 = sphi 0, %s60
    %s84 = sphi 0, %s86
    %s87 = sphi 0, %s84
    %s88 = sphi 0, %s87
    %s104 = sphi 0, %s88
  $region4: #{resnet_block_forward.2} parent=0 // loop_header_branch
    %11 = sbr.rel (%p9) target = $region8
  $region5: #{resnet_block_forward.2} parent=0 // loop_body
    %s13 = ssub.s32 %s8, 1
    %s14 = ssub.s32 %s8, 2
    %s21 = sadd.s32 1, %s16
    %p22 = scmp.ge.s32.totalorder %s21, 1
    %s23 = scalar_select %p22, 0, %s21
    %s24 = sadd.s32 1, %s15
    %s25 = scalar_select %p22, %s24, %s15
    %p26 = scmp.ge.s32.totalorder %s25, 2
    %s27 = scalar_select %p26, 0, %s25
    %s28 = ssub.s32 %s15, %s27
    %p29 = scmp.eq.s32.totalorder %s28, 0
    %s31 = sadd.s32 %s30, 1
    %s32 = scalar_select %p29, %s30, %s31
    %p35 = pneg %p29
    %p36 = scmp.eq.s32.totalorder %s8, 1
    %p37 = por %p35, %p36
    %p38 = scmp.ne.s32.totalorder %s30, %s33
    %p39 = scmp.eq.s32.totalorder %s8, 0
    %p40 = por %p38, %p39
    %p41 = scmp.ne.s32.totalorder %s30, %s33
    %p42 = scmp.eq.s32.totalorder %s13, 1
    %p43 = por %p41, %p42
    %p44 = scmp.ne.s32.totalorder %s33, %s34
    %p45 = scmp.eq.s32.totalorder %s13, 0
    %p46 = por %p44, %p45
    %p47 = scmp.ne.s32.totalorder %s33, %s34
    %p48 = scmp.eq.s32.totalorder %s14, 1
    %p49 = por %p47, %p48
    %p51 = scmp.ne.s32.totalorder %s34, %s50
    %p52 = scmp.eq.s32.totalorder %s14, 0
    %p53 = por %p51, %p52
    %s54 = ssub.s32 %s16, %s23
    %p55 = scmp.eq.s32.totalorder %s54, 0
    %s57 = sadd.s32 %s56, 1
    %s58 = scalar_select %p55, %s56, %s57
    %p61 = pneg %p55
    %p62 = scmp.eq.s32.totalorder %s8, 1
    %p63 = por %p61, %p62
    %p64 = scmp.ne.s32.totalorder %s56, %s59
    %p65 = scmp.eq.s32.totalorder %s8, 0
    %p66 = por %p64, %p65
    %p67 = scmp.ne.s32.totalorder %s56, %s59
    %p68 = scmp.eq.s32.totalorder %s13, 1
    %p69 = por %p67, %p68
    %p70 = scmp.ne.s32.totalorder %s59, %s60
    %p71 = scmp.eq.s32.totalorder %s13, 0
    %p72 = por %p70, %p71
    %p73 = scmp.ne.s32.totalorder %s59, %s60
    %p74 = scmp.eq.s32.totalorder %s14, 1
    %p75 = por %p73, %p74
    %p77 = scmp.ne.s32.totalorder %s60, %s76
    %p78 = scmp.eq.s32.totalorder %s14, 0
    %p79 = por %p77, %p78
    %s80 = ssub.s32 %s15, %s27
    %s81 = ssub.s32 %s16, %s23
    %s82 = sor.u32 %s80, %s81
    %p83 = scmp.eq.s32.totalorder %s82, 0
    %s85 = sadd.s32 %s84, 1
    %s86 = scalar_select %p83, %s84, %s85
    %p89 = pneg %p83
    %p90 = scmp.eq.s32.totalorder %s8, 1
    %p91 = por %p89, %p90
    %p92 = scmp.ne.s32.totalorder %s84, %s87
    %p93 = scmp.eq.s32.totalorder %s8, 0
    %p94 = por %p92, %p93
    %p95 = scmp.ne.s32.totalorder %s84, %s87
    %p96 = scmp.eq.s32.totalorder %s13, 1
    %p97 = por %p95, %p96
    %p98 = scmp.ne.s32.totalorder %s87, %s88
    %p99 = scmp.eq.s32.totalorder %s13, 0
    %p100 = por %p98, %p99
    %p101 = scmp.ne.s32.totalorder %s87, %s88
    %p102 = scmp.eq.s32.totalorder %s14, 1
    %p103 = por %p101, %p102
    %p105 = scmp.ne.s32.totalorder %s88, %s104
    %p106 = scmp.eq.s32.totalorder %s14, 0
    %p107 = por %p105, %p106
    %p108 = scmp.le.s32.totalorder 1, %s8
    %p109 = scmp.lt.s32.totalorder %s8, 3
    %p110 = pnand %p108, %p109
    %p111 = pneg %p110
    // Predicated region
    $region9: #{resnet_block_forward.2} parent=5 // pred_check
      _
    $region10: #{resnet_block_forward.2} parent=5 // pred_check_branch
      %113 = sbr.rel (%p110) target = $region12
    $region11: #{resnet_block_forward.2} parent=5 // pred_region
      %s114 = ssub.s32 %s8, 1
      // Predicated region
      $region13: #{resnet_block_forward.2} parent=11 // pred_check
        %p115 = pneg %p72
      $region14: #{resnet_block_forward.2} parent=11 // pred_check_branch
        %117 = sbr.rel (%p115) target = $region16
      $region15: #{resnet_block_forward.2} parent=11 // pred_region
        %p118 = scmp.lt.s32.totalorder %s18, 0
        %s119 = scalar_select %p118, %s18, 0
        %s120 = smul.addr %s119, 8
        %s121 = scalar_lea.vmem %s1, %s120
      $region16: #{resnet_block_forward.2} parent=11 // pred_fallthru
        _
    $region12: #{resnet_block_forward.2} parent=5 // pred_fallthru
      _
    %p122 = scmp.lt.s32.totalorder %s8, 2
    // Predicated region
    $region17: #{resnet_block_forward.2} parent=5 // pred_check
      %p123 = pneg %p122
    $region18: #{resnet_block_forward.2} parent=5 // pred_check_branch
      %125 = sbr.rel (%p123) target = $region20
    $region19: #{resnet_block_forward.2} parent=5 // pred_region
      // Predicated region
      $region21: #{resnet_block_forward.2} parent=19 // pred_check
        %p126 = pneg %p40
      $region22: #{resnet_block_forward.2} parent=19 // pred_check_branch
        %128 = sbr.rel (%p126) target = $region24
      $region23: #{resnet_block_forward.2} parent=19 // pred_region
        %p129 = scmp.lt.s32.totalorder %s15, 1
        %s130 = scalar_select %p129, %s15, 1
        %s131 = smul.addr %s130, 60
        %s132 = smul.addr %s131, 8
        %s133 = scalar_lea.vmem %s0, %s132
      $region24: #{resnet_block_forward.2} parent=19 // pred_fallthru
        _
    $region20: #{resnet_block_forward.2} parent=5 // pred_fallthru
      _
    %p134 = scmp.le.s32.totalorder 1, %s8
    %p135 = scmp.lt.s32.totalorder %s8, 3
    %p136 = pnand %p134, %p135
    %p137 = pneg %p136
    // Predicated region
    $region25: #{resnet_block_forward.2} parent=5 // pred_check
      _
    $region26: #{resnet_block_forward.2} parent=5 // pred_check_branch
      %139 = sbr.rel (%p136) target = $region28
    $region27: #{resnet_block_forward.2} parent=5 // pred_region
      %s140 = ssub.s32 %s8, 1
      %p141 = scmp.lt.s32.totalorder %s17, 1
      %s142 = scalar_select %p141, %s17, 1
      %s143 = smul.addr %s142, 60
      %s144 = smul.addr %s143, 8
      %s145 = scalar_lea.vmem %s0, %s144
      %p146 = pneg %p46
      %p147 = pneg %p43
      %p148 = scmp.lt.s32.totalorder %s18, 0
      %s149 = scalar_select %p148, %s18, 0
      %s150 = smul.addr %s149, 8
      %s151 = scalar_lea.vmem %s1, %s150
      %p152 = pneg %p72
      %p153 = pneg %p69
      %p154 = pneg %p100
      %p155 = pneg %p97
      %p156 = scmp.lt.s32.totalorder %s17, 1
      %s157 = scalar_select %p156, %s17, 1
      %p158 = scmp.lt.s32.totalorder %s18, 0
      %s159 = scalar_select %p158, %s18, 0
      %s160 = smul.addr %s157, 54
      %s161 = sadd.s32 %s159, %s160
      %s162 = smul.addr %s161, 8
      %s163 = scalar_lea.vmem %s2, %s162
      %p164 = scmp.lt.s32.totalorder %s17, 1
      %s165 = scalar_select %p164, %s17, 1
      %s166 = smul.addr %s165, 60
      %s167 = smul.addr %s166, 8
      %s168 = scalar_lea.vmem %s0, %s167
      %p169 = scmp.lt.s32.totalorder %s18, 0
      %s170 = scalar_select %p169, %s18, 0
      %s171 = smul.addr %s170, 8
      %s172 = scalar_lea.vmem %s1, %s171
      %p173 = scmp.lt.s32.totalorder %s17, 1
      %s174 = scalar_select %p173, %s17, 1
      %p175 = scmp.lt.s32.totalorder %s18, 0
      %s176 = scalar_select %p175, %s18, 0
      %s177 = smul.addr %s174, 54
      %s178 = sadd.s32 %s176, %s177
      %s179 = smul.addr %s178, 8
      %s180 = scalar_lea.vmem %s2, %s179
      %v181 = vld [vmem:[%s168] sm:$0xff]
      %v182 = vld [vmem:[%s168 + $0x8] sm:$0xff]
      %v183 = vld [vmem:[%s168 + $0x10] sm:$0xf]
      %v184 = vld [vmem:[%s168 + $0x18] sm:$0xff]
      %v185 = vld [vmem:[%s168 + $0x20] sm:$0xff]
      %v186 = vld [vmem:[%s168 + $0x28] sm:$0xf]
      %v187 = vld [vmem:[%s168 + $0x30] sm:$0xff]
      %v188 = vld [vmem:[%s168 + $0x38] sm:$0xff]
      %v189 = vld [vmem:[%s168 + $0x40] sm:$0xf]
      %v190 = vld [vmem:[%s168 + $0x48] sm:$0xff]
      %v191 = vld [vmem:[%s168 + $0x50] sm:$0xff]
      %v192 = vld [vmem:[%s168 + $0x58] sm:$0xf]
      %v193 = vld [vmem:[%s168 + $0x60] sm:$0xff]
      %v194 = vld [vmem:[%s168 + $0x68] sm:$0xff]
      %v195 = vld [vmem:[%s168 + $0x70] sm:$0xf]
      %v196 = vld [vmem:[%s168 + $0x78] sm:$0xff]
      %v197 = vld [vmem:[%s168 + $0x80] sm:$0xff]
      %v198 = vld [vmem:[%s168 + $0x88] sm:$0xf]
      %v199 = vld [vmem:[%s168 + $0x90] sm:$0xff]
      %v200 = vld [vmem:[%s168 + $0x98] sm:$0xff]
      %v201 = vld [vmem:[%s168 + $0xa0] sm:$0xf]
      %v202 = vld [vmem:[%s168 + $0xa8] sm:$0xff]
      %v203 = vld [vmem:[%s168 + $0xb0] sm:$0xff]
      %v204 = vld [vmem:[%s168 + $0xb8] sm:$0xf]
      %v205 = vld [vmem:[%s168 + $0xc0] sm:$0xff]
      %v206 = vld [vmem:[%s168 + $0xc8] sm:$0xff]
      %v207 = vld [vmem:[%s168 + $0xd0] sm:$0xf]
      %v208 = vld [vmem:[%s168 + $0xd8] sm:$0xff]
      %v209 = vld [vmem:[%s168 + $0xe0] sm:$0xff]
      %v210 = vld [vmem:[%s168 + $0xe8] sm:$0xf]
      %v211 = vld [vmem:[%s168 + $0xf0] sm:$0xff]
      %v212 = vld [vmem:[%s168 + $0xf8] sm:$0xff]
      %v213 = vld [vmem:[%s168 + $0x100] sm:$0xf]
      %v214 = vld [vmem:[%s168 + $0x108] sm:$0xff]
      %v215 = vld [vmem:[%s168 + $0x110] sm:$0xff]
      %v216 = vld [vmem:[%s168 + $0x118] sm:$0xf]
      %v217 = vld [vmem:[%s168 + $0x120] sm:$0xff]
      %v218 = vld [vmem:[%s168 + $0x128] sm:$0xff]
      %v219 = vld [vmem:[%s168 + $0x130] sm:$0xf]
      %v220 = vld [vmem:[%s168 + $0x138] sm:$0xff]
      %v221 = vld [vmem:[%s168 + $0x140] sm:$0xff]
      %v222 = vld [vmem:[%s168 + $0x148] sm:$0xf]
      %v223 = vld [vmem:[%s168 + $0x150] sm:$0xff]
      %v224 = vld [vmem:[%s168 + $0x158] sm:$0xff]
      %v225 = vld [vmem:[%s168 + $0x160] sm:$0xf]
      %v226 = vld [vmem:[%s168 + $0x168] sm:$0xff]
      %v227 = vld [vmem:[%s168 + $0x170] sm:$0xff]
      %v228 = vld [vmem:[%s168 + $0x178] sm:$0xf]
      %v229 = vld [vmem:[%s168 + $0x180] sm:$0xff]
      %v230 = vld [vmem:[%s168 + $0x188] sm:$0xff]
      %v231 = vld [vmem:[%s168 + $0x190] sm:$0xf]
      %v232 = vld [vmem:[%s168 + $0x198] sm:$0xff]
      %v233 = vld [vmem:[%s168 + $0x1a0] sm:$0xff]
      %v234 = vld [vmem:[%s168 + $0x1a8] sm:$0xf]
      %v235 = vld [vmem:[%s168 + $0x1b0] sm:$0xff]
      %v236 = vld [vmem:[%s168 + $0x1b8] sm:$0xff]
      %v237 = vld [vmem:[%s168 + $0x1c0] sm:$0xf]
      %v238 = vld [vmem:[%s168 + $0x1c8] sm:$0xff]
      %v239 = vld [vmem:[%s168 + $0x1d0] sm:$0xff]
      %v240 = vld [vmem:[%s168 + $0x1d8] sm:$0xf]
      %vm289 = vcmask 1045504
      %v290 = vrot.slane %v181, 2
      %v291 = vrot.slane %v182, 2
      %v292 = vsel %vm289, %v290, %v291
      %v293 = vrot.slane %v183, 2
      %v294 = vsel %vm289, %v291, %v293
      %v295 = vrot.slane %v184, 2
      %v296 = vrot.slane %v185, 2
      %v297 = vsel %vm289, %v295, %v296
      %v298 = vrot.slane %v186, 2
      %v299 = vsel %vm289, %v296, %v298
      %v300 = vrot.slane %v187, 2
      %v301 = vrot.slane %v188, 2
      %v302 = vsel %vm289, %v300, %v301
      %v303 = vrot.slane %v189, 2
      %v304 = vsel %vm289, %v301, %v303
      %v305 = vrot.slane %v190, 2
      %v306 = vrot.slane %v191, 2
      %v307 = vsel %vm289, %v305, %v306
      %v308 = vrot.slane %v192, 2
      %v309 = vsel %vm289, %v306, %v308
      %v310 = vrot.slane %v193, 2
      %v311 = vrot.slane %v194, 2
      %v312 = vsel %vm289, %v310, %v311
      %v313 = vrot.slane %v195, 2
      %v314 = vsel %vm289, %v311, %v313
      %v315 = vrot.slane %v196, 2
      %v316 = vrot.slane %v197, 2
      %v317 = vsel %vm289, %v315, %v316
      %v318 = vrot.slane %v198, 2
      %v319 = vsel %vm289, %v316, %v318
      %v320 = vrot.slane %v199, 2
      %v321 = vrot.slane %v200, 2
      %v322 = vsel %vm289, %v320, %v321
      %v323 = vrot.slane %v201, 2
      %v324 = vsel %vm289, %v321, %v323
      %v325 = vrot.slane %v202, 2
      %v326 = vrot.slane %v203, 2
      %v327 = vsel %vm289, %v325, %v326
      %v328 = vrot.slane %v204, 2
      %v329 = vsel %vm289, %v326, %v328
      %v330 = vrot.slane %v205, 2
      %v331 = vrot.slane %v206, 2
      %v332 = vsel %vm289, %v330, %v331
      %v333 = vrot.slane %v207, 2
      %v334 = vsel %vm289, %v331, %v333
      %v335 = vrot.slane %v208, 2
      %v336 = vrot.slane %v209, 2
      %v337 = vsel %vm289, %v335, %v336
      %v338 = vrot.slane %v210, 2
      %v339 = vsel %vm289, %v336, %v338
      %v340 = vrot.slane %v211, 2
      %v341 = vrot.slane %v212, 2
      %v342 = vsel %vm289, %v340, %v341
      %v343 = vrot.slane %v213, 2
      %v344 = vsel %vm289, %v341, %v343
      %v345 = vrot.slane %v214, 2
      %v346 = vrot.slane %v215, 2
      %v347 = vsel %vm289, %v345, %v346
      %v348 = vrot.slane %v216, 2
      %v349 = vsel %vm289, %v346, %v348
      %v350 = vrot.slane %v217, 2
      %v351 = vrot.slane %v218, 2
      %v352 = vsel %vm289, %v350, %v351
      %v353 = vrot.slane %v219, 2
      %v354 = vsel %vm289, %v351, %v353
      %v355 = vrot.slane %v220, 2
      %v356 = vrot.slane %v221, 2
      %v357 = vsel %vm289, %v355, %v356
      %v358 = vrot.slane %v222, 2
      %v359 = vsel %vm289, %v356, %v358
      %v360 = vrot.slane %v223, 2
      %v361 = vrot.slane %v224, 2
      %v362 = vsel %vm289, %v360, %v361
      %v363 = vrot.slane %v225, 2
      %v364 = vsel %vm289, %v361, %v363
      %v365 = vrot.slane %v226, 2
      %v366 = vrot.slane %v227, 2
      %v367 = vsel %vm289, %v365, %v366
      %v368 = vrot.slane %v228, 2
      %v369 = vsel %vm289, %v366, %v368
      %vm402 = vcmask 1043456
      %v403 = vrot.slane %v181, 4
      %v404 = vrot.slane %v182, 4
      %v405 = vsel %vm402, %v403, %v404
      %v406 = vrot.slane %v183, 4
      %v407 = vsel %vm402, %v404, %v406
      %v408 = vrot.slane %v184, 4
      %v409 = vrot.slane %v185, 4
      %v410 = vsel %vm402, %v408, %v409
      %v411 = vrot.slane %v186, 4
      %v412 = vsel %vm402, %v409, %v411
      %v413 = vrot.slane %v187, 4
      %v414 = vrot.slane %v188, 4
      %v415 = vsel %vm402, %v413, %v414
      %v416 = vrot.slane %v189, 4
      %v417 = vsel %vm402, %v414, %v416
      %v418 = vrot.slane %v190, 4
      %v419 = vrot.slane %v191, 4
      %v420 = vsel %vm402, %v418, %v419
      %v421 = vrot.slane %v192, 4
      %v422 = vsel %vm402, %v419, %v421
      %v423 = vrot.slane %v193, 4
      %v424 = vrot.slane %v194, 4
      %v425 = vsel %vm402, %v423, %v424
      %v426 = vrot.slane %v195, 4
      %v427 = vsel %vm402, %v424, %v426
      %v428 = vrot.slane %v196, 4
      %v429 = vrot.slane %v197, 4
      %v430 = vsel %vm402, %v428, %v429
      %v431 = vrot.slane %v198, 4
      %v432 = vsel %vm402, %v429, %v431
      %v433 = vrot.slane %v199, 4
      %v434 = vrot.slane %v200, 4
      %v435 = vsel %vm402, %v433, %v434
      %v436 = vrot.slane %v201, 4
      %v437 = vsel %vm402, %v434, %v436
      %v438 = vrot.slane %v202, 4
      %v439 = vrot.slane %v203, 4
      %v440 = vsel %vm402, %v438, %v439
      %v441 = vrot.slane %v204, 4
      %v442 = vsel %vm402, %v439, %v441
      %v443 = vrot.slane %v205, 4
      %v444 = vrot.slane %v206, 4
      %v445 = vsel %vm402, %v443, %v444
      %v446 = vrot.slane %v207, 4
      %v447 = vsel %vm402, %v444, %v446
      %v448 = vrot.slane %v208, 4
      %v449 = vrot.slane %v209, 4
      %v450 = vsel %vm402, %v448, %v449
      %v451 = vrot.slane %v210, 4
      %v452 = vsel %vm402, %v449, %v451
      %v453 = vrot.slane %v211, 4
      %v454 = vrot.slane %v212, 4
      %v455 = vsel %vm402, %v453, %v454
      %v456 = vrot.slane %v213, 4
      %v457 = vsel %vm402, %v454, %v456
      %v458 = vrot.slane %v214, 4
      %v459 = vrot.slane %v215, 4
      %v460 = vsel %vm402, %v458, %v459
      %v461 = vrot.slane %v216, 4
      %v462 = vsel %vm402, %v459, %v461
      %v463 = vrot.slane %v217, 4
      %v464 = vrot.slane %v218, 4
      %v465 = vsel %vm402, %v463, %v464
      %v466 = vrot.slane %v219, 4
      %v467 = vsel %vm402, %v464, %v466
      %v468 = vrot.slane %v220, 4
      %v469 = vrot.slane %v221, 4
      %v470 = vsel %vm402, %v468, %v469
      %v471 = vrot.slane %v222, 4
      %v472 = vsel %vm402, %v469, %v471
      %v473 = vrot.slane %v223, 4
      %v474 = vrot.slane %v224, 4
      %v475 = vsel %vm402, %v473, %v474
      %v476 = vrot.slane %v225, 4
      %v477 = vsel %vm402, %v474, %v476
      %v478 = vrot.slane %v226, 4
      %v479 = vrot.slane %v227, 4
      %v480 = vsel %vm402, %v478, %v479
      %v481 = vrot.slane %v228, 4
      %v482 = vsel %vm402, %v479, %v481
      %v515 = vld [vmem:[%s172] sm:$0xff]
      %v516 = vld [vmem:[%s172 + $0x8] sm:$0xff]
      %v517 = vld [vmem:[%s172 + $0x10] sm:$0xff]
      %v518 = vld [vmem:[%s172 + $0x18] sm:$0xff]
      %v519 = vld [vmem:[%s172 + $0x20] sm:$0xff]
      %v520 = vld [vmem:[%s172 + $0x28] sm:$0xff]
      %v521 = vld [vmem:[%s172 + $0x30] sm:$0xff]
      %v522 = vld [vmem:[%s172 + $0x38] sm:$0xff]
      %v523 = vld [vmem:[%s172 + $0x40] sm:$0xff]
      %v524 = vld [vmem:[%s172 + $0x48] sm:$0xff]
      %v525 = vld [vmem:[%s172 + $0x50] sm:$0xff]
      %v526 = vld [vmem:[%s172 + $0x58] sm:$0xff]
      %v527 = vld [vmem:[%s172 + $0x60] sm:$0xff]
      %v528 = vld [vmem:[%s172 + $0x68] sm:$0xff]
      %v529 = vld [vmem:[%s172 + $0x70] sm:$0xff]
      %v530 = vld [vmem:[%s172 + $0x78] sm:$0xff]
      %v531 = vld [vmem:[%s172 + $0x80] sm:$0xff]
      %v532 = vld [vmem:[%s172 + $0x88] sm:$0xff]
      %v533 = vld [vmem:[%s172 + $0x90] sm:$0xff]
      %v534 = vld [vmem:[%s172 + $0x98] sm:$0xff]
      %v535 = vld [vmem:[%s172 + $0xa0] sm:$0xff]
      %v536 = vld [vmem:[%s172 + $0xa8] sm:$0xff]
      %v537 = vld [vmem:[%s172 + $0xb0] sm:$0xff]
      %v538 = vld [vmem:[%s172 + $0xb8] sm:$0xff]
      %v539 = vld [vmem:[%s172 + $0xc0] sm:$0xff]
      %v540 = vld [vmem:[%s172 + $0xc8] sm:$0xff]
      %v541 = vld [vmem:[%s172 + $0xd0] sm:$0xff]
      %v542 = vld [vmem:[%s172 + $0xd8] sm:$0xff]
      %v543 = vld [vmem:[%s172 + $0xe0] sm:$0xff]
      %v544 = vld [vmem:[%s172 + $0xe8] sm:$0xff]
      %v545 = vld [vmem:[%s172 + $0xf0] sm:$0xff]
      %v546 = vld [vmem:[%s172 + $0xf8] sm:$0xff]
      %v547 = vld [vmem:[%s172 + $0x100] sm:$0xff]
      %v548 = vld [vmem:[%s172 + $0x108] sm:$0xff]
      %v549 = vld [vmem:[%s172 + $0x110] sm:$0xff]
      %v550 = vld [vmem:[%s172 + $0x118] sm:$0xff]
      %v551 = vld [vmem:[%s172 + $0x120] sm:$0xff]
      %v552 = vld [vmem:[%s172 + $0x128] sm:$0xff]
      %v553 = vld [vmem:[%s172 + $0x130] sm:$0xff]
      %v554 = vld [vmem:[%s172 + $0x138] sm:$0xff]
      %v555 = vld [vmem:[%s172 + $0x140] sm:$0xff]
      %v556 = vld [vmem:[%s172 + $0x148] sm:$0xff]
      %v557 = vld [vmem:[%s172 + $0x150] sm:$0xff]
      %v558 = vld [vmem:[%s172 + $0x158] sm:$0xff]
      %v559 = vld [vmem:[%s172 + $0x160] sm:$0xff]
      %v560 = vld [vmem:[%s172 + $0x168] sm:$0xff]
      %v561 = vld [vmem:[%s172 + $0x170] sm:$0xff]
      %v562 = vld [vmem:[%s172 + $0x178] sm:$0xff]
      %v569 = vrot.slane %v229, 2
      %v570 = vrot.slane %v230, 2
      %v571 = vsel %vm289, %v569, %v570
      %v572 = vrot.slane %v231, 2
      %v573 = vsel %vm289, %v570, %v572
      %v574 = vrot.slane %v232, 2
      %v575 = vrot.slane %v233, 2
      %v576 = vsel %vm289, %v574, %v575
      %v577 = vrot.slane %v234, 2
      %v578 = vsel %vm289, %v575, %v577
      %v583 = vrot.slane %v229, 4
      %v584 = vrot.slane %v230, 4
      %v585 = vsel %vm402, %v583, %v584
      %v586 = vrot.slane %v231, 4
      %v587 = vsel %vm402, %v584, %v586
      %v588 = vrot.slane %v232, 4
      %v589 = vrot.slane %v233, 4
      %v590 = vsel %vm402, %v588, %v589
      %v591 = vrot.slane %v234, 4
      %v592 = vsel %vm402, %v589, %v591
      %v597 = vld [vmem:[%s172 + $0x180] sm:$0xff]
      %v598 = vld [vmem:[%s172 + $0x188] sm:$0xff]
      %v599 = vld [vmem:[%s172 + $0x190] sm:$0xff]
      %v600 = vld [vmem:[%s172 + $0x198] sm:$0xff]
      %v601 = vld [vmem:[%s172 + $0x1a0] sm:$0xff]
      %v602 = vld [vmem:[%s172 + $0x1a8] sm:$0xff]
      %v603 = vld [vmem:[%s172 + $0x1b0] sm:$0xff]
      %v604 = vld [vmem:[%s172 + $0x1b8] sm:$0xff]
      %v605 = vld [vmem:[%s172 + $0x1c0] sm:$0xff]
      %v606 = vld [vmem:[%s172 + $0x1c8] sm:$0xff]
      %v607 = vld [vmem:[%s172 + $0x1d0] sm:$0xff]
      %v608 = vld [vmem:[%s172 + $0x1d8] sm:$0xff]
      %v609 = vld [vmem:[%s172 + $0x1e0] sm:$0xff]
      %v610 = vld [vmem:[%s172 + $0x1e8] sm:$0xff]
      %v611 = vld [vmem:[%s172 + $0x1f0] sm:$0xff]
      %v612 = vld [vmem:[%s172 + $0x1f8] sm:$0xff]
      %v613 = vld [vmem:[%s172 + $0x200] sm:$0xff]
      %v614 = vld [vmem:[%s172 + $0x208] sm:$0xff]
      %v615 = vld [vmem:[%s172 + $0x210] sm:$0xff]
      %v616 = vld [vmem:[%s172 + $0x218] sm:$0xff]
      %v617 = vld [vmem:[%s172 + $0x220] sm:$0xff]
      %v618 = vld [vmem:[%s172 + $0x228] sm:$0xff]
      %v619 = vld [vmem:[%s172 + $0x230] sm:$0xff]
      %v620 = vld [vmem:[%s172 + $0x238] sm:$0xff]
      %v621 = vld [vmem:[%s172 + $0x240] sm:$0xff]
      %v622 = vld [vmem:[%s172 + $0x248] sm:$0xff]
      %v623 = vld [vmem:[%s172 + $0x250] sm:$0xff]
      %v624 = vld [vmem:[%s172 + $0x258] sm:$0xff]
      %v625 = vld [vmem:[%s172 + $0x260] sm:$0xff]
      %v626 = vld [vmem:[%s172 + $0x268] sm:$0xff]
      %v627 = vld [vmem:[%s172 + $0x270] sm:$0xff]
      %v628 = vld [vmem:[%s172 + $0x278] sm:$0xff]
      %v629 = vld [vmem:[%s172 + $0x280] sm:$0xff]
      %v630 = vld [vmem:[%s172 + $0x288] sm:$0xff]
      %v631 = vld [vmem:[%s172 + $0x290] sm:$0xff]
      %v632 = vld [vmem:[%s172 + $0x298] sm:$0xff]
      %v633 = vld [vmem:[%s172 + $0x2a0] sm:$0xff]
      %v634 = vld [vmem:[%s172 + $0x2a8] sm:$0xff]
      %v635 = vld [vmem:[%s172 + $0x2b0] sm:$0xff]
      %v636 = vld [vmem:[%s172 + $0x2b8] sm:$0xff]
      %v637 = vld [vmem:[%s172 + $0x2c0] sm:$0xff]
      %v638 = vld [vmem:[%s172 + $0x2c8] sm:$0xff]
      %v639 = vld [vmem:[%s172 + $0x2d0] sm:$0xff]
      %v640 = vld [vmem:[%s172 + $0x2d8] sm:$0xff]
      %v641 = vld [vmem:[%s172 + $0x2e0] sm:$0xff]
      %v642 = vld [vmem:[%s172 + $0x2e8] sm:$0xff]
      %v643 = vld [vmem:[%s172 + $0x2f0] sm:$0xff]
      %v644 = vld [vmem:[%s172 + $0x2f8] sm:$0xff]
      %645 = vmatpush.msra.mxu0 %v612
      %646 = vmatpush.msra.mxu0 %v611
      %647 = vmatpush.msra.mxu0 %v610
      %648 = vmatpush.msra.mxu0 %v609
      %649 = vmatpush.msra.mxu0 %v608
      %650 = vmatpush.msra.mxu0 %v607
      %651 = vmatpush.msra.mxu0 %v606
      %652 = vmatpush.msra.mxu0 %v605
      %653 = vmatpush.msra.mxu0 %v604
      %654 = vmatpush.msra.mxu0 %v603
      %655 = vmatpush.msra.mxu0 %v602
      %656 = vmatpush.msra.mxu0 %v601
      %657 = vmatpush.msra.mxu0 %v600
      %658 = vmatpush.msra.mxu0 %v599
      %659 = vmatpush.msra.mxu0 %v598
      %660 = vmatpush.msra.mxu0 %v597
      %661 = vmatmul.f32.gmra.mxu0 %v187
      %v662 = vpop.f32.mrf.mxu0
      %v663 = vadd.f32 0.0, %v662
      %664 = vmatmul.f32.gmra.mxu0 %v188
      %v665 = vpop.f32.mrf.mxu0
      %v666 = vadd.f32 0.0, %v665
      %667 = vmatmul.f32.gmra.mxu0 %v190
      %v668 = vpop.f32.mrf.mxu0
      %v669 = vadd.f32 0.0, %v668
      %670 = vmatmul.f32.gmra.mxu0 %v191
      %v671 = vpop.f32.mrf.mxu0
      %v672 = vadd.f32 0.0, %v671
      %673 = vmatmul.f32.gmra.mxu0 %v193
      %v674 = vpop.f32.mrf.mxu0
      %v675 = vadd.f32 0.0, %v674
      %676 = vmatmul.f32.gmra.mxu0 %v194
      %v677 = vpop.f32.mrf.mxu0
      %v678 = vadd.f32 0.0, %v677
      %679 = vmatmul.f32.gmra.mxu0 %v196
      %v680 = vpop.f32.mrf.mxu0
      %v681 = vadd.f32 0.0, %v680
      %682 = vmatmul.f32.gmra.mxu0 %v197
      %v683 = vpop.f32.mrf.mxu0
      %v684 = vadd.f32 0.0, %v683
      %685 = vmatmul.f32.gmra.mxu0 %v199
      %v686 = vpop.f32.mrf.mxu0
      %v687 = vadd.f32 0.0, %v686
      %688 = vmatmul.f32.gmra.mxu0 %v200
      %v689 = vpop.f32.mrf.mxu0
      %v690 = vadd.f32 0.0, %v689
      %691 = vmatmul.f32.gmra.mxu0 %v202
      %v692 = vpop.f32.mrf.mxu0
      %v693 = vadd.f32 0.0, %v692
      %694 = vmatmul.f32.gmra.mxu0 %v203
      %v695 = vpop.f32.mrf.mxu0
      %v696 = vadd.f32 0.0, %v695
      %697 = vmatmul.f32.gmra.mxu0 %v205
      %v698 = vpop.f32.mrf.mxu0
      %v699 = vadd.f32 0.0, %v698
      %700 = vmatmul.f32.gmra.mxu0 %v206
      %v701 = vpop.f32.mrf.mxu0
      %v702 = vadd.f32 0.0, %v701
      %703 = vmatmul.f32.gmra.mxu0 %v208
      %v704 = vpop.f32.mrf.mxu0
      %v705 = vadd.f32 0.0, %v704
      %706 = vmatmul.f32.gmra.mxu0 %v209
      %v707 = vpop.f32.mrf.mxu0
      %v708 = vadd.f32 0.0, %v707
      %709 = vmatmul.f32.gmra.mxu0 %v211
      %v710 = vpop.f32.mrf.mxu0
      %v711 = vadd.f32 0.0, %v710
      %712 = vmatmul.f32.gmra.mxu0 %v212
      %v713 = vpop.f32.mrf.mxu0
      %v714 = vadd.f32 0.0, %v713
      %715 = vmatmul.f32.gmra.mxu0 %v214
      %v716 = vpop.f32.mrf.mxu0
      %v717 = vadd.f32 0.0, %v716
      %718 = vmatmul.f32.gmra.mxu0 %v215
      %v719 = vpop.f32.mrf.mxu0
      %v720 = vadd.f32 0.0, %v719
      %721 = vmatmul.f32.gmra.mxu0 %v217
      %v722 = vpop.f32.mrf.mxu0
      %v723 = vadd.f32 0.0, %v722
      %724 = vmatmul.f32.gmra.mxu0 %v218
      %v725 = vpop.f32.mrf.mxu0
      %v726 = vadd.f32 0.0, %v725
      %727 = vmatmul.f32.gmra.mxu0 %v220
      %v728 = vpop.f32.mrf.mxu0
      %v729 = vadd.f32 0.0, %v728
      %730 = vmatmul.f32.gmra.mxu0 %v221
      %v731 = vpop.f32.mrf.mxu0
      %v732 = vadd.f32 0.0, %v731
      %733 = vmatmul.f32.gmra.mxu0 %v223
      %v734 = vpop.f32.mrf.mxu0
      %v735 = vadd.f32 0.0, %v734
      %736 = vmatmul.f32.gmra.mxu0 %v224
      %v737 = vpop.f32.mrf.mxu0
      %v738 = vadd.f32 0.0, %v737
      %739 = vmatmul.f32.gmra.mxu0 %v226
      %v740 = vpop.f32.mrf.mxu0
      %v741 = vadd.f32 0.0, %v740
      %742 = vmatmul.f32.gmra.mxu0 %v227
      %v743 = vpop.f32.mrf.mxu0
      %v744 = vadd.f32 0.0, %v743
      %745 = vmatmul.f32.gmra.mxu0 %v229
      %v746 = vpop.f32.mrf.mxu0
      %v747 = vadd.f32 0.0, %v746
      %748 = vmatmul.f32.gmra.mxu0 %v230
      %v749 = vpop.f32.mrf.mxu0
      %v750 = vadd.f32 0.0, %v749
      %751 = vmatmul.f32.gmra.mxu0 %v232
      %v752 = vpop.f32.mrf.mxu0
      %v753 = vadd.f32 0.0, %v752
      %754 = vmatmul.f32.gmra.mxu0 %v233
      %v755 = vpop.f32.mrf.mxu0
      %v756 = vadd.f32 0.0, %v755
      %757 = vdwg.mxu0
      %758 = vmatpush.msra.mxu0 %v628
      %759 = vmatpush.msra.mxu0 %v627
      %760 = vmatpush.msra.mxu0 %v626
      %761 = vmatpush.msra.mxu0 %v625
      %762 = vmatpush.msra.mxu0 %v624
      %763 = vmatpush.msra.mxu0 %v623
      %764 = vmatpush.msra.mxu0 %v622
      %765 = vmatpush.msra.mxu0 %v621
      %766 = vmatpush.msra.mxu0 %v620
      %767 = vmatpush.msra.mxu0 %v619
      %768 = vmatpush.msra.mxu0 %v618
      %769 = vmatpush.msra.mxu0 %v617
      %770 = vmatpush.msra.mxu0 %v616
      %771 = vmatpush.msra.mxu0 %v615
      %772 = vmatpush.msra.mxu0 %v614
      %773 = vmatpush.msra.mxu0 %v613
      %774 = vmatmul.f32.gmra.mxu0 %v302
      %v775 = vpop.f32.mrf.mxu0
      %v776 = vadd.f32 %v663, %v775
      %777 = vmatmul.f32.gmra.mxu0 %v304
      %v778 = vpop.f32.mrf.mxu0
      %v779 = vadd.f32 %v666, %v778
      %780 = vmatmul.f32.gmra.mxu0 %v307
      %v781 = vpop.f32.mrf.mxu0
      %v782 = vadd.f32 %v669, %v781
      %783 = vmatmul.f32.gmra.mxu0 %v309
      %v784 = vpop.f32.mrf.mxu0
      %v785 = vadd.f32 %v672, %v784
      %786 = vmatmul.f32.gmra.mxu0 %v312
      %v787 = vpop.f32.mrf.mxu0
      %v788 = vadd.f32 %v675, %v787
      %789 = vmatmul.f32.gmra.mxu0 %v314
      %v790 = vpop.f32.mrf.mxu0
      %v791 = vadd.f32 %v678, %v790
      %792 = vmatmul.f32.gmra.mxu0 %v317
      %v793 = vpop.f32.mrf.mxu0
      %v794 = vadd.f32 %v681, %v793
      %795 = vmatmul.f32.gmra.mxu0 %v319
      %v796 = vpop.f32.mrf.mxu0
      %v797 = vadd.f32 %v684, %v796
      %798 = vmatmul.f32.gmra.mxu0 %v322
      %v799 = vpop.f32.mrf.mxu0
      %v800 = vadd.f32 %v687, %v799
      %801 = vmatmul.f32.gmra.mxu0 %v324
      %v802 = vpop.f32.mrf.mxu0
      %v803 = vadd.f32 %v690, %v802
      %804 = vmatmul.f32.gmra.mxu0 %v327
      %v805 = vpop.f32.mrf.mxu0
      %v806 = vadd.f32 %v693, %v805
      %807 = vmatmul.f32.gmra.mxu0 %v329
      %v808 = vpop.f32.mrf.mxu0
      %v809 = vadd.f32 %v696, %v808
      %810 = vmatmul.f32.gmra.mxu0 %v332
      %v811 = vpop.f32.mrf.mxu0
      %v812 = vadd.f32 %v699, %v811
      %813 = vmatmul.f32.gmra.mxu0 %v334
      %v814 = vpop.f32.mrf.mxu0
      %v815 = vadd.f32 %v702, %v814
      %816 = vmatmul.f32.gmra.mxu0 %v337
      %v817 = vpop.f32.mrf.mxu0
      %v818 = vadd.f32 %v705, %v817
      %819 = vmatmul.f32.gmra.mxu0 %v339
      %v820 = vpop.f32.mrf.mxu0
      %v821 = vadd.f32 %v708, %v820
      %822 = vmatmul.f32.gmra.mxu0 %v342
      %v823 = vpop.f32.mrf.mxu0
      %v824 = vadd.f32 %v711, %v823
      %825 = vmatmul.f32.gmra.mxu0 %v344
      %v826 = vpop.f32.mrf.mxu0
      %v827 = vadd.f32 %v714, %v826
      %828 = vmatmul.f32.gmra.mxu0 %v347
      %v829 = vpop.f32.mrf.mxu0
      %v830 = vadd.f32 %v717, %v829
      %831 = vmatmul.f32.gmra.mxu0 %v349
      %v832 = vpop.f32.mrf.mxu0
      %v833 = vadd.f32 %v720, %v832
      %834 = vmatmul.f32.gmra.mxu0 %v352
      %v835 = vpop.f32.mrf.mxu0
      %v836 = vadd.f32 %v723, %v835
      %837 = vmatmul.f32.gmra.mxu0 %v354
      %v838 = vpop.f32.mrf.mxu0
      %v839 = vadd.f32 %v726, %v838
      %840 = vmatmul.f32.gmra.mxu0 %v357
      %v841 = vpop.f32.mrf.mxu0
      %v842 = vadd.f32 %v729, %v841
      %843 = vmatmul.f32.gmra.mxu0 %v359
      %v844 = vpop.f32.mrf.mxu0
      %v845 = vadd.f32 %v732, %v844
      %846 = vmatmul.f32.gmra.mxu0 %v362
      %v847 = vpop.f32.mrf.mxu0
      %v848 = vadd.f32 %v735, %v847
      %849 = vmatmul.f32.gmra.mxu0 %v364
      %v850 = vpop.f32.mrf.mxu0
      %v851 = vadd.f32 %v738, %v850
      %852 = vmatmul.f32.gmra.mxu0 %v367
      %v853 = vpop.f32.mrf.mxu0
      %v854 = vadd.f32 %v741, %v853
      %855 = vmatmul.f32.gmra.mxu0 %v369
      %v856 = vpop.f32.mrf.mxu0
      %v857 = vadd.f32 %v744, %v856
      %858 = vmatmul.f32.gmra.mxu0 %v571
      %v859 = vpop.f32.mrf.mxu0
      %v860 = vadd.f32 %v747, %v859
      %861 = vmatmul.f32.gmra.mxu0 %v573
      %v862 = vpop.f32.mrf.mxu0
      %v863 = vadd.f32 %v750, %v862
      %864 = vmatmul.f32.gmra.mxu0 %v576
      %v865 = vpop.f32.mrf.mxu0
      %v866 = vadd.f32 %v753, %v865
      %867 = vmatmul.f32.gmra.mxu0 %v578
      %v868 = vpop.f32.mrf.mxu0
      %v869 = vadd.f32 %v756, %v868
      %870 = vdwg.mxu0
      %871 = vmatpush.msra.mxu0 %v644
      %872 = vmatpush.msra.mxu0 %v643
      %873 = vmatpush.msra.mxu0 %v642
      %874 = vmatpush.msra.mxu0 %v641
      %875 = vmatpush.msra.mxu0 %v640
      %876 = vmatpush.msra.mxu0 %v639
      %877 = vmatpush.msra.mxu0 %v638
      %878 = vmatpush.msra.mxu0 %v637
      %879 = vmatpush.msra.mxu0 %v636
      %880 = vmatpush.msra.mxu0 %v635
      %881 = vmatpush.msra.mxu0 %v634
      %882 = vmatpush.msra.mxu0 %v633
      %883 = vmatpush.msra.mxu0 %v632
      %884 = vmatpush.msra.mxu0 %v631
      %885 = vmatpush.msra.mxu0 %v630
      %886 = vmatpush.msra.mxu0 %v629
      %887 = vmatmul.f32.gmra.mxu0 %v415
      %v888 = vpop.f32.mrf.mxu0
      %v889 = vadd.f32 %v776, %v888
      %890 = vmatmul.f32.gmra.mxu0 %v417
      %v891 = vpop.f32.mrf.mxu0
      %v892 = vadd.f32 %v779, %v891
      %893 = vmatmul.f32.gmra.mxu0 %v420
      %v894 = vpop.f32.mrf.mxu0
      %v895 = vadd.f32 %v782, %v894
      %896 = vmatmul.f32.gmra.mxu0 %v422
      %v897 = vpop.f32.mrf.mxu0
      %v898 = vadd.f32 %v785, %v897
      %899 = vmatmul.f32.gmra.mxu0 %v425
      %v900 = vpop.f32.mrf.mxu0
      %v901 = vadd.f32 %v788, %v900
      %902 = vmatmul.f32.gmra.mxu0 %v427
      %v903 = vpop.f32.mrf.mxu0
      %v904 = vadd.f32 %v791, %v903
      %905 = vmatmul.f32.gmra.mxu0 %v430
      %v906 = vpop.f32.mrf.mxu0
      %v907 = vadd.f32 %v794, %v906
      %908 = vmatmul.f32.gmra.mxu0 %v432
      %v909 = vpop.f32.mrf.mxu0
      %v910 = vadd.f32 %v797, %v909
      %911 = vmatmul.f32.gmra.mxu0 %v435
      %v912 = vpop.f32.mrf.mxu0
      %v913 = vadd.f32 %v800, %v912
      %914 = vmatmul.f32.gmra.mxu0 %v437
      %v915 = vpop.f32.mrf.mxu0
      %v916 = vadd.f32 %v803, %v915
      %917 = vmatmul.f32.gmra.mxu0 %v440
      %v918 = vpop.f32.mrf.mxu0
      %v919 = vadd.f32 %v806, %v918
      %920 = vmatmul.f32.gmra.mxu0 %v442
      %v921 = vpop.f32.mrf.mxu0
      %v922 = vadd.f32 %v809, %v921
      %923 = vmatmul.f32.gmra.mxu0 %v445
      %v924 = vpop.f32.mrf.mxu0
      %v925 = vadd.f32 %v812, %v924
      %926 = vmatmul.f32.gmra.mxu0 %v447
      %v927 = vpop.f32.mrf.mxu0
      %v928 = vadd.f32 %v815, %v927
      %929 = vmatmul.f32.gmra.mxu0 %v450
      %v930 = vpop.f32.mrf.mxu0
      %v931 = vadd.f32 %v818, %v930
      %932 = vmatmul.f32.gmra.mxu0 %v452
      %v933 = vpop.f32.mrf.mxu0
      %v934 = vadd.f32 %v821, %v933
      %935 = vmatmul.f32.gmra.mxu0 %v455
      %v936 = vpop.f32.mrf.mxu0
      %v937 = vadd.f32 %v824, %v936
      %938 = vmatmul.f32.gmra.mxu0 %v457
      %v939 = vpop.f32.mrf.mxu0
      %v940 = vadd.f32 %v827, %v939
      %941 = vmatmul.f32.gmra.mxu0 %v460
      %v942 = vpop.f32.mrf.mxu0
      %v943 = vadd.f32 %v830, %v942
      %944 = vmatmul.f32.gmra.mxu0 %v462
      %v945 = vpop.f32.mrf.mxu0
      %v946 = vadd.f32 %v833, %v945
      %947 = vmatmul.f32.gmra.mxu0 %v465
      %v948 = vpop.f32.mrf.mxu0
      %v949 = vadd.f32 %v836, %v948
      %950 = vmatmul.f32.gmra.mxu0 %v467
      %v951 = vpop.f32.mrf.mxu0
      %v952 = vadd.f32 %v839, %v951
      %953 = vmatmul.f32.gmra.mxu0 %v470
      %v954 = vpop.f32.mrf.mxu0
      %v955 = vadd.f32 %v842, %v954
      %956 = vmatmul.f32.gmra.mxu0 %v472
      %v957 = vpop.f32.mrf.mxu0
      %v958 = vadd.f32 %v845, %v957
      %959 = vmatmul.f32.gmra.mxu0 %v475
      %v960 = vpop.f32.mrf.mxu0
      %v961 = vadd.f32 %v848, %v960
      %962 = vmatmul.f32.gmra.mxu0 %v477
      %v963 = vpop.f32.mrf.mxu0
      %v964 = vadd.f32 %v851, %v963
      %965 = vmatmul.f32.gmra.mxu0 %v480
      %v966 = vpop.f32.mrf.mxu0
      %v967 = vadd.f32 %v854, %v966
      %968 = vmatmul.f32.gmra.mxu0 %v482
      %v969 = vpop.f32.mrf.mxu0
      %v970 = vadd.f32 %v857, %v969
      %971 = vmatmul.f32.gmra.mxu0 %v585
      %v972 = vpop.f32.mrf.mxu0
      %v973 = vadd.f32 %v860, %v972
      %974 = vmatmul.f32.gmra.mxu0 %v587
      %v975 = vpop.f32.mrf.mxu0
      %v976 = vadd.f32 %v863, %v975
      %977 = vmatmul.f32.gmra.mxu0 %v590
      %v978 = vpop.f32.mrf.mxu0
      %v979 = vadd.f32 %v866, %v978
      %980 = vmatmul.f32.gmra.mxu0 %v592
      %v981 = vpop.f32.mrf.mxu0
      %v982 = vadd.f32 %v869, %v981
      %983 = vdwg.mxu0
      %984 = vmatpush.msra.mxu0 %v530
      %985 = vmatpush.msra.mxu0 %v529
      %986 = vmatpush.msra.mxu0 %v528
      %987 = vmatpush.msra.mxu0 %v527
      %988 = vmatpush.msra.mxu0 %v526
      %989 = vmatpush.msra.mxu0 %v525
      %990 = vmatpush.msra.mxu0 %v524
      %991 = vmatpush.msra.mxu0 %v523
      %992 = vmatpush.msra.mxu0 %v522
      %993 = vmatpush.msra.mxu0 %v521
      %994 = vmatpush.msra.mxu0 %v520
      %995 = vmatpush.msra.mxu0 %v519
      %996 = vmatpush.msra.mxu0 %v518
      %997 = vmatpush.msra.mxu0 %v517
      %998 = vmatpush.msra.mxu0 %v516
      %999 = vmatpush.msra.mxu0 %v515
      %1000 = vmatmul.f32.gmra.mxu0 %v181
      %v1001 = vpop.f32.mrf.mxu0
      %v1002 = vadd.f32 %v889, %v1001
      %1003 = vmatmul.f32.gmra.mxu0 %v182
      %v1004 = vpop.f32.mrf.mxu0
      %v1005 = vadd.f32 %v892, %v1004
      %1006 = vmatmul.f32.gmra.mxu0 %v184
      %v1007 = vpop.f32.mrf.mxu0
      %v1008 = vadd.f32 %v895, %v1007
      %1009 = vmatmul.f32.gmra.mxu0 %v185
      %v1010 = vpop.f32.mrf.mxu0
      %v1011 = vadd.f32 %v898, %v1010
      %1012 = vmatmul.f32.gmra.mxu0 %v187
      %v1013 = vpop.f32.mrf.mxu0
      %v1014 = vadd.f32 %v901, %v1013
      %1015 = vmatmul.f32.gmra.mxu0 %v188
      %v1016 = vpop.f32.mrf.mxu0
      %v1017 = vadd.f32 %v904, %v1016
      %1018 = vmatmul.f32.gmra.mxu0 %v190
      %v1019 = vpop.f32.mrf.mxu0
      %v1020 = vadd.f32 %v907, %v1019
      %1021 = vmatmul.f32.gmra.mxu0 %v191
      %v1022 = vpop.f32.mrf.mxu0
      %v1023 = vadd.f32 %v910, %v1022
      %1024 = vmatmul.f32.gmra.mxu0 %v193
      %v1025 = vpop.f32.mrf.mxu0
      %v1026 = vadd.f32 %v913, %v1025
      %1027 = vmatmul.f32.gmra.mxu0 %v194
      %v1028 = vpop.f32.mrf.mxu0
      %v1029 = vadd.f32 %v916, %v1028
      %1030 = vmatmul.f32.gmra.mxu0 %v196
      %v1031 = vpop.f32.mrf.mxu0
      %v1032 = vadd.f32 %v919, %v1031
      %1033 = vmatmul.f32.gmra.mxu0 %v197
      %v1034 = vpop.f32.mrf.mxu0
      %v1035 = vadd.f32 %v922, %v1034
      %1036 = vmatmul.f32.gmra.mxu0 %v199
      %v1037 = vpop.f32.mrf.mxu0
      %v1038 = vadd.f32 %v925, %v1037
      %1039 = vmatmul.f32.gmra.mxu0 %v200
      %v1040 = vpop.f32.mrf.mxu0
      %v1041 = vadd.f32 %v928, %v1040
      %1042 = vmatmul.f32.gmra.mxu0 %v202
      %v1043 = vpop.f32.mrf.mxu0
      %v1044 = vadd.f32 %v931, %v1043
      %1045 = vmatmul.f32.gmra.mxu0 %v203
      %v1046 = vpop.f32.mrf.mxu0
      %v1047 = vadd.f32 %v934, %v1046
      %1048 = vmatmul.f32.gmra.mxu0 %v205
      %v1049 = vpop.f32.mrf.mxu0
      %v1050 = vadd.f32 %v937, %v1049
      %1051 = vmatmul.f32.gmra.mxu0 %v206
      %v1052 = vpop.f32.mrf.mxu0
      %v1053 = vadd.f32 %v940, %v1052
      %1054 = vmatmul.f32.gmra.mxu0 %v208
      %v1055 = vpop.f32.mrf.mxu0
      %v1056 = vadd.f32 %v943, %v1055
      %1057 = vmatmul.f32.gmra.mxu0 %v209
      %v1058 = vpop.f32.mrf.mxu0
      %v1059 = vadd.f32 %v946, %v1058
      %1060 = vmatmul.f32.gmra.mxu0 %v211
      %v1061 = vpop.f32.mrf.mxu0
      %v1062 = vadd.f32 %v949, %v1061
      %1063 = vmatmul.f32.gmra.mxu0 %v212
      %v1064 = vpop.f32.mrf.mxu0
      %v1065 = vadd.f32 %v952, %v1064
      %1066 = vmatmul.f32.gmra.mxu0 %v214
      %v1067 = vpop.f32.mrf.mxu0
      %v1068 = vadd.f32 %v955, %v1067
      %1069 = vmatmul.f32.gmra.mxu0 %v215
      %v1070 = vpop.f32.mrf.mxu0
      %v1071 = vadd.f32 %v958, %v1070
      %1072 = vmatmul.f32.gmra.mxu0 %v217
      %v1073 = vpop.f32.mrf.mxu0
      %v1074 = vadd.f32 %v961, %v1073
      %1075 = vmatmul.f32.gmra.mxu0 %v218
      %v1076 = vpop.f32.mrf.mxu0
      %v1077 = vadd.f32 %v964, %v1076
      %1078 = vmatmul.f32.gmra.mxu0 %v220
      %v1079 = vpop.f32.mrf.mxu0
      %v1080 = vadd.f32 %v967, %v1079
      %1081 = vmatmul.f32.gmra.mxu0 %v221
      %v1082 = vpop.f32.mrf.mxu0
      %v1083 = vadd.f32 %v970, %v1082
      %1084 = vmatmul.f32.gmra.mxu0 %v223
      %v1085 = vpop.f32.mrf.mxu0
      %v1086 = vadd.f32 %v973, %v1085
      %1087 = vmatmul.f32.gmra.mxu0 %v224
      %v1088 = vpop.f32.mrf.mxu0
      %v1089 = vadd.f32 %v976, %v1088
      %1090 = vmatmul.f32.gmra.mxu0 %v226
      %v1091 = vpop.f32.mrf.mxu0
      %v1092 = vadd.f32 %v979, %v1091
      %1093 = vmatmul.f32.gmra.mxu0 %v227
      %v1094 = vpop.f32.mrf.mxu0
      %v1095 = vadd.f32 %v982, %v1094
      %1096 = vdwg.mxu0
      %1097 = vmatpush.msra.mxu0 %v546
      %1098 = vmatpush.msra.mxu0 %v545
      %1099 = vmatpush.msra.mxu0 %v544
      %1100 = vmatpush.msra.mxu0 %v543
      %1101 = vmatpush.msra.mxu0 %v542
      %1102 = vmatpush.msra.mxu0 %v541
      %1103 = vmatpush.msra.mxu0 %v540
      %1104 = vmatpush.msra.mxu0 %v539
      %1105 = vmatpush.msra.mxu0 %v538
      %1106 = vmatpush.msra.mxu0 %v537
      %1107 = vmatpush.msra.mxu0 %v536
      %1108 = vmatpush.msra.mxu0 %v535
      %1109 = vmatpush.msra.mxu0 %v534
      %1110 = vmatpush.msra.mxu0 %v533
      %1111 = vmatpush.msra.mxu0 %v532
      %1112 = vmatpush.msra.mxu0 %v531
      %1113 = vmatmul.f32.gmra.mxu0 %v292
      %v1114 = vpop.f32.mrf.mxu0
      %v1115 = vadd.f32 %v1002, %v1114
      %1116 = vmatmul.f32.gmra.mxu0 %v294
      %v1117 = vpop.f32.mrf.mxu0
      %v1118 = vadd.f32 %v1005, %v1117
      %1119 = vmatmul.f32.gmra.mxu0 %v297
      %v1120 = vpop.f32.mrf.mxu0
      %v1121 = vadd.f32 %v1008, %v1120
      %1122 = vmatmul.f32.gmra.mxu0 %v299
      %v1123 = vpop.f32.mrf.mxu0
      %v1124 = vadd.f32 %v1011, %v1123
      %1125 = vmatmul.f32.gmra.mxu0 %v302
      %v1126 = vpop.f32.mrf.mxu0
      %v1127 = vadd.f32 %v1014, %v1126
      %1128 = vmatmul.f32.gmra.mxu0 %v304
      %v1129 = vpop.f32.mrf.mxu0
      %v1130 = vadd.f32 %v1017, %v1129
      %1131 = vmatmul.f32.gmra.mxu0 %v307
      %v1132 = vpop.f32.mrf.mxu0
      %v1133 = vadd.f32 %v1020, %v1132
      %1134 = vmatmul.f32.gmra.mxu0 %v309
      %v1135 = vpop.f32.mrf.mxu0
      %v1136 = vadd.f32 %v1023, %v1135
      %1137 = vmatmul.f32.gmra.mxu0 %v312
      %v1138 = vpop.f32.mrf.mxu0
      %v1139 = vadd.f32 %v1026, %v1138
      %1140 = vmatmul.f32.gmra.mxu0 %v314
      %v1141 = vpop.f32.mrf.mxu0
      %v1142 = vadd.f32 %v1029, %v1141
      %1143 = vmatmul.f32.gmra.mxu0 %v317
      %v1144 = vpop.f32.mrf.mxu0
      %v1145 = vadd.f32 %v1032, %v1144
      %1146 = vmatmul.f32.gmra.mxu0 %v319
      %v1147 = vpop.f32.mrf.mxu0
      %v1148 = vadd.f32 %v1035, %v1147
      %1149 = vmatmul.f32.gmra.mxu0 %v322
      %v1150 = vpop.f32.mrf.mxu0
      %v1151 = vadd.f32 %v1038, %v1150
      %1152 = vmatmul.f32.gmra.mxu0 %v324
      %v1153 = vpop.f32.mrf.mxu0
      %v1154 = vadd.f32 %v1041, %v1153
      %1155 = vmatmul.f32.gmra.mxu0 %v327
      %v1156 = vpop.f32.mrf.mxu0
      %v1157 = vadd.f32 %v1044, %v1156
      %1158 = vmatmul.f32.gmra.mxu0 %v329
      %v1159 = vpop.f32.mrf.mxu0
      %v1160 = vadd.f32 %v1047, %v1159
      %1161 = vmatmul.f32.gmra.mxu0 %v332
      %v1162 = vpop.f32.mrf.mxu0
      %v1163 = vadd.f32 %v1050, %v1162
      %1164 = vmatmul.f32.gmra.mxu0 %v334
      %v1165 = vpop.f32.mrf.mxu0
      %v1166 = vadd.f32 %v1053, %v1165
      %1167 = vmatmul.f32.gmra.mxu0 %v337
      %v1168 = vpop.f32.mrf.mxu0
      %v1169 = vadd.f32 %v1056, %v1168
      %1170 = vmatmul.f32.gmra.mxu0 %v339
      %v1171 = vpop.f32.mrf.mxu0
      %v1172 = vadd.f32 %v1059, %v1171
      %1173 = vmatmul.f32.gmra.mxu0 %v342
      %v1174 = vpop.f32.mrf.mxu0
      %v1175 = vadd.f32 %v1062, %v1174
      %1176 = vmatmul.f32.gmra.mxu0 %v344
      %v1177 = vpop.f32.mrf.mxu0
      %v1178 = vadd.f32 %v1065, %v1177
      %1179 = vmatmul.f32.gmra.mxu0 %v347
      %v1180 = vpop.f32.mrf.mxu0
      %v1181 = vadd.f32 %v1068, %v1180
      %1182 = vmatmul.f32.gmra.mxu0 %v349
      %v1183 = vpop.f32.mrf.mxu0
      %v1184 = vadd.f32 %v1071, %v1183
      %1185 = vmatmul.f32.gmra.mxu0 %v352
      %v1186 = vpop.f32.mrf.mxu0
      %v1187 = vadd.f32 %v1074, %v1186
      %1188 = vmatmul.f32.gmra.mxu0 %v354
      %v1189 = vpop.f32.mrf.mxu0
      %v1190 = vadd.f32 %v1077, %v1189
      %1191 = vmatmul.f32.gmra.mxu0 %v357
      %v1192 = vpop.f32.mrf.mxu0
      %v1193 = vadd.f32 %v1080, %v1192
      %1194 = vmatmul.f32.gmra.mxu0 %v359
      %v1195 = vpop.f32.mrf.mxu0
      %v1196 = vadd.f32 %v1083, %v1195
      %1197 = vmatmul.f32.gmra.mxu0 %v362
      %v1198 = vpop.f32.mrf.mxu0
      %v1199 = vadd.f32 %v1086, %v1198
      %1200 = vmatmul.f32.gmra.mxu0 %v364
      %v1201 = vpop.f32.mrf.mxu0
      %v1202 = vadd.f32 %v1089, %v1201
      %1203 = vmatmul.f32.gmra.mxu0 %v367
      %v1204 = vpop.f32.mrf.mxu0
      %v1205 = vadd.f32 %v1092, %v1204
      %1206 = vmatmul.f32.gmra.mxu0 %v369
      %v1207 = vpop.f32.mrf.mxu0
      %v1208 = vadd.f32 %v1095, %v1207
      %1209 = vdwg.mxu0
      %1210 = vmatpush.msra.mxu0 %v562
      %1211 = vmatpush.msra.mxu0 %v561
      %1212 = vmatpush.msra.mxu0 %v560
      %1213 = vmatpush.msra.mxu0 %v559
      %1214 = vmatpush.msra.mxu0 %v558
      %1215 = vmatpush.msra.mxu0 %v557
      %1216 = vmatpush.msra.mxu0 %v556
      %1217 = vmatpush.msra.mxu0 %v555
      %1218 = vmatpush.msra.mxu0 %v554
      %1219 = vmatpush.msra.mxu0 %v553
      %1220 = vmatpush.msra.mxu0 %v552
      %1221 = vmatpush.msra.mxu0 %v551
      %1222 = vmatpush.msra.mxu0 %v550
      %1223 = vmatpush.msra.mxu0 %v549
      %1224 = vmatpush.msra.mxu0 %v548
      %1225 = vmatpush.msra.mxu0 %v547
      %1226 = vmatmul.f32.gmra.mxu0 %v405
      %v1227 = vpop.f32.mrf.mxu0
      %v1228 = vadd.f32 %v1115, %v1227
      %1229 = vmatmul.f32.gmra.mxu0 %v407
      %v1230 = vpop.f32.mrf.mxu0
      %v1231 = vadd.f32 %v1118, %v1230
      %1232 = vmatmul.f32.gmra.mxu0 %v410
      %v1233 = vpop.f32.mrf.mxu0
      %v1234 = vadd.f32 %v1121, %v1233
      %1235 = vmatmul.f32.gmra.mxu0 %v412
      %v1236 = vpop.f32.mrf.mxu0
      %v1237 = vadd.f32 %v1124, %v1236
      %1238 = vmatmul.f32.gmra.mxu0 %v415
      %v1239 = vpop.f32.mrf.mxu0
      %v1240 = vadd.f32 %v1127, %v1239
      %1241 = vmatmul.f32.gmra.mxu0 %v417
      %v1242 = vpop.f32.mrf.mxu0
      %v1243 = vadd.f32 %v1130, %v1242
      %1244 = vmatmul.f32.gmra.mxu0 %v420
      %v1245 = vpop.f32.mrf.mxu0
      %v1246 = vadd.f32 %v1133, %v1245
      %1247 = vmatmul.f32.gmra.mxu0 %v422
      %v1248 = vpop.f32.mrf.mxu0
      %v1249 = vadd.f32 %v1136, %v1248
      %1250 = vmatmul.f32.gmra.mxu0 %v425
      %v1251 = vpop.f32.mrf.mxu0
      %v1252 = vadd.f32 %v1139, %v1251
      %1253 = vmatmul.f32.gmra.mxu0 %v427
      %v1254 = vpop.f32.mrf.mxu0
      %v1255 = vadd.f32 %v1142, %v1254
      %1256 = vmatmul.f32.gmra.mxu0 %v430
      %v1257 = vpop.f32.mrf.mxu0
      %v1258 = vadd.f32 %v1145, %v1257
      %1259 = vmatmul.f32.gmra.mxu0 %v432
      %v1260 = vpop.f32.mrf.mxu0
      %v1261 = vadd.f32 %v1148, %v1260
      %1262 = vmatmul.f32.gmra.mxu0 %v435
      %v1263 = vpop.f32.mrf.mxu0
      %v1264 = vadd.f32 %v1151, %v1263
      %1265 = vmatmul.f32.gmra.mxu0 %v437
      %v1266 = vpop.f32.mrf.mxu0
      %v1267 = vadd.f32 %v1154, %v1266
      %1268 = vmatmul.f32.gmra.mxu0 %v440
      %v1269 = vpop.f32.mrf.mxu0
      %v1270 = vadd.f32 %v1157, %v1269
      %1271 = vmatmul.f32.gmra.mxu0 %v442
      %v1272 = vpop.f32.mrf.mxu0
      %v1273 = vadd.f32 %v1160, %v1272
      %1274 = vmatmul.f32.gmra.mxu0 %v445
      %v1275 = vpop.f32.mrf.mxu0
      %v1276 = vadd.f32 %v1163, %v1275
      %1277 = vmatmul.f32.gmra.mxu0 %v447
      %v1278 = vpop.f32.mrf.mxu0
      %v1279 = vadd.f32 %v1166, %v1278
      %1280 = vmatmul.f32.gmra.mxu0 %v450
      %v1281 = vpop.f32.mrf.mxu0
      %v1282 = vadd.f32 %v1169, %v1281
      %1283 = vmatmul.f32.gmra.mxu0 %v452
      %v1284 = vpop.f32.mrf.mxu0
      %v1285 = vadd.f32 %v1172, %v1284
      %1286 = vmatmul.f32.gmra.mxu0 %v455
      %v1287 = vpop.f32.mrf.mxu0
      %v1288 = vadd.f32 %v1175, %v1287
      %1289 = vmatmul.f32.gmra.mxu0 %v457
      %v1290 = vpop.f32.mrf.mxu0
      %v1291 = vadd.f32 %v1178, %v1290
      %1292 = vmatmul.f32.gmra.mxu0 %v460
      %v1293 = vpop.f32.mrf.mxu0
      %v1294 = vadd.f32 %v1181, %v1293
      %1295 = vmatmul.f32.gmra.mxu0 %v462
      %v1296 = vpop.f32.mrf.mxu0
      %v1297 = vadd.f32 %v1184, %v1296
      %1298 = vmatmul.f32.gmra.mxu0 %v465
      %v1299 = vpop.f32.mrf.mxu0
      %v1300 = vadd.f32 %v1187, %v1299
      %1301 = vmatmul.f32.gmra.mxu0 %v467
      %v1302 = vpop.f32.mrf.mxu0
      %v1303 = vadd.f32 %v1190, %v1302
      %1304 = vmatmul.f32.gmra.mxu0 %v470
      %v1305 = vpop.f32.mrf.mxu0
      %v1306 = vadd.f32 %v1193, %v1305
      %1307 = vmatmul.f32.gmra.mxu0 %v472
      %v1308 = vpop.f32.mrf.mxu0
      %v1309 = vadd.f32 %v1196, %v1308
      %1310 = vmatmul.f32.gmra.mxu0 %v475
      %v1311 = vpop.f32.mrf.mxu0
      %v1312 = vadd.f32 %v1199, %v1311
      %1313 = vmatmul.f32.gmra.mxu0 %v477
      %v1314 = vpop.f32.mrf.mxu0
      %v1315 = vadd.f32 %v1202, %v1314
      %1316 = vmatmul.f32.gmra.mxu0 %v480
      %v1317 = vpop.f32.mrf.mxu0
      %v1318 = vadd.f32 %v1205, %v1317
      %1319 = vmatmul.f32.gmra.mxu0 %v482
      %v1320 = vpop.f32.mrf.mxu0
      %v1321 = vadd.f32 %v1208, %v1320
      %1322 = vdwg.mxu0
      %v1329 = vrot.slane %v235, 2
      %v1330 = vrot.slane %v236, 2
      %v1331 = vsel %vm289, %v1329, %v1330
      %v1332 = vrot.slane %v237, 2
      %v1333 = vsel %vm289, %v1330, %v1332
      %v1334 = vrot.slane %v238, 2
      %v1335 = vrot.slane %v239, 2
      %v1336 = vsel %vm289, %v1334, %v1335
      %v1337 = vrot.slane %v240, 2
      %v1338 = vsel %vm289, %v1335, %v1337
      %v1343 = vrot.slane %v235, 4
      %v1344 = vrot.slane %v236, 4
      %v1345 = vsel %vm402, %v1343, %v1344
      %v1346 = vrot.slane %v237, 4
      %v1347 = vsel %vm402, %v1344, %v1346
      %v1348 = vrot.slane %v238, 4
      %v1349 = vrot.slane %v239, 4
      %v1350 = vsel %vm402, %v1348, %v1349
      %v1351 = vrot.slane %v240, 4
      %v1352 = vsel %vm402, %v1349, %v1351
      %v1357 = vld [vmem:[%s172 + $0x300] sm:$0xff]
      %v1358 = vld [vmem:[%s172 + $0x308] sm:$0xff]
      %v1359 = vld [vmem:[%s172 + $0x310] sm:$0xff]
      %v1360 = vld [vmem:[%s172 + $0x318] sm:$0xff]
      %v1361 = vld [vmem:[%s172 + $0x320] sm:$0xff]
      %v1362 = vld [vmem:[%s172 + $0x328] sm:$0xff]
      %v1363 = vld [vmem:[%s172 + $0x330] sm:$0xff]
      %v1364 = vld [vmem:[%s172 + $0x338] sm:$0xff]
      %v1365 = vld [vmem:[%s172 + $0x340] sm:$0xff]
      %v1366 = vld [vmem:[%s172 + $0x348] sm:$0xff]
      %v1367 = vld [vmem:[%s172 + $0x350] sm:$0xff]
      %v1368 = vld [vmem:[%s172 + $0x358] sm:$0xff]
      %v1369 = vld [vmem:[%s172 + $0x360] sm:$0xff]
      %v1370 = vld [vmem:[%s172 + $0x368] sm:$0xff]
      %v1371 = vld [vmem:[%s172 + $0x370] sm:$0xff]
      %v1372 = vld [vmem:[%s172 + $0x378] sm:$0xff]
      %v1373 = vld [vmem:[%s172 + $0x380] sm:$0xff]
      %v1374 = vld [vmem:[%s172 + $0x388] sm:$0xff]
      %v1375 = vld [vmem:[%s172 + $0x390] sm:$0xff]
      %v1376 = vld [vmem:[%s172 + $0x398] sm:$0xff]
      %v1377 = vld [vmem:[%s172 + $0x3a0] sm:$0xff]
      %v1378 = vld [vmem:[%s172 + $0x3a8] sm:$0xff]
      %v1379 = vld [vmem:[%s172 + $0x3b0] sm:$0xff]
      %v1380 = vld [vmem:[%s172 + $0x3b8] sm:$0xff]
      %v1381 = vld [vmem:[%s172 + $0x3c0] sm:$0xff]
      %v1382 = vld [vmem:[%s172 + $0x3c8] sm:$0xff]
      %v1383 = vld [vmem:[%s172 + $0x3d0] sm:$0xff]
      %v1384 = vld [vmem:[%s172 + $0x3d8] sm:$0xff]
      %v1385 = vld [vmem:[%s172 + $0x3e0] sm:$0xff]
      %v1386 = vld [vmem:[%s172 + $0x3e8] sm:$0xff]
      %v1387 = vld [vmem:[%s172 + $0x3f0] sm:$0xff]
      %v1388 = vld [vmem:[%s172 + $0x3f8] sm:$0xff]
      %v1389 = vld [vmem:[%s172 + $0x400] sm:$0xff]
      %v1390 = vld [vmem:[%s172 + $0x408] sm:$0xff]
      %v1391 = vld [vmem:[%s172 + $0x410] sm:$0xff]
      %v1392 = vld [vmem:[%s172 + $0x418] sm:$0xff]
      %v1393 = vld [vmem:[%s172 + $0x420] sm:$0xff]
      %v1394 = vld [vmem:[%s172 + $0x428] sm:$0xff]
      %v1395 = vld [vmem:[%s172 + $0x430] sm:$0xff]
      %v1396 = vld [vmem:[%s172 + $0x438] sm:$0xff]
      %v1397 = vld [vmem:[%s172 + $0x440] sm:$0xff]
      %v1398 = vld [vmem:[%s172 + $0x448] sm:$0xff]
      %v1399 = vld [vmem:[%s172 + $0x450] sm:$0xff]
      %v1400 = vld [vmem:[%s172 + $0x458] sm:$0xff]
      %v1401 = vld [vmem:[%s172 + $0x460] sm:$0xff]
      %v1402 = vld [vmem:[%s172 + $0x468] sm:$0xff]
      %v1403 = vld [vmem:[%s172 + $0x470] sm:$0xff]
      %v1404 = vld [vmem:[%s172 + $0x478] sm:$0xff]
      %1405 = vmatpush.msra.mxu0 %v1372
      %1406 = vmatpush.msra.mxu0 %v1371
      %1407 = vmatpush.msra.mxu0 %v1370
      %1408 = vmatpush.msra.mxu0 %v1369
      %1409 = vmatpush.msra.mxu0 %v1368
      %1410 = vmatpush.msra.mxu0 %v1367
      %1411 = vmatpush.msra.mxu0 %v1366
      %1412 = vmatpush.msra.mxu0 %v1365
      %1413 = vmatpush.msra.mxu0 %v1364
      %1414 = vmatpush.msra.mxu0 %v1363
      %1415 = vmatpush.msra.mxu0 %v1362
      %1416 = vmatpush.msra.mxu0 %v1361
      %1417 = vmatpush.msra.mxu0 %v1360
      %1418 = vmatpush.msra.mxu0 %v1359
      %1419 = vmatpush.msra.mxu0 %v1358
      %1420 = vmatpush.msra.mxu0 %v1357
      %1421 = vmatmul.f32.gmra.mxu0 %v193
      %v1422 = vpop.f32.mrf.mxu0
      %v1423 = vadd.f32 0.0, %v1422
      %1424 = vmatmul.f32.gmra.mxu0 %v194
      %v1425 = vpop.f32.mrf.mxu0
      %v1426 = vadd.f32 0.0, %v1425
      %1427 = vmatmul.f32.gmra.mxu0 %v196
      %v1428 = vpop.f32.mrf.mxu0
      %v1429 = vadd.f32 0.0, %v1428
      %1430 = vmatmul.f32.gmra.mxu0 %v197
      %v1431 = vpop.f32.mrf.mxu0
      %v1432 = vadd.f32 0.0, %v1431
      %1433 = vmatmul.f32.gmra.mxu0 %v199
      %v1434 = vpop.f32.mrf.mxu0
      %v1435 = vadd.f32 0.0, %v1434
      %1436 = vmatmul.f32.gmra.mxu0 %v200
      %v1437 = vpop.f32.mrf.mxu0
      %v1438 = vadd.f32 0.0, %v1437
      %1439 = vmatmul.f32.gmra.mxu0 %v202
      %v1440 = vpop.f32.mrf.mxu0
      %v1441 = vadd.f32 0.0, %v1440
      %1442 = vmatmul.f32.gmra.mxu0 %v203
      %v1443 = vpop.f32.mrf.mxu0
      %v1444 = vadd.f32 0.0, %v1443
      %1445 = vmatmul.f32.gmra.mxu0 %v205
      %v1446 = vpop.f32.mrf.mxu0
      %v1447 = vadd.f32 0.0, %v1446
      %1448 = vmatmul.f32.gmra.mxu0 %v206
      %v1449 = vpop.f32.mrf.mxu0
      %v1450 = vadd.f32 0.0, %v1449
      %1451 = vmatmul.f32.gmra.mxu0 %v208
      %v1452 = vpop.f32.mrf.mxu0
      %v1453 = vadd.f32 0.0, %v1452
      %1454 = vmatmul.f32.gmra.mxu0 %v209
      %v1455 = vpop.f32.mrf.mxu0
      %v1456 = vadd.f32 0.0, %v1455
      %1457 = vmatmul.f32.gmra.mxu0 %v211
      %v1458 = vpop.f32.mrf.mxu0
      %v1459 = vadd.f32 0.0, %v1458
      %1460 = vmatmul.f32.gmra.mxu0 %v212
      %v1461 = vpop.f32.mrf.mxu0
      %v1462 = vadd.f32 0.0, %v1461
      %1463 = vmatmul.f32.gmra.mxu0 %v214
      %v1464 = vpop.f32.mrf.mxu0
      %v1465 = vadd.f32 0.0, %v1464
      %1466 = vmatmul.f32.gmra.mxu0 %v215
      %v1467 = vpop.f32.mrf.mxu0
      %v1468 = vadd.f32 0.0, %v1467
      %1469 = vmatmul.f32.gmra.mxu0 %v217
      %v1470 = vpop.f32.mrf.mxu0
      %v1471 = vadd.f32 0.0, %v1470
      %1472 = vmatmul.f32.gmra.mxu0 %v218
      %v1473 = vpop.f32.mrf.mxu0
      %v1474 = vadd.f32 0.0, %v1473
      %1475 = vmatmul.f32.gmra.mxu0 %v220
      %v1476 = vpop.f32.mrf.mxu0
      %v1477 = vadd.f32 0.0, %v1476
      %1478 = vmatmul.f32.gmra.mxu0 %v221
      %v1479 = vpop.f32.mrf.mxu0
      %v1480 = vadd.f32 0.0, %v1479
      %1481 = vmatmul.f32.gmra.mxu0 %v223
      %v1482 = vpop.f32.mrf.mxu0
      %v1483 = vadd.f32 0.0, %v1482
      %1484 = vmatmul.f32.gmra.mxu0 %v224
      %v1485 = vpop.f32.mrf.mxu0
      %v1486 = vadd.f32 0.0, %v1485
      %1487 = vmatmul.f32.gmra.mxu0 %v226
      %v1488 = vpop.f32.mrf.mxu0
      %v1489 = vadd.f32 0.0, %v1488
      %1490 = vmatmul.f32.gmra.mxu0 %v227
      %v1491 = vpop.f32.mrf.mxu0
      %v1492 = vadd.f32 0.0, %v1491
      %1493 = vmatmul.f32.gmra.mxu0 %v229
      %v1494 = vpop.f32.mrf.mxu0
      %v1495 = vadd.f32 0.0, %v1494
      %1496 = vmatmul.f32.gmra.mxu0 %v230
      %v1497 = vpop.f32.mrf.mxu0
      %v1498 = vadd.f32 0.0, %v1497
      %1499 = vmatmul.f32.gmra.mxu0 %v232
      %v1500 = vpop.f32.mrf.mxu0
      %v1501 = vadd.f32 0.0, %v1500
      %1502 = vmatmul.f32.gmra.mxu0 %v233
      %v1503 = vpop.f32.mrf.mxu0
      %v1504 = vadd.f32 0.0, %v1503
      %1505 = vmatmul.f32.gmra.mxu0 %v235
      %v1506 = vpop.f32.mrf.mxu0
      %v1507 = vadd.f32 0.0, %v1506
      %1508 = vmatmul.f32.gmra.mxu0 %v236
      %v1509 = vpop.f32.mrf.mxu0
      %v1510 = vadd.f32 0.0, %v1509
      %1511 = vmatmul.f32.gmra.mxu0 %v238
      %v1512 = vpop.f32.mrf.mxu0
      %v1513 = vadd.f32 0.0, %v1512
      %1514 = vmatmul.f32.gmra.mxu0 %v239
      %v1515 = vpop.f32.mrf.mxu0
      %v1516 = vadd.f32 0.0, %v1515
      %1517 = vdwg.mxu0
      %1518 = vmatpush.msra.mxu0 %v1388
      %1519 = vmatpush.msra.mxu0 %v1387
      %1520 = vmatpush.msra.mxu0 %v1386
      %1521 = vmatpush.msra.mxu0 %v1385
      %1522 = vmatpush.msra.mxu0 %v1384
      %1523 = vmatpush.msra.mxu0 %v1383
      %1524 = vmatpush.msra.mxu0 %v1382
      %1525 = vmatpush.msra.mxu0 %v1381
      %1526 = vmatpush.msra.mxu0 %v1380
      %1527 = vmatpush.msra.mxu0 %v1379
      %1528 = vmatpush.msra.mxu0 %v1378
      %1529 = vmatpush.msra.mxu0 %v1377
      %1530 = vmatpush.msra.mxu0 %v1376
      %1531 = vmatpush.msra.mxu0 %v1375
      %1532 = vmatpush.msra.mxu0 %v1374
      %1533 = vmatpush.msra.mxu0 %v1373
      %1534 = vmatmul.f32.gmra.mxu0 %v312
      %v1535 = vpop.f32.mrf.mxu0
      %v1536 = vadd.f32 %v1423, %v1535
      %1537 = vmatmul.f32.gmra.mxu0 %v314
      %v1538 = vpop.f32.mrf.mxu0
      %v1539 = vadd.f32 %v1426, %v1538
      %1540 = vmatmul.f32.gmra.mxu0 %v317
      %v1541 = vpop.f32.mrf.mxu0
      %v1542 = vadd.f32 %v1429, %v1541
      %1543 = vmatmul.f32.gmra.mxu0 %v319
      %v1544 = vpop.f32.mrf.mxu0
      %v1545 = vadd.f32 %v1432, %v1544
      %1546 = vmatmul.f32.gmra.mxu0 %v322
      %v1547 = vpop.f32.mrf.mxu0
      %v1548 = vadd.f32 %v1435, %v1547
      %1549 = vmatmul.f32.gmra.mxu0 %v324
      %v1550 = vpop.f32.mrf.mxu0
      %v1551 = vadd.f32 %v1438, %v1550
      %1552 = vmatmul.f32.gmra.mxu0 %v327
      %v1553 = vpop.f32.mrf.mxu0
      %v1554 = vadd.f32 %v1441, %v1553
      %1555 = vmatmul.f32.gmra.mxu0 %v329
      %v1556 = vpop.f32.mrf.mxu0
      %v1557 = vadd.f32 %v1444, %v1556
      %1558 = vmatmul.f32.gmra.mxu0 %v332
      %v1559 = vpop.f32.mrf.mxu0
      %v1560 = vadd.f32 %v1447, %v1559
      %1561 = vmatmul.f32.gmra.mxu0 %v334
      %v1562 = vpop.f32.mrf.mxu0
      %v1563 = vadd.f32 %v1450, %v1562
      %1564 = vmatmul.f32.gmra.mxu0 %v337
      %v1565 = vpop.f32.mrf.mxu0
      %v1566 = vadd.f32 %v1453, %v1565
      %1567 = vmatmul.f32.gmra.mxu0 %v339
      %v1568 = vpop.f32.mrf.mxu0
      %v1569 = vadd.f32 %v1456, %v1568
      %1570 = vmatmul.f32.gmra.mxu0 %v342
      %v1571 = vpop.f32.mrf.mxu0
      %v1572 = vadd.f32 %v1459, %v1571
      %1573 = vmatmul.f32.gmra.mxu0 %v344
      %v1574 = vpop.f32.mrf.mxu0
      %v1575 = vadd.f32 %v1462, %v1574
      %1576 = vmatmul.f32.gmra.mxu0 %v347
      %v1577 = vpop.f32.mrf.mxu0
      %v1578 = vadd.f32 %v1465, %v1577
      %1579 = vmatmul.f32.gmra.mxu0 %v349
      %v1580 = vpop.f32.mrf.mxu0
      %v1581 = vadd.f32 %v1468, %v1580
      %1582 = vmatmul.f32.gmra.mxu0 %v352
      %v1583 = vpop.f32.mrf.mxu0
      %v1584 = vadd.f32 %v1471, %v1583
      %1585 = vmatmul.f32.gmra.mxu0 %v354
      %v1586 = vpop.f32.mrf.mxu0
      %v1587 = vadd.f32 %v1474, %v1586
      %1588 = vmatmul.f32.gmra.mxu0 %v357
      %v1589 = vpop.f32.mrf.mxu0
      %v1590 = vadd.f32 %v1477, %v1589
      %1591 = vmatmul.f32.gmra.mxu0 %v359
      %v1592 = vpop.f32.mrf.mxu0
      %v1593 = vadd.f32 %v1480, %v1592
      %1594 = vmatmul.f32.gmra.mxu0 %v362
      %v1595 = vpop.f32.mrf.mxu0
      %v1596 = vadd.f32 %v1483, %v1595
      %1597 = vmatmul.f32.gmra.mxu0 %v364
      %v1598 = vpop.f32.mrf.mxu0
      %v1599 = vadd.f32 %v1486, %v1598
      %1600 = vmatmul.f32.gmra.mxu0 %v367
      %v1601 = vpop.f32.mrf.mxu0
      %v1602 = vadd.f32 %v1489, %v1601
      %1603 = vmatmul.f32.gmra.mxu0 %v369
      %v1604 = vpop.f32.mrf.mxu0
      %v1605 = vadd.f32 %v1492, %v1604
      %1606 = vmatmul.f32.gmra.mxu0 %v571
      %v1607 = vpop.f32.mrf.mxu0
      %v1608 = vadd.f32 %v1495, %v1607
      %1609 = vmatmul.f32.gmra.mxu0 %v573
      %v1610 = vpop.f32.mrf.mxu0
      %v1611 = vadd.f32 %v1498, %v1610
      %1612 = vmatmul.f32.gmra.mxu0 %v576
      %v1613 = vpop.f32.mrf.mxu0
      %v1614 = vadd.f32 %v1501, %v1613
      %1615 = vmatmul.f32.gmra.mxu0 %v578
      %v1616 = vpop.f32.mrf.mxu0
      %v1617 = vadd.f32 %v1504, %v1616
      %1618 = vmatmul.f32.gmra.mxu0 %v1331
      %v1619 = vpop.f32.mrf.mxu0
      %v1620 = vadd.f32 %v1507, %v1619
      %1621 = vmatmul.f32.gmra.mxu0 %v1333
      %v1622 = vpop.f32.mrf.mxu0
      %v1623 = vadd.f32 %v1510, %v1622
      %1624 = vmatmul.f32.gmra.mxu0 %v1336
      %v1625 = vpop.f32.mrf.mxu0
      %v1626 = vadd.f32 %v1513, %v1625
      %1627 = vmatmul.f32.gmra.mxu0 %v1338
      %v1628 = vpop.f32.mrf.mxu0
      %v1629 = vadd.f32 %v1516, %v1628
      %1630 = vdwg.mxu0
      %1631 = vmatpush.msra.mxu0 %v1404
      %1632 = vmatpush.msra.mxu0 %v1403
      %1633 = vmatpush.msra.mxu0 %v1402
      %1634 = vmatpush.msra.mxu0 %v1401
      %1635 = vmatpush.msra.mxu0 %v1400
      %1636 = vmatpush.msra.mxu0 %v1399
      %1637 = vmatpush.msra.mxu0 %v1398
      %1638 = vmatpush.msra.mxu0 %v1397
      %1639 = vmatpush.msra.mxu0 %v1396
      %1640 = vmatpush.msra.mxu0 %v1395
      %1641 = vmatpush.msra.mxu0 %v1394
      %1642 = vmatpush.msra.mxu0 %v1393
      %1643 = vmatpush.msra.mxu0 %v1392
      %1644 = vmatpush.msra.mxu0 %v1391
      %1645 = vmatpush.msra.mxu0 %v1390
      %1646 = vmatpush.msra.mxu0 %v1389
      %1647 = vmatmul.f32.gmra.mxu0 %v425
      %v1648 = vpop.f32.mrf.mxu0
      %v1649 = vadd.f32 %v1536, %v1648
      %1650 = vmatmul.f32.gmra.mxu0 %v427
      %v1651 = vpop.f32.mrf.mxu0
      %v1652 = vadd.f32 %v1539, %v1651
      %1653 = vmatmul.f32.gmra.mxu0 %v430
      %v1654 = vpop.f32.mrf.mxu0
      %v1655 = vadd.f32 %v1542, %v1654
      %1656 = vmatmul.f32.gmra.mxu0 %v432
      %v1657 = vpop.f32.mrf.mxu0
      %v1658 = vadd.f32 %v1545, %v1657
      %1659 = vmatmul.f32.gmra.mxu0 %v435
      %v1660 = vpop.f32.mrf.mxu0
      %v1661 = vadd.f32 %v1548, %v1660
      %1662 = vmatmul.f32.gmra.mxu0 %v437
      %v1663 = vpop.f32.mrf.mxu0
      %v1664 = vadd.f32 %v1551, %v1663
      %1665 = vmatmul.f32.gmra.mxu0 %v440
      %v1666 = vpop.f32.mrf.mxu0
      %v1667 = vadd.f32 %v1554, %v1666
      %1668 = vmatmul.f32.gmra.mxu0 %v442
      %v1669 = vpop.f32.mrf.mxu0
      %v1670 = vadd.f32 %v1557, %v1669
      %1671 = vmatmul.f32.gmra.mxu0 %v445
      %v1672 = vpop.f32.mrf.mxu0
      %v1673 = vadd.f32 %v1560, %v1672
      %1674 = vmatmul.f32.gmra.mxu0 %v447
      %v1675 = vpop.f32.mrf.mxu0
      %v1676 = vadd.f32 %v1563, %v1675
      %1677 = vmatmul.f32.gmra.mxu0 %v450
      %v1678 = vpop.f32.mrf.mxu0
      %v1679 = vadd.f32 %v1566, %v1678
      %1680 = vmatmul.f32.gmra.mxu0 %v452
      %v1681 = vpop.f32.mrf.mxu0
      %v1682 = vadd.f32 %v1569, %v1681
      %1683 = vmatmul.f32.gmra.mxu0 %v455
      %v1684 = vpop.f32.mrf.mxu0
      %v1685 = vadd.f32 %v1572, %v1684
      %1686 = vmatmul.f32.gmra.mxu0 %v457
      %v1687 = vpop.f32.mrf.mxu0
      %v1688 = vadd.f32 %v1575, %v1687
      %1689 = vmatmul.f32.gmra.mxu0 %v460
      %v1690 = vpop.f32.mrf.mxu0
      %v1691 = vadd.f32 %v1578, %v1690
      %1692 = vmatmul.f32.gmra.mxu0 %v462
      %v1693 = vpop.f32.mrf.mxu0
      %v1694 = vadd.f32 %v1581, %v1693
      %1695 = vmatmul.f32.gmra.mxu0 %v465
      %v1696 = vpop.f32.mrf.mxu0
      %v1697 = vadd.f32 %v1584, %v1696
      %1698 = vmatmul.f32.gmra.mxu0 %v467
      %v1699 = vpop.f32.mrf.mxu0
      %v1700 = vadd.f32 %v1587, %v1699
      %1701 = vmatmul.f32.gmra.mxu0 %v470
      %v1702 = vpop.f32.mrf.mxu0
      %v1703 = vadd.f32 %v1590, %v1702
      %1704 = vmatmul.f32.gmra.mxu0 %v472
      %v1705 = vpop.f32.mrf.mxu0
      %v1706 = vadd.f32 %v1593, %v1705
      %1707 = vmatmul.f32.gmra.mxu0 %v475
      %v1708 = vpop.f32.mrf.mxu0
      %v1709 = vadd.f32 %v1596, %v1708
      %1710 = vmatmul.f32.gmra.mxu0 %v477
      %v1711 = vpop.f32.mrf.mxu0
      %v1712 = vadd.f32 %v1599, %v1711
      %1713 = vmatmul.f32.gmra.mxu0 %v480
      %v1714 = vpop.f32.mrf.mxu0
      %v1715 = vadd.f32 %v1602, %v1714
      %1716 = vmatmul.f32.gmra.mxu0 %v482
      %v1717 = vpop.f32.mrf.mxu0
      %v1718 = vadd.f32 %v1605, %v1717
      %1719 = vmatmul.f32.gmra.mxu0 %v585
      %v1720 = vpop.f32.mrf.mxu0
      %v1721 = vadd.f32 %v1608, %v1720
      %1722 = vmatmul.f32.gmra.mxu0 %v587
      %v1723 = vpop.f32.mrf.mxu0
      %v1724 = vadd.f32 %v1611, %v1723
      %1725 = vmatmul.f32.gmra.mxu0 %v590
      %v1726 = vpop.f32.mrf.mxu0
      %v1727 = vadd.f32 %v1614, %v1726
      %1728 = vmatmul.f32.gmra.mxu0 %v592
      %v1729 = vpop.f32.mrf.mxu0
      %v1730 = vadd.f32 %v1617, %v1729
      %1731 = vmatmul.f32.gmra.mxu0 %v1345
      %v1732 = vpop.f32.mrf.mxu0
      %v1733 = vadd.f32 %v1620, %v1732
      %1734 = vmatmul.f32.gmra.mxu0 %v1347
      %v1735 = vpop.f32.mrf.mxu0
      %v1736 = vadd.f32 %v1623, %v1735
      %1737 = vmatmul.f32.gmra.mxu0 %v1350
      %v1738 = vpop.f32.mrf.mxu0
      %v1739 = vadd.f32 %v1626, %v1738
      %1740 = vmatmul.f32.gmra.mxu0 %v1352
      %v1741 = vpop.f32.mrf.mxu0
      %v1742 = vadd.f32 %v1629, %v1741
      %1743 = vdwg.mxu0
      %v1744 = vadd.f32 %v1228, %v1649
      %v1745 = vadd.f32 %v1231, %v1652
      %v1746 = vadd.f32 %v1234, %v1655
      %v1747 = vadd.f32 %v1237, %v1658
      %v1748 = vadd.f32 %v1240, %v1661
      %v1749 = vadd.f32 %v1243, %v1664
      %v1750 = vadd.f32 %v1246, %v1667
      %v1751 = vadd.f32 %v1249, %v1670
      %v1752 = vadd.f32 %v1252, %v1673
      %v1753 = vadd.f32 %v1255, %v1676
      %v1754 = vadd.f32 %v1258, %v1679
      %v1755 = vadd.f32 %v1261, %v1682
      %v1756 = vadd.f32 %v1264, %v1685
      %v1757 = vadd.f32 %v1267, %v1688
      %v1758 = vadd.f32 %v1270, %v1691
      %v1759 = vadd.f32 %v1273, %v1694
      %v1760 = vadd.f32 %v1276, %v1697
      %v1761 = vadd.f32 %v1279, %v1700
      %v1762 = vadd.f32 %v1282, %v1703
      %v1763 = vadd.f32 %v1285, %v1706
      %v1764 = vadd.f32 %v1288, %v1709
      %v1765 = vadd.f32 %v1291, %v1712
      %v1766 = vadd.f32 %v1294, %v1715
      %v1767 = vadd.f32 %v1297, %v1718
      %v1768 = vadd.f32 %v1300, %v1721
      %v1769 = vadd.f32 %v1303, %v1724
      %v1770 = vadd.f32 %v1306, %v1727
      %v1771 = vadd.f32 %v1309, %v1730
      %v1772 = vadd.f32 %v1312, %v1733
      %v1773 = vadd.f32 %v1315, %v1736
      %v1774 = vadd.f32 %v1318, %v1739
      %v1775 = vadd.f32 %v1321, %v1742
      %v1776 = vadd.f32 %v1744, %v1745
      %v1777 = vadd.f32 %v1776, %v1746
      %v1778 = vadd.f32 %v1777, %v1747
      %v1779 = vadd.f32 %v1778, %v1748
      %v1780 = vadd.f32 %v1779, %v1749
      %v1781 = vadd.f32 %v1780, %v1750
      %v1782 = vadd.f32 %v1781, %v1751
      %v1783 = vadd.f32 %v1782, %v1752
      %v1784 = vadd.f32 %v1783, %v1753
      %v1785 = vadd.f32 %v1784, %v1754
      %v1786 = vadd.f32 %v1785, %v1755
      %v1787 = vadd.f32 %v1786, %v1756
      %v1788 = vadd.f32 %v1787, %v1757
      %v1789 = vadd.f32 %v1788, %v1758
      %v1790 = vadd.f32 %v1789, %v1759
      %v1791 = vadd.f32 %v1790, %v1760
      %v1792 = vadd.f32 %v1791, %v1761
      %v1793 = vadd.f32 %v1792, %v1762
      %v1794 = vadd.f32 %v1793, %v1763
      %v1795 = vadd.f32 %v1794, %v1764
      %v1796 = vadd.f32 %v1795, %v1765
      %v1797 = vadd.f32 %v1796, %v1766
      %v1798 = vadd.f32 %v1797, %v1767
      %v1799 = vadd.f32 %v1798, %v1768
      %v1800 = vadd.f32 %v1799, %v1769
      %v1801 = vadd.f32 %v1800, %v1770
      %v1802 = vadd.f32 %v1801, %v1771
      %v1803 = vadd.f32 %v1802, %v1772
      %v1804 = vadd.f32 %v1803, %v1773
      %v1805 = vadd.f32 %v1804, %v1774
      %v1806 = vadd.f32 %v1805, %v1775
      %v1807 = vrot.slane %v1806, 4
      %v1808 = vadd.f32 %v1806, %v1807
      %v1809 = vrot.slane %v1808, 2
      %v1810 = vadd.f32 %v1808, %v1809
      %v1811 = vrot.slane %v1810, 1
      %v1812 = vadd.f32 %v1810, %v1811
      %v1813 = vrcp.pop 256.0
      %v1814 = vmul.f32 256.0, %v1813
      %v1815 = vsub.f32 1.0, %v1814
      %v1816 = vmul.f32 %v1813, %v1815
      %v1817 = vadd.f32 %v1813, %v1816
      %vm1818 = vweird.f32 %v1813
      %v1819 = vsel %vm1818, %v1813, %v1817
      %v1820 = vmul.f32 %v1812, %v1819
      %v1821 = vsub.f32 %v1744, %v1820
      %v1822 = vsub.f32 %v1745, %v1820
      %v1823 = vsub.f32 %v1746, %v1820
      %v1824 = vsub.f32 %v1747, %v1820
      %v1825 = vsub.f32 %v1748, %v1820
      %v1826 = vsub.f32 %v1749, %v1820
      %v1827 = vsub.f32 %v1750, %v1820
      %v1828 = vsub.f32 %v1751, %v1820
      %v1829 = vsub.f32 %v1752, %v1820
      %v1830 = vsub.f32 %v1753, %v1820
      %v1831 = vsub.f32 %v1754, %v1820
      %v1832 = vsub.f32 %v1755, %v1820
      %v1833 = vsub.f32 %v1756, %v1820
      %v1834 = vsub.f32 %v1757, %v1820
      %v1835 = vsub.f32 %v1758, %v1820
      %v1836 = vsub.f32 %v1759, %v1820
      %v1837 = vsub.f32 %v1760, %v1820
      %v1838 = vsub.f32 %v1761, %v1820
      %v1839 = vsub.f32 %v1762, %v1820
      %v1840 = vsub.f32 %v1763, %v1820
      %v1841 = vsub.f32 %v1764, %v1820
      %v1842 = vsub.f32 %v1765, %v1820
      %v1843 = vsub.f32 %v1766, %v1820
      %v1844 = vsub.f32 %v1767, %v1820
      %v1845 = vsub.f32 %v1768, %v1820
      %v1846 = vsub.f32 %v1769, %v1820
      %v1847 = vsub.f32 %v1770, %v1820
      %v1848 = vsub.f32 %v1771, %v1820
      %v1849 = vsub.f32 %v1772, %v1820
      %v1850 = vsub.f32 %v1773, %v1820
      %v1851 = vsub.f32 %v1774, %v1820
      %v1852 = vsub.f32 %v1775, %v1820
      %v1853 = vmul.f32 %v1821, %v1821
      %v1854 = vmul.f32 %v1822, %v1822
      %v1855 = vmul.f32 %v1823, %v1823
      %v1856 = vmul.f32 %v1824, %v1824
      %v1857 = vmul.f32 %v1825, %v1825
      %v1858 = vmul.f32 %v1826, %v1826
      %v1859 = vmul.f32 %v1827, %v1827
      %v1860 = vmul.f32 %v1828, %v1828
      %v1861 = vmul.f32 %v1829, %v1829
      %v1862 = vmul.f32 %v1830, %v1830
      %v1863 = vmul.f32 %v1831, %v1831
      %v1864 = vmul.f32 %v1832, %v1832
      %v1865 = vmul.f32 %v1833, %v1833
      %v1866 = vmul.f32 %v1834, %v1834
      %v1867 = vmul.f32 %v1835, %v1835
      %v1868 = vmul.f32 %v1836, %v1836
      %v1869 = vmul.f32 %v1837, %v1837
      %v1870 = vmul.f32 %v1838, %v1838
      %v1871 = vmul.f32 %v1839, %v1839
      %v1872 = vmul.f32 %v1840, %v1840
      %v1873 = vmul.f32 %v1841, %v1841
      %v1874 = vmul.f32 %v1842, %v1842
      %v1875 = vmul.f32 %v1843, %v1843
      %v1876 = vmul.f32 %v1844, %v1844
      %v1877 = vmul.f32 %v1845, %v1845
      %v1878 = vmul.f32 %v1846, %v1846
      %v1879 = vmul.f32 %v1847, %v1847
      %v1880 = vmul.f32 %v1848, %v1848
      %v1881 = vmul.f32 %v1849, %v1849
      %v1882 = vmul.f32 %v1850, %v1850
      %v1883 = vmul.f32 %v1851, %v1851
      %v1884 = vmul.f32 %v1852, %v1852
      %v1885 = vadd.f32 %v1853, %v1854
      %v1886 = vadd.f32 %v1885, %v1855
      %v1887 = vadd.f32 %v1886, %v1856
      %v1888 = vadd.f32 %v1887, %v1857
      %v1889 = vadd.f32 %v1888, %v1858
      %v1890 = vadd.f32 %v1889, %v1859
      %v1891 = vadd.f32 %v1890, %v1860
      %v1892 = vadd.f32 %v1891, %v1861
      %v1893 = vadd.f32 %v1892, %v1862
      %v1894 = vadd.f32 %v1893, %v1863
      %v1895 = vadd.f32 %v1894, %v1864
      %v1896 = vadd.f32 %v1895, %v1865
      %v1897 = vadd.f32 %v1896, %v1866
      %v1898 = vadd.f32 %v1897, %v1867
      %v1899 = vadd.f32 %v1898, %v1868
      %v1900 = vadd.f32 %v1899, %v1869
      %v1901 = vadd.f32 %v1900, %v1870
      %v1902 = vadd.f32 %v1901, %v1871
      %v1903 = vadd.f32 %v1902, %v1872
      %v1904 = vadd.f32 %v1903, %v1873
      %v1905 = vadd.f32 %v1904, %v1874
      %v1906 = vadd.f32 %v1905, %v1875
      %v1907 = vadd.f32 %v1906, %v1876
      %v1908 = vadd.f32 %v1907, %v1877
      %v1909 = vadd.f32 %v1908, %v1878
      %v1910 = vadd.f32 %v1909, %v1879
      %v1911 = vadd.f32 %v1910, %v1880
      %v1912 = vadd.f32 %v1911, %v1881
      %v1913 = vadd.f32 %v1912, %v1882
      %v1914 = vadd.f32 %v1913, %v1883
      %v1915 = vadd.f32 %v1914, %v1884
      %v1916 = vrot.slane %v1915, 4
      %v1917 = vadd.f32 %v1915, %v1916
      %v1918 = vrot.slane %v1917, 2
      %v1919 = vadd.f32 %v1917, %v1918
      %v1920 = vrot.slane %v1919, 1
      %v1921 = vadd.f32 %v1919, %v1920
      %v1922 = vmul.f32 %v1921, %v1819
      %v1923 = vadd.f32 %v1922, 1e-05
      %v1924 = vrsqrt.pop %v1923
      %v1925 = vmul.f32 %v1924, %v1923
      %v1926 = vmul.f32 %v1925, %v1924
      %v1927 = vmul.f32 0.5, %v1926
      %v1928 = vsub.f32 1.5, %v1927
      %v1929 = vmul.f32 %v1924, %v1928
      %vm1930 = vweird.f32 %v1923
      %vm1931 = vweird.f32 %v1924
      %vm1932 = vmor %vm1930, %vm1931
      %v1933 = vsel %vm1932, %v1924, %v1929
      %v1934 = vmul.f32 %v1821, %v1933
      %v1935 = vmul.f32 %v1822, %v1933
      %v1936 = vmul.f32 %v1823, %v1933
      %v1937 = vmul.f32 %v1824, %v1933
      %v1938 = vmul.f32 %v1825, %v1933
      %v1939 = vmul.f32 %v1826, %v1933
      %v1940 = vmul.f32 %v1827, %v1933
      %v1941 = vmul.f32 %v1828, %v1933
      %v1942 = vmul.f32 %v1829, %v1933
      %v1943 = vmul.f32 %v1830, %v1933
      %v1944 = vmul.f32 %v1831, %v1933
      %v1945 = vmul.f32 %v1832, %v1933
      %v1946 = vmul.f32 %v1833, %v1933
      %v1947 = vmul.f32 %v1834, %v1933
      %v1948 = vmul.f32 %v1835, %v1933
      %v1949 = vmul.f32 %v1836, %v1933
      %v1950 = vmul.f32 %v1837, %v1933
      %v1951 = vmul.f32 %v1838, %v1933
      %v1952 = vmul.f32 %v1839, %v1933
      %v1953 = vmul.f32 %v1840, %v1933
      %v1954 = vmul.f32 %v1841, %v1933
      %v1955 = vmul.f32 %v1842, %v1933
      %v1956 = vmul.f32 %v1843, %v1933
      %v1957 = vmul.f32 %v1844, %v1933
      %v1958 = vmul.f32 %v1845, %v1933
      %v1959 = vmul.f32 %v1846, %v1933
      %v1960 = vmul.f32 %v1847, %v1933
      %v1961 = vmul.f32 %v1848, %v1933
      %v1962 = vmul.f32 %v1849, %v1933
      %v1963 = vmul.f32 %v1850, %v1933
      %v1964 = vmul.f32 %v1851, %v1933
      %v1965 = vmul.f32 %v1852, %v1933
      %v1966 = vmax.f32 %v1934, 0.0
      %v1967 = vmax.f32 %v1935, 0.0
      %v1968 = vmax.f32 %v1936, 0.0
      %v1969 = vmax.f32 %v1937, 0.0
      %v1970 = vmax.f32 %v1938, 0.0
      %v1971 = vmax.f32 %v1939, 0.0
      %v1972 = vmax.f32 %v1940, 0.0
      %v1973 = vmax.f32 %v1941, 0.0
      %v1974 = vmax.f32 %v1942, 0.0
      %v1975 = vmax.f32 %v1943, 0.0
      %v1976 = vmax.f32 %v1944, 0.0
      %v1977 = vmax.f32 %v1945, 0.0
      %v1978 = vmax.f32 %v1946, 0.0
      %v1979 = vmax.f32 %v1947, 0.0
      %v1980 = vmax.f32 %v1948, 0.0
      %v1981 = vmax.f32 %v1949, 0.0
      %v1982 = vmax.f32 %v1950, 0.0
      %v1983 = vmax.f32 %v1951, 0.0
      %v1984 = vmax.f32 %v1952, 0.0
      %v1985 = vmax.f32 %v1953, 0.0
      %v1986 = vmax.f32 %v1954, 0.0
      %v1987 = vmax.f32 %v1955, 0.0
      %v1988 = vmax.f32 %v1956, 0.0
      %v1989 = vmax.f32 %v1957, 0.0
      %v1990 = vmax.f32 %v1958, 0.0
      %v1991 = vmax.f32 %v1959, 0.0
      %v1992 = vmax.f32 %v1960, 0.0
      %v1993 = vmax.f32 %v1961, 0.0
      %v1994 = vmax.f32 %v1962, 0.0
      %v1995 = vmax.f32 %v1963, 0.0
      %v1996 = vmax.f32 %v1964, 0.0
      %v1997 = vmax.f32 %v1965, 0.0
      %v2014 = vrot.slane %v1968, 1
      %v2015 = vrot.slane %v1966, 1
      %v2016 = vrot.slane %v1970, 1
      %v2017 = vrot.slane %v1972, 1
      %v2018 = vrot.slane %v1974, 1
      %v2019 = vrot.slane %v1976, 1
      %v2020 = vrot.slane %v1978, 1
      %v2021 = vrot.slane %v1980, 1
      %v2022 = vrot.slane %v1982, 1
      %v2023 = vrot.slane %v1984, 1
      %v2024 = vrot.slane %v1986, 1
      %v2025 = vrot.slane %v1988, 1
      %v2026 = vrot.slane %v1990, 1
      %v2027 = vrot.slane %v1992, 1
      %v2028 = vrot.slane %v1994, 1
      %v2029 = vrot.slane %v1996, 1
      %vm2062 = vcmask 1040384
      %v2063 = vrot.slane %v1968, 7
      %v2064 = vrot.slane %v1969, 7
      %v2065 = vsel %vm2062, %v2063, %v2064
      %v2066 = vrot.slane %v1966, 7
      %v2067 = vrot.slane %v1967, 7
      %v2068 = vsel %vm2062, %v2066, %v2067
      %v2069 = vrot.slane %v1970, 7
      %v2070 = vrot.slane %v1971, 7
      %v2071 = vsel %vm2062, %v2069, %v2070
      %v2072 = vrot.slane %v1972, 7
      %v2073 = vrot.slane %v1973, 7
      %v2074 = vsel %vm2062, %v2072, %v2073
      %v2075 = vrot.slane %v1974, 7
      %v2076 = vrot.slane %v1975, 7
      %v2077 = vsel %vm2062, %v2075, %v2076
      %v2078 = vrot.slane %v1976, 7
      %v2079 = vrot.slane %v1977, 7
      %v2080 = vsel %vm2062, %v2078, %v2079
      %v2081 = vrot.slane %v1978, 7
      %v2082 = vrot.slane %v1979, 7
      %v2083 = vsel %vm2062, %v2081, %v2082
      %v2084 = vrot.slane %v1980, 7
      %v2085 = vrot.slane %v1981, 7
      %v2086 = vsel %vm2062, %v2084, %v2085
      %v2087 = vrot.slane %v1982, 7
      %v2088 = vrot.slane %v1983, 7
      %v2089 = vsel %vm2062, %v2087, %v2088
      %v2090 = vrot.slane %v1984, 7
      %v2091 = vrot.slane %v1985, 7
      %v2092 = vsel %vm2062, %v2090, %v2091
      %v2093 = vrot.slane %v1986, 7
      %v2094 = vrot.slane %v1987, 7
      %v2095 = vsel %vm2062, %v2093, %v2094
      %v2096 = vrot.slane %v1988, 7
      %v2097 = vrot.slane %v1989, 7
      %v2098 = vsel %vm2062, %v2096, %v2097
      %v2099 = vrot.slane %v1990, 7
      %v2100 = vrot.slane %v1991, 7
      %v2101 = vsel %vm2062, %v2099, %v2100
      %v2102 = vrot.slane %v1992, 7
      %v2103 = vrot.slane %v1993, 7
      %v2104 = vsel %vm2062, %v2102, %v2103
      %v2105 = vrot.slane %v1994, 7
      %v2106 = vrot.slane %v1995, 7
      %v2107 = vsel %vm2062, %v2105, %v2106
      %v2108 = vrot.slane %v1996, 7
      %v2109 = vrot.slane %v1997, 7
      %v2110 = vsel %vm2062, %v2108, %v2109
      %v2159 = vrot.slane %v1969, 5
      %v2160 = vrot.slane %v1967, 5
      %v2161 = vrot.slane %v1971, 5
      %v2162 = vrot.slane %v1973, 5
      %v2163 = vrot.slane %v1975, 5
      %v2164 = vrot.slane %v1977, 5
      %v2165 = vrot.slane %v1979, 5
      %v2166 = vrot.slane %v1981, 5
      %v2167 = vrot.slane %v1983, 5
      %v2168 = vrot.slane %v1985, 5
      %v2169 = vrot.slane %v1987, 5
      %v2170 = vrot.slane %v1989, 5
      %v2171 = vrot.slane %v1991, 5
      %v2172 = vrot.slane %v1993, 5
      %v2173 = vrot.slane %v1995, 5
      %v2174 = vrot.slane %v1997, 5
      %v2191 = vsel %vm2062, %v2014, %v2063
      %v2192 = vsel %vm2062, %v2015, %v2066
      %v2193 = vsel %vm2062, %v2016, %v2069
      %v2194 = vsel %vm2062, %v2017, %v2072
      %v2195 = vsel %vm2062, %v2018, %v2075
      %v2196 = vsel %vm2062, %v2019, %v2078
      %v2197 = vsel %vm2062, %v2020, %v2081
      %v2198 = vsel %vm2062, %v2021, %v2084
      %v2199 = vsel %vm2062, %v2022, %v2087
      %v2200 = vsel %vm2062, %v2023, %v2090
      %v2201 = vsel %vm2062, %v2024, %v2093
      %v2202 = vsel %vm2062, %v2025, %v2096
      %v2203 = vsel %vm2062, %v2026, %v2099
      %v2204 = vsel %vm2062, %v2027, %v2102
      %v2205 = vsel %vm2062, %v2028, %v2105
      %v2206 = vsel %vm2062, %v2029, %v2108
      %v2207 = vsel %vm2062, %v2064, %v2159
      %v2208 = vsel %vm2062, %v2067, %v2160
      %v2209 = vsel %vm2062, %v2070, %v2161
      %v2210 = vsel %vm2062, %v2073, %v2162
      %v2211 = vsel %vm2062, %v2076, %v2163
      %v2212 = vsel %vm2062, %v2079, %v2164
      %v2213 = vsel %vm2062, %v2082, %v2165
      %v2214 = vsel %vm2062, %v2085, %v2166
      %v2215 = vsel %vm2062, %v2088, %v2167
      %v2216 = vsel %vm2062, %v2091, %v2168
      %v2217 = vsel %vm2062, %v2094, %v2169
      %v2218 = vsel %vm2062, %v2097, %v2170
      %v2219 = vsel %vm2062, %v2100, %v2171
      %v2220 = vsel %vm2062, %v2103, %v2172
      %v2221 = vsel %vm2062, %v2106, %v2173
      %v2222 = vsel %vm2062, %v2109, %v2174
      %2223 = vst [vmem:[%s180] sm:$0xff] %v2191
      %2224 = vst [vmem:[%s180 + $0x8] sm:$0xff] %v2065
      %2225 = vst [vmem:[%s180 + $0x10] sm:$0x3] %v2207
      %2226 = vst [vmem:[%s180 + $0x18] sm:$0xff] %v2192
      %2227 = vst [vmem:[%s180 + $0x20] sm:$0xff] %v2068
      %2228 = vst [vmem:[%s180 + $0x28] sm:$0x3] %v2208
      %2229 = vst [vmem:[%s180 + $0x30] sm:$0xff] %v2191
      %2230 = vst [vmem:[%s180 + $0x38] sm:$0xff] %v2065
      %2231 = vst [vmem:[%s180 + $0x40] sm:$0x3] %v2207
      %2232 = vst [vmem:[%s180 + $0x48] sm:$0xff] %v2193
      %2233 = vst [vmem:[%s180 + $0x50] sm:$0xff] %v2071
      %2234 = vst [vmem:[%s180 + $0x58] sm:$0x3] %v2209
      %2235 = vst [vmem:[%s180 + $0x60] sm:$0xff] %v2194
      %2236 = vst [vmem:[%s180 + $0x68] sm:$0xff] %v2074
      %2237 = vst [vmem:[%s180 + $0x70] sm:$0x3] %v2210
      %2238 = vst [vmem:[%s180 + $0x78] sm:$0xff] %v2195
      %2239 = vst [vmem:[%s180 + $0x80] sm:$0xff] %v2077
      %2240 = vst [vmem:[%s180 + $0x88] sm:$0x3] %v2211
      %2241 = vst [vmem:[%s180 + $0x90] sm:$0xff] %v2196
      %2242 = vst [vmem:[%s180 + $0x98] sm:$0xff] %v2080
      %2243 = vst [vmem:[%s180 + $0xa0] sm:$0x3] %v2212
      %2244 = vst [vmem:[%s180 + $0xa8] sm:$0xff] %v2197
      %2245 = vst [vmem:[%s180 + $0xb0] sm:$0xff] %v2083
      %2246 = vst [vmem:[%s180 + $0xb8] sm:$0x3] %v2213
      %2247 = vst [vmem:[%s180 + $0xc0] sm:$0xff] %v2198
      %2248 = vst [vmem:[%s180 + $0xc8] sm:$0xff] %v2086
      %2249 = vst [vmem:[%s180 + $0xd0] sm:$0x3] %v2214
      %2250 = vst [vmem:[%s180 + $0xd8] sm:$0xff] %v2199
      %2251 = vst [vmem:[%s180 + $0xe0] sm:$0xff] %v2089
      %2252 = vst [vmem:[%s180 + $0xe8] sm:$0x3] %v2215
      %2253 = vst [vmem:[%s180 + $0xf0] sm:$0xff] %v2200
      %2254 = vst [vmem:[%s180 + $0xf8] sm:$0xff] %v2092
      %2255 = vst [vmem:[%s180 + $0x100] sm:$0x3] %v2216
      %2256 = vst [vmem:[%s180 + $0x108] sm:$0xff] %v2201
      %2257 = vst [vmem:[%s180 + $0x110] sm:$0xff] %v2095
      %2258 = vst [vmem:[%s180 + $0x118] sm:$0x3] %v2217
      %2259 = vst [vmem:[%s180 + $0x120] sm:$0xff] %v2202
      %2260 = vst [vmem:[%s180 + $0x128] sm:$0xff] %v2098
      %2261 = vst [vmem:[%s180 + $0x130] sm:$0x3] %v2218
      %2262 = vst [vmem:[%s180 + $0x138] sm:$0xff] %v2203
      %2263 = vst [vmem:[%s180 + $0x140] sm:$0xff] %v2101
      %2264 = vst [vmem:[%s180 + $0x148] sm:$0x3] %v2219
      %2265 = vst [vmem:[%s180 + $0x150] sm:$0xff] %v2204
      %2266 = vst [vmem:[%s180 + $0x158] sm:$0xff] %v2104
      %2267 = vst [vmem:[%s180 + $0x160] sm:$0x3] %v2220
      %2268 = vst [vmem:[%s180 + $0x168] sm:$0xff] %v2205
      %2269 = vst [vmem:[%s180 + $0x170] sm:$0xff] %v2107
      %2270 = vst [vmem:[%s180 + $0x178] sm:$0x3] %v2221
      %2271 = vst [vmem:[%s180 + $0x180] sm:$0xff] %v2206
      %2272 = vst [vmem:[%s180 + $0x188] sm:$0xff] %v2110
      %2273 = vst [vmem:[%s180 + $0x190] sm:$0x3] %v2222
      %2274 = vst [vmem:[%s180 + $0x198] sm:$0xff] %v2205
      %2275 = vst [vmem:[%s180 + $0x1a0] sm:$0xff] %v2107
      %2276 = vst [vmem:[%s180 + $0x1a8] sm:$0x3] %v2221
      %p2277 = scmp.lt.s32.totalorder %s17, 1
      %s2278 = scalar_select %p2277, %s17, 1
      %p2279 = scmp.lt.s32.totalorder %s18, 0
      %s2280 = scalar_select %p2279, %s18, 0
      %s2281 = smul.addr %s2278, 54
      %s2282 = sadd.s32 %s2280, %s2281
      %s2283 = smul.addr %s2282, 8
      %s2284 = scalar_lea.vmem %s2, %s2283
      // Predicated region
      $region29: #{resnet_block_forward.2} parent=27 // pred_check
        %p2285 = pneg %p97
      $region30: #{resnet_block_forward.2} parent=27 // pred_check_branch
        %2287 = sbr.rel (%p2285) target = $region32
      $region31: #{resnet_block_forward.2} parent=27 // pred_region
        _
      $region32: #{resnet_block_forward.2} parent=27 // pred_fallthru
        _
    $region28: #{resnet_block_forward.2} parent=5 // pred_fallthru
      _
    %p2288 = scmp.le.s32.totalorder 2, %s8
    // Predicated region
    $region33: #{resnet_block_forward.2} parent=5 // pred_check
      %p2289 = pneg %p2288
    $region34: #{resnet_block_forward.2} parent=5 // pred_check_branch
      %2291 = sbr.rel (%p2289) target = $region36
    $region35: #{resnet_block_forward.2} parent=5 // pred_region
      %s2292 = ssub.s32 %s8, 2
      // Predicated region
      $region37: #{resnet_block_forward.2} parent=35 // pred_check
        %p2293 = pneg %p103
      $region38: #{resnet_block_forward.2} parent=35 // pred_check_branch
        %2295 = sbr.rel (%p2293) target = $region40
      $region39: #{resnet_block_forward.2} parent=35 // pred_region
        %p2296 = scmp.lt.s32.totalorder %s19, 1
        %s2297 = scalar_select %p2296, %s19, 1
        %p2298 = scmp.lt.s32.totalorder %s20, 0
        %s2299 = scalar_select %p2298, %s20, 0
        %s2300 = smul.addr %s2297, 54
        %s2301 = sadd.s32 %s2299, %s2300
        %s2302 = smul.addr %s2301, 8
        %s2303 = scalar_lea.vmem %s2, %s2302
      $region40: #{resnet_block_forward.2} parent=35 // pred_fallthru
        _
    $region36: #{resnet_block_forward.2} parent=5 // pred_fallthru
      _
  $region6: #{resnet_block_forward.2} parent=0 // loop_footer
    %s12 = sadd.s32 1, %s8
  $region7: #{resnet_block_forward.2} parent=0 // loop_footer_branch
    %7 = sbr.rel target = $region3
  $region8: #{resnet_block_forward.2} parent=0 // loop_exit
    _

</llo_original>
